<compile_context>
chip_gen: v5e
topology: v5e:2x2
jax: 0.10.0
libtpu: 0.0.40
codegen_flags: <defaults>
</compile_context>

<pallas_src>
import jax
import jax.numpy as jnp
from jax import lax
from jax.experimental import pallas as pl
from jax.experimental.pallas import tpu as pltpu

K = 3  # conv kernel size (module default when use_conv=True)


def _fold_parity_weights(w_dhwio):
    """Fold the nearest-x2 upsample into the 3x3x3 conv weights.

    w_dhwio: (3, 3, 3, Cin, Cout)
    returns: (8, 8*Cin, Cout) indexed [parity p = a*4+b*2+c, tap-major rows
             t*Cin + cin with tap t = i*4+j*2+k] such that
      y[2d+a, 2h+b, 2w+c] = concat_t(x_pad[d+a+i, h+b+j, w+c+k, :]) @ w_eff[p]
                            + bias
    where x_pad is the original-resolution input zero-padded by 1 per side.
    """
    ci, co = w_dhwio.shape[3], w_dhwio.shape[4]
    # fold matrix F[parity, footprint tap, kernel tap]
    f = jnp.array(
        [[[1.0, 0.0, 0.0],    # parity 0, tap 0 <- kernel tap 0
          [0.0, 1.0, 1.0]],   # parity 0, tap 1 <- kernel taps 1+2
         [[1.0, 1.0, 0.0],    # parity 1, tap 0 <- kernel taps 0+1
          [0.0, 0.0, 1.0]]],  # parity 1, tap 1 <- kernel tap 2
        dtype=jnp.float32)
    w_eff = jnp.einsum('aix,bjy,ckz,xyzuv->abcijkuv',
                       f, f, f, w_dhwio.astype(jnp.float32))
    # (2,2,2, 2,2,2, Ci, Co) -> (8 parities, 8 taps * Ci, Co)
    return w_eff.reshape(8, 8 * ci, co)


def _fused_upsample_conv_kernel(s0_ref, s1_ref, s2_ref, w_ref, b_ref, o_ref):
    """One (batch, original-depth-slice) tile of the fused upsample+conv.

    s0/s1/s2_ref: (Hp, Wp, Ci)   padded depth slices d, d+1, d+2 (Hp=H+2, Wp=W+2)
    w_ref       : (8, 8*Ci, Co)  parity-folded, tap-concatenated weights
    b_ref       : (1, Co)        f32 bias
    o_ref       : (2, H, 2, W, 2*Co)  parity-interleaved output for depths
                  2d (a=0) and 2d+1 (a=1); element layout (a, h, b, w, c*Co+co)
    """
    Hp, Wp, Ci = s0_ref.shape
    H, W = Hp - 2, Wp - 2
    HW = H * W
    Co = o_ref.shape[-1] // 2
    slices = (s0_ref, s1_ref, s2_ref)
    bias = b_ref[...].astype(jnp.float32)              # (1, Co)

    # 27 distinct shifted patches, hoisted out of the parity loops (dedup:
    # each unaligned slice+reshape/relayout happens exactly once).
    patches = [[[slices[dz][oy:oy + H, ox:ox + W, :].reshape(HW, Ci)
                 for ox in range(3)]
                for oy in range(3)]
               for dz in range(3)]

    for pa in range(2):            # depth parity  -> output depth  2d + pa
        for pb in range(2):        # height parity -> output height 2h + pb
            rows = []
            for pc in range(2):    # width parity  -> output width  2w + pc
                p = pa * 4 + pb * 2 + pc
                # Tap-concatenated im2col: ONE MXU contraction per parity with
                # contraction depth 8*Ci (instead of 8 tiny-K dots).
                cols = jnp.concatenate(
                    [patches[pa + i][pb + j][pc + k]
                     for i in range(2) for j in range(2) for k in range(2)],
                    axis=-1)                            # (HW, 8*Ci)
                y = jnp.dot(cols, w_ref[p, :, :],
                            preferred_element_type=jnp.float32)   # (HW, Co)
                rows.append((y + bias).astype(o_ref.dtype).reshape(H, W, Co))
            # Width-parity interleave along lanes: the c index becomes the
            # major half of the minor dim, so the wrapper's reshape to
            # (..., 2W, Co) is a free contiguous collapse.
            o_ref[pa, :, pb, :, :] = jnp.concatenate(rows, axis=-1)


def fused_upsample_conv3d(x_ndhwc, conv_weight_oikkk, conv_bias):
    """Fused nearest-x2 upsample + Conv3d(3, padding=1) on NDHWC input.

    Returns parity-interleaved output of shape (N, D, 2, H, 2, W, 2*Cout);
    reshaping it to (N, 2D, 2H, 2W, Cout) is a free contiguous collapse.
    """
    N, D, H, W, Ci = x_ndhwc.shape
    Co = conv_weight_oikkk.shape[0]
    dt = x_ndhwc.dtype

    # Only a 1-voxel halo on the ORIGINAL-resolution input (no padded copy of
    # an 8x upsampled tensor).
    xp = jnp.pad(x_ndhwc, ((0, 0), (1, 1), (1, 1), (1, 1), (0, 0)))
    Hp, Wp = H + 2, W + 2

    # Weight fold done once in plain JAX (tiny).  Matmul operands stay in the
    # activation dtype (bf16 models run bf16 x bf16 -> f32 accumulate).
    w_dhwio = jnp.transpose(conv_weight_oikkk, (2, 3, 4, 1, 0))
    w_eff = _fold_parity_weights(w_dhwio).astype(dt)        # (8, 8*Ci, Co)
    bias2 = conv_bias.reshape(1, Co).astype(jnp.float32)

    # Generation-aware VMEM budget (estimate already contains the
    # double-buffering factors plus the in-kernel temporaries).
    itm = x_ndhwc.dtype.itemsize
    hw = H * W
    est = (3 * 2 * Hp * Wp * Ci * itm      # 3 haloed depth slices, dbl-buffered
           + 2 * 8 * hw * Co * itm         # interleaved output tile, dbl-buffered
           + 2 * 64 * Ci * Co * itm        # folded weights (worst case: 2 bufs)
           + 2 * 4 * Co                    # bias
           + 27 * hw * Ci * itm            # dedup'd patches (kernel temps)
           + 8 * hw * Ci * itm             # one im2col buffer
           + 2 * hw * Co * 4)              # f32 accumulators (c = 0 / 1)
    cap = 64 * 1024 * 1024                 # conservative default (v7x)
    try:
        cap = int(getattr(pltpu.get_tpu_info(), "vmem_capacity_bytes", cap))
    except Exception:
        pass
    vmem_limit = int(min(max(est + (2 << 20), 32 * 1024 * 1024),
                         cap - (8 << 20)))

    return pl.pallas_call(
        _fused_upsample_conv_kernel,
        out_shape=jax.ShapeDtypeStruct((N, D, 2, H, 2, W, 2 * Co), dt),
        grid_spec=pltpu.PrefetchScalarGridSpec(
            num_scalar_prefetch=0,
            grid=(N, D),
            in_specs=[
                # Padded depth slices d, d+1, d+2: depth block size 1 (squeezed)
                # so the block index IS the element index, giving the +-1 halo.
                pl.BlockSpec((None, None, Hp, Wp, Ci),
                             lambda n, d: (n, d, 0, 0, 0)),
                pl.BlockSpec((None, None, Hp, Wp, Ci),
                             lambda n, d: (n, d + 1, 0, 0, 0)),
                pl.BlockSpec((None, None, Hp, Wp, Ci),
                             lambda n, d: (n, d + 2, 0, 0, 0)),
                # Folded weights + bias, constant block index across the grid.
                pl.BlockSpec((8, 8 * Ci, Co), lambda n, d: (0, 0, 0)),
                pl.BlockSpec((1, Co), lambda n, d: (0, 0)),
            ],
            out_specs=pl.BlockSpec((None, None, 2, H, 2, W, 2 * Co),
                                   lambda n, d: (n, d, 0, 0, 0, 0, 0)),
        ),
        compiler_params=pltpu.CompilerParams(
            dimension_semantics=("parallel", "parallel"),
            vmem_limit_bytes=vmem_limit),
    )(xp, xp, xp, w_eff, bias2)


def upsample3d_forward(x_ncdhw, conv_weight_oikkk, conv_bias):
    """Equivalent of Upsample3D.forward (use_conv=True, norm=None, interpolate).

    x_ncdhw:           (N, C, D, H, W)        -- PyTorch NCDHW convention
    conv_weight_oikkk: (Cout, Cin, 3, 3, 3)   -- PyTorch Conv3d weight layout
    conv_bias:         (Cout,)
    returns:           (N, Cout, 2D, 2H, 2W)
    """
    N, C, D, H, W = x_ncdhw.shape
    Co = conv_weight_oikkk.shape[0]
    # NCDHW -> NDHWC for the TPU kernel (layout glue; needed in any layout).
    x = jnp.transpose(x_ncdhw, (0, 2, 3, 4, 1))
    out = fused_upsample_conv3d(x, conv_weight_oikkk, conv_bias)
    # (N, D, 2, H, 2, W, 2*Co) -> (N, 2D, 2H, 2W, Co) is a FREE contiguous
    # collapse (the parities were interleaved inside the kernel); only the
    # inherent channel-move transpose to NCDHW remains.
    y_ndhwc = out.reshape(N, 2 * D, 2 * H, 2 * W, Co)
    return jnp.transpose(y_ndhwc, (0, 4, 1, 2, 3))


if __name__ == "__main__":
    key = jax.random.PRNGKey(0)
    k1, k2, k3 = jax.random.split(key, 3)

    # Small shapes consistent with the module: N=2, C=4, D=4, H=8, W=8 (NCDHW).
    N, C, D, H, W = 2, 4, 4, 8, 8
    Cout = C

    x_ncdhw = jax.random.normal(k1, (N, C, D, H, W), dtype=jnp.float32)
    conv_weight = 0.1 * jax.random.normal(k2, (Cout, C, K, K, K),
                                          dtype=jnp.float32)
    conv_bias = 0.1 * jax.random.normal(k3, (Cout,), dtype=jnp.float32)

    fwd = jax.jit(upsample3d_forward)
    out = jax.block_until_ready(fwd(x_ncdhw, conv_weight, conv_bias))
    assert out.shape == (N, Cout, 2 * D, 2 * H, 2 * W), out.shape

    # Reference: explicit nearest-x2 upsample + XLA conv (same semantics as
    # the PyTorch module with use_conv=True, norm_type=None, interpolate=True).
    x_ndhwc = jnp.transpose(x_ncdhw, (0, 2, 3, 4, 1))
    xu = jnp.repeat(jnp.repeat(jnp.repeat(x_ndhwc, 2, axis=1), 2, axis=2),
                    2, axis=3)
    w_dhwio = jnp.transpose(conv_weight, (2, 3, 4, 1, 0))
    ref = lax.conv_general_dilated(
        xu, w_dhwio, window_strides=(1, 1, 1),
        padding=((1, 1), (1, 1), (1, 1)),
        dimension_numbers=("NDHWC", "DHWIO", "NDHWC")) + conv_bias
    ref_ncdhw = jnp.transpose(ref, (0, 4, 1, 2, 3))
    assert jnp.allclose(out, ref_ncdhw, atol=1e-4, rtol=1e-4), (
        float(jnp.max(jnp.abs(out - ref_ncdhw))))

    print("KERNEL_OK")
</pallas_src>

<mosaic_0001>
module attributes {stable_mosaic.version = 11 : i64} {
  func.func @_fused_upsample_conv_kernel(%arg0: i32, %arg1: i32, %arg2: memref<1x1x10x10x4xf32, #tpu.memory_space<vmem>>, %arg3: memref<1x1x10x10x4xf32, #tpu.memory_space<vmem>>, %arg4: memref<1x1x10x10x4xf32, #tpu.memory_space<vmem>>, %arg5: memref<8x32x4xf32, #tpu.memory_space<vmem>>, %arg6: memref<1x4xf32, #tpu.memory_space<vmem>>, %arg7: memref<1x1x2x8x2x8x8xf32, #tpu.memory_space<vmem>>) attributes {dimension_semantics = [#tpu.dimension_semantics<parallel>, #tpu.dimension_semantics<parallel>], iteration_bounds = array<i64: 2, 4>, scalar_prefetch = 0 : i64, scratch_operands = 0 : i64, tpu.core_type = #tpu.core_type<tc>, window_params = [{transform_indices = @transform_0, window_bounds = array<i64: 1, 1, 10, 10, 4>}, {transform_indices = @transform_1, window_bounds = array<i64: 1, 1, 10, 10, 4>}, {transform_indices = @transform_2, window_bounds = array<i64: 1, 1, 10, 10, 4>}, {pipeline_mode = #tpu.pipeline_mode<synchronous>, transform_indices = @transform_3, window_bounds = array<i64: 8, 32, 4>}, {pipeline_mode = #tpu.pipeline_mode<synchronous>, transform_indices = @transform_4, window_bounds = array<i64: 1, 4>}, {transform_indices = @transform_5, window_bounds = array<i64: 1, 1, 2, 8, 2, 8, 8>}]} {
    %c0 = arith.constant 0 : index
    %c0_0 = arith.constant 0 : index
    %0 = vector.load %arg6[%c0, %c0_0] : memref<1x4xf32, #tpu.memory_space<vmem>>, vector<1x4xf32>
    %c0_1 = arith.constant 0 : index
    %c0_2 = arith.constant 0 : index
    %c0_3 = arith.constant 0 : index
    %c0_4 = arith.constant 0 : index
    %c0_5 = arith.constant 0 : index
    %1 = vector.load %arg2[%c0_1, %c0_2, %c0_3, %c0_4, %c0_5] : memref<1x1x10x10x4xf32, #tpu.memory_space<vmem>>, vector<1x1x8x8x4xf32>
    %2 = vector.shape_cast %1 : vector<1x1x8x8x4xf32> to vector<8x8x4xf32>
    %3 = vector.shape_cast %2 : vector<8x8x4xf32> to vector<64x4xf32>
    %c0_6 = arith.constant 0 : index
    %c0_7 = arith.constant 0 : index
    %c0_8 = arith.constant 0 : index
    %c1 = arith.constant 1 : index
    %c0_9 = arith.constant 0 : index
    %4 = vector.load %arg2[%c0_6, %c0_7, %c0_8, %c1, %c0_9] : memref<1x1x10x10x4xf32, #tpu.memory_space<vmem>>, vector<1x1x8x8x4xf32>
    %5 = vector.shape_cast %4 : vector<1x1x8x8x4xf32> to vector<8x8x4xf32>
    %6 = vector.shape_cast %5 : vector<8x8x4xf32> to vector<64x4xf32>
    %c0_10 = arith.constant 0 : index
    %c0_11 = arith.constant 0 : index
    %c0_12 = arith.constant 0 : index
    %c2 = arith.constant 2 : index
    %c0_13 = arith.constant 0 : index
    %7 = vector.load %arg2[%c0_10, %c0_11, %c0_12, %c2, %c0_13] : memref<1x1x10x10x4xf32, #tpu.memory_space<vmem>>, vector<1x1x8x8x4xf32>
    %8 = vector.shape_cast %7 : vector<1x1x8x8x4xf32> to vector<8x8x4xf32>
    %9 = vector.shape_cast %8 : vector<8x8x4xf32> to vector<64x4xf32>
    %c0_14 = arith.constant 0 : index
    %c0_15 = arith.constant 0 : index
    %c1_16 = arith.constant 1 : index
    %c0_17 = arith.constant 0 : index
    %c0_18 = arith.constant 0 : index
    %10 = vector.load %arg2[%c0_14, %c0_15, %c1_16, %c0_17, %c0_18] : memref<1x1x10x10x4xf32, #tpu.memory_space<vmem>>, vector<1x1x8x8x4xf32>
    %11 = vector.shape_cast %10 : vector<1x1x8x8x4xf32> to vector<8x8x4xf32>
    %12 = vector.shape_cast %11 : vector<8x8x4xf32> to vector<64x4xf32>
    %c0_19 = arith.constant 0 : index
    %c0_20 = arith.constant 0 : index
    %c1_21 = arith.constant 1 : index
    %c1_22 = arith.constant 1 : index
    %c0_23 = arith.constant 0 : index
    %13 = vector.load %arg2[%c0_19, %c0_20, %c1_21, %c1_22, %c0_23] : memref<1x1x10x10x4xf32, #tpu.memory_space<vmem>>, vector<1x1x8x8x4xf32>
    %14 = vector.shape_cast %13 : vector<1x1x8x8x4xf32> to vector<8x8x4xf32>
    %15 = vector.shape_cast %14 : vector<8x8x4xf32> to vector<64x4xf32>
    %c0_24 = arith.constant 0 : index
    %c0_25 = arith.constant 0 : index
    %c1_26 = arith.constant 1 : index
    %c2_27 = arith.constant 2 : index
    %c0_28 = arith.constant 0 : index
    %16 = vector.load %arg2[%c0_24, %c0_25, %c1_26, %c2_27, %c0_28] : memref<1x1x10x10x4xf32, #tpu.memory_space<vmem>>, vector<1x1x8x8x4xf32>
    %17 = vector.shape_cast %16 : vector<1x1x8x8x4xf32> to vector<8x8x4xf32>
    %18 = vector.shape_cast %17 : vector<8x8x4xf32> to vector<64x4xf32>
    %c0_29 = arith.constant 0 : index
    %c0_30 = arith.constant 0 : index
    %c2_31 = arith.constant 2 : index
    %c0_32 = arith.constant 0 : index
    %c0_33 = arith.constant 0 : index
    %19 = vector.load %arg2[%c0_29, %c0_30, %c2_31, %c0_32, %c0_33] : memref<1x1x10x10x4xf32, #tpu.memory_space<vmem>>, vector<1x1x8x8x4xf32>
    %20 = vector.shape_cast %19 : vector<1x1x8x8x4xf32> to vector<8x8x4xf32>
    %21 = vector.shape_cast %20 : vector<8x8x4xf32> to vector<64x4xf32>
    %c0_34 = arith.constant 0 : index
    %c0_35 = arith.constant 0 : index
    %c2_36 = arith.constant 2 : index
    %c1_37 = arith.constant 1 : index
    %c0_38 = arith.constant 0 : index
    %22 = vector.load %arg2[%c0_34, %c0_35, %c2_36, %c1_37, %c0_38] : memref<1x1x10x10x4xf32, #tpu.memory_space<vmem>>, vector<1x1x8x8x4xf32>
    %23 = vector.shape_cast %22 : vector<1x1x8x8x4xf32> to vector<8x8x4xf32>
    %24 = vector.shape_cast %23 : vector<8x8x4xf32> to vector<64x4xf32>
    %c0_39 = arith.constant 0 : index
    %c0_40 = arith.constant 0 : index
    %c2_41 = arith.constant 2 : index
    %c2_42 = arith.constant 2 : index
    %c0_43 = arith.constant 0 : index
    %25 = vector.load %arg2[%c0_39, %c0_40, %c2_41, %c2_42, %c0_43] : memref<1x1x10x10x4xf32, #tpu.memory_space<vmem>>, vector<1x1x8x8x4xf32>
    %26 = vector.shape_cast %25 : vector<1x1x8x8x4xf32> to vector<8x8x4xf32>
    %27 = vector.shape_cast %26 : vector<8x8x4xf32> to vector<64x4xf32>
    %c0_44 = arith.constant 0 : index
    %c0_45 = arith.constant 0 : index
    %c0_46 = arith.constant 0 : index
    %c0_47 = arith.constant 0 : index
    %c0_48 = arith.constant 0 : index
    %28 = vector.load %arg3[%c0_44, %c0_45, %c0_46, %c0_47, %c0_48] : memref<1x1x10x10x4xf32, #tpu.memory_space<vmem>>, vector<1x1x8x8x4xf32>
    %29 = vector.shape_cast %28 : vector<1x1x8x8x4xf32> to vector<8x8x4xf32>
    %30 = vector.shape_cast %29 : vector<8x8x4xf32> to vector<64x4xf32>
    %c0_49 = arith.constant 0 : index
    %c0_50 = arith.constant 0 : index
    %c0_51 = arith.constant 0 : index
    %c1_52 = arith.constant 1 : index
    %c0_53 = arith.constant 0 : index
    %31 = vector.load %arg3[%c0_49, %c0_50, %c0_51, %c1_52, %c0_53] : memref<1x1x10x10x4xf32, #tpu.memory_space<vmem>>, vector<1x1x8x8x4xf32>
    %32 = vector.shape_cast %31 : vector<1x1x8x8x4xf32> to vector<8x8x4xf32>
    %33 = vector.shape_cast %32 : vector<8x8x4xf32> to vector<64x4xf32>
    %c0_54 = arith.constant 0 : index
    %c0_55 = arith.constant 0 : index
    %c0_56 = arith.constant 0 : index
    %c2_57 = arith.constant 2 : index
    %c0_58 = arith.constant 0 : index
    %34 = vector.load %arg3[%c0_54, %c0_55, %c0_56, %c2_57, %c0_58] : memref<1x1x10x10x4xf32, #tpu.memory_space<vmem>>, vector<1x1x8x8x4xf32>
    %35 = vector.shape_cast %34 : vector<1x1x8x8x4xf32> to vector<8x8x4xf32>
    %36 = vector.shape_cast %35 : vector<8x8x4xf32> to vector<64x4xf32>
    %c0_59 = arith.constant 0 : index
    %c0_60 = arith.constant 0 : index
    %c1_61 = arith.constant 1 : index
    %c0_62 = arith.constant 0 : index
    %c0_63 = arith.constant 0 : index
    %37 = vector.load %arg3[%c0_59, %c0_60, %c1_61, %c0_62, %c0_63] : memref<1x1x10x10x4xf32, #tpu.memory_space<vmem>>, vector<1x1x8x8x4xf32>
    %38 = vector.shape_cast %37 : vector<1x1x8x8x4xf32> to vector<8x8x4xf32>
    %39 = vector.shape_cast %38 : vector<8x8x4xf32> to vector<64x4xf32>
    %c0_64 = arith.constant 0 : index
    %c0_65 = arith.constant 0 : index
    %c1_66 = arith.constant 1 : index
    %c1_67 = arith.constant 1 : index
    %c0_68 = arith.constant 0 : index
    %40 = vector.load %arg3[%c0_64, %c0_65, %c1_66, %c1_67, %c0_68] : memref<1x1x10x10x4xf32, #tpu.memory_space<vmem>>, vector<1x1x8x8x4xf32>
    %41 = vector.shape_cast %40 : vector<1x1x8x8x4xf32> to vector<8x8x4xf32>
    %42 = vector.shape_cast %41 : vector<8x8x4xf32> to vector<64x4xf32>
    %c0_69 = arith.constant 0 : index
    %c0_70 = arith.constant 0 : index
    %c1_71 = arith.constant 1 : index
    %c2_72 = arith.constant 2 : index
    %c0_73 = arith.constant 0 : index
    %43 = vector.load %arg3[%c0_69, %c0_70, %c1_71, %c2_72, %c0_73] : memref<1x1x10x10x4xf32, #tpu.memory_space<vmem>>, vector<1x1x8x8x4xf32>
    %44 = vector.shape_cast %43 : vector<1x1x8x8x4xf32> to vector<8x8x4xf32>
    %45 = vector.shape_cast %44 : vector<8x8x4xf32> to vector<64x4xf32>
    %c0_74 = arith.constant 0 : index
    %c0_75 = arith.constant 0 : index
    %c2_76 = arith.constant 2 : index
    %c0_77 = arith.constant 0 : index
    %c0_78 = arith.constant 0 : index
    %46 = vector.load %arg3[%c0_74, %c0_75, %c2_76, %c0_77, %c0_78] : memref<1x1x10x10x4xf32, #tpu.memory_space<vmem>>, vector<1x1x8x8x4xf32>
    %47 = vector.shape_cast %46 : vector<1x1x8x8x4xf32> to vector<8x8x4xf32>
    %48 = vector.shape_cast %47 : vector<8x8x4xf32> to vector<64x4xf32>
    %c0_79 = arith.constant 0 : index
    %c0_80 = arith.constant 0 : index
    %c2_81 = arith.constant 2 : index
    %c1_82 = arith.constant 1 : index
    %c0_83 = arith.constant 0 : index
    %49 = vector.load %arg3[%c0_79, %c0_80, %c2_81, %c1_82, %c0_83] : memref<1x1x10x10x4xf32, #tpu.memory_space<vmem>>, vector<1x1x8x8x4xf32>
    %50 = vector.shape_cast %49 : vector<1x1x8x8x4xf32> to vector<8x8x4xf32>
    %51 = vector.shape_cast %50 : vector<8x8x4xf32> to vector<64x4xf32>
    %c0_84 = arith.constant 0 : index
    %c0_85 = arith.constant 0 : index
    %c2_86 = arith.constant 2 : index
    %c2_87 = arith.constant 2 : index
    %c0_88 = arith.constant 0 : index
    %52 = vector.load %arg3[%c0_84, %c0_85, %c2_86, %c2_87, %c0_88] : memref<1x1x10x10x4xf32, #tpu.memory_space<vmem>>, vector<1x1x8x8x4xf32>
    %53 = vector.shape_cast %52 : vector<1x1x8x8x4xf32> to vector<8x8x4xf32>
    %54 = vector.shape_cast %53 : vector<8x8x4xf32> to vector<64x4xf32>
    %c0_89 = arith.constant 0 : index
    %c0_90 = arith.constant 0 : index
    %c0_91 = arith.constant 0 : index
    %c0_92 = arith.constant 0 : index
    %c0_93 = arith.constant 0 : index
    %55 = vector.load %arg4[%c0_89, %c0_90, %c0_91, %c0_92, %c0_93] : memref<1x1x10x10x4xf32, #tpu.memory_space<vmem>>, vector<1x1x8x8x4xf32>
    %56 = vector.shape_cast %55 : vector<1x1x8x8x4xf32> to vector<8x8x4xf32>
    %57 = vector.shape_cast %56 : vector<8x8x4xf32> to vector<64x4xf32>
    %c0_94 = arith.constant 0 : index
    %c0_95 = arith.constant 0 : index
    %c0_96 = arith.constant 0 : index
    %c1_97 = arith.constant 1 : index
    %c0_98 = arith.constant 0 : index
    %58 = vector.load %arg4[%c0_94, %c0_95, %c0_96, %c1_97, %c0_98] : memref<1x1x10x10x4xf32, #tpu.memory_space<vmem>>, vector<1x1x8x8x4xf32>
    %59 = vector.shape_cast %58 : vector<1x1x8x8x4xf32> to vector<8x8x4xf32>
    %60 = vector.shape_cast %59 : vector<8x8x4xf32> to vector<64x4xf32>
    %c0_99 = arith.constant 0 : index
    %c0_100 = arith.constant 0 : index
    %c0_101 = arith.constant 0 : index
    %c2_102 = arith.constant 2 : index
    %c0_103 = arith.constant 0 : index
    %61 = vector.load %arg4[%c0_99, %c0_100, %c0_101, %c2_102, %c0_103] : memref<1x1x10x10x4xf32, #tpu.memory_space<vmem>>, vector<1x1x8x8x4xf32>
    %62 = vector.shape_cast %61 : vector<1x1x8x8x4xf32> to vector<8x8x4xf32>
    %63 = vector.shape_cast %62 : vector<8x8x4xf32> to vector<64x4xf32>
    %c0_104 = arith.constant 0 : index
    %c0_105 = arith.constant 0 : index
    %c1_106 = arith.constant 1 : index
    %c0_107 = arith.constant 0 : index
    %c0_108 = arith.constant 0 : index
    %64 = vector.load %arg4[%c0_104, %c0_105, %c1_106, %c0_107, %c0_108] : memref<1x1x10x10x4xf32, #tpu.memory_space<vmem>>, vector<1x1x8x8x4xf32>
    %65 = vector.shape_cast %64 : vector<1x1x8x8x4xf32> to vector<8x8x4xf32>
    %66 = vector.shape_cast %65 : vector<8x8x4xf32> to vector<64x4xf32>
    %c0_109 = arith.constant 0 : index
    %c0_110 = arith.constant 0 : index
    %c1_111 = arith.constant 1 : index
    %c1_112 = arith.constant 1 : index
    %c0_113 = arith.constant 0 : index
    %67 = vector.load %arg4[%c0_109, %c0_110, %c1_111, %c1_112, %c0_113] : memref<1x1x10x10x4xf32, #tpu.memory_space<vmem>>, vector<1x1x8x8x4xf32>
    %68 = vector.shape_cast %67 : vector<1x1x8x8x4xf32> to vector<8x8x4xf32>
    %69 = vector.shape_cast %68 : vector<8x8x4xf32> to vector<64x4xf32>
    %c0_114 = arith.constant 0 : index
    %c0_115 = arith.constant 0 : index
    %c1_116 = arith.constant 1 : index
    %c2_117 = arith.constant 2 : index
    %c0_118 = arith.constant 0 : index
    %70 = vector.load %arg4[%c0_114, %c0_115, %c1_116, %c2_117, %c0_118] : memref<1x1x10x10x4xf32, #tpu.memory_space<vmem>>, vector<1x1x8x8x4xf32>
    %71 = vector.shape_cast %70 : vector<1x1x8x8x4xf32> to vector<8x8x4xf32>
    %72 = vector.shape_cast %71 : vector<8x8x4xf32> to vector<64x4xf32>
    %c0_119 = arith.constant 0 : index
    %c0_120 = arith.constant 0 : index
    %c2_121 = arith.constant 2 : index
    %c0_122 = arith.constant 0 : index
    %c0_123 = arith.constant 0 : index
    %73 = vector.load %arg4[%c0_119, %c0_120, %c2_121, %c0_122, %c0_123] : memref<1x1x10x10x4xf32, #tpu.memory_space<vmem>>, vector<1x1x8x8x4xf32>
    %74 = vector.shape_cast %73 : vector<1x1x8x8x4xf32> to vector<8x8x4xf32>
    %75 = vector.shape_cast %74 : vector<8x8x4xf32> to vector<64x4xf32>
    %c0_124 = arith.constant 0 : index
    %c0_125 = arith.constant 0 : index
    %c2_126 = arith.constant 2 : index
    %c1_127 = arith.constant 1 : index
    %c0_128 = arith.constant 0 : index
    %76 = vector.load %arg4[%c0_124, %c0_125, %c2_126, %c1_127, %c0_128] : memref<1x1x10x10x4xf32, #tpu.memory_space<vmem>>, vector<1x1x8x8x4xf32>
    %77 = vector.shape_cast %76 : vector<1x1x8x8x4xf32> to vector<8x8x4xf32>
    %78 = vector.shape_cast %77 : vector<8x8x4xf32> to vector<64x4xf32>
    %c0_129 = arith.constant 0 : index
    %c0_130 = arith.constant 0 : index
    %c2_131 = arith.constant 2 : index
    %c2_132 = arith.constant 2 : index
    %c0_133 = arith.constant 0 : index
    %79 = vector.load %arg4[%c0_129, %c0_130, %c2_131, %c2_132, %c0_133] : memref<1x1x10x10x4xf32, #tpu.memory_space<vmem>>, vector<1x1x8x8x4xf32>
    %80 = vector.shape_cast %79 : vector<1x1x8x8x4xf32> to vector<8x8x4xf32>
    %81 = vector.shape_cast %80 : vector<8x8x4xf32> to vector<64x4xf32>
    %82 = tpu.concatenate %3, %6, %12, %15, %30, %33, %39, %42 in 1 : vector<64x4xf32>, vector<64x4xf32>, vector<64x4xf32>, vector<64x4xf32>, vector<64x4xf32>, vector<64x4xf32>, vector<64x4xf32>, vector<64x4xf32> -> vector<64x32xf32>
    %c0_134 = arith.constant 0 : index
    %c0_135 = arith.constant 0 : index
    %c0_136 = arith.constant 0 : index
    %83 = vector.load %arg5[%c0_134, %c0_135, %c0_136] : memref<8x32x4xf32, #tpu.memory_space<vmem>>, vector<1x32x4xf32>
    %84 = vector.shape_cast %83 : vector<1x32x4xf32> to vector<32x4xf32>
    %cst = arith.constant dense<0.000000e+00> : vector<64x4xf32>
    %85 = tpu.matmul %82, %84, %cst {dimension_numbers = #tpu.dot_dimension_numbers<[1], [0], [0], [1], [0, 0, 1, 1], [], []>} : vector<64x32xf32>, vector<32x4xf32>, vector<64x4xf32> -> vector<64x4xf32>
    %86 = vector.broadcast %0 : vector<1x4xf32> to vector<64x4xf32>
    %87 = arith.addf %85, %86 : vector<64x4xf32>
    %88 = vector.shape_cast %87 : vector<64x4xf32> to vector<8x8x4xf32>
    %89 = tpu.concatenate %6, %9, %15, %18, %33, %36, %42, %45 in 1 : vector<64x4xf32>, vector<64x4xf32>, vector<64x4xf32>, vector<64x4xf32>, vector<64x4xf32>, vector<64x4xf32>, vector<64x4xf32>, vector<64x4xf32> -> vector<64x32xf32>
    %c1_137 = arith.constant 1 : index
    %c0_138 = arith.constant 0 : index
    %c0_139 = arith.constant 0 : index
    %90 = vector.load %arg5[%c1_137, %c0_138, %c0_139] : memref<8x32x4xf32, #tpu.memory_space<vmem>>, vector<1x32x4xf32>
    %91 = vector.shape_cast %90 : vector<1x32x4xf32> to vector<32x4xf32>
    %cst_140 = arith.constant dense<0.000000e+00> : vector<64x4xf32>
    %92 = tpu.matmul %89, %91, %cst_140 {dimension_numbers = #tpu.dot_dimension_numbers<[1], [0], [0], [1], [0, 0, 1, 1], [], []>} : vector<64x32xf32>, vector<32x4xf32>, vector<64x4xf32> -> vector<64x4xf32>
    %93 = vector.broadcast %0 : vector<1x4xf32> to vector<64x4xf32>
    %94 = arith.addf %92, %93 : vector<64x4xf32>
    %95 = vector.shape_cast %94 : vector<64x4xf32> to vector<8x8x4xf32>
    %96 = tpu.concatenate %88, %95 in 2 : vector<8x8x4xf32>, vector<8x8x4xf32> -> vector<8x8x8xf32>
    %c0_141 = arith.constant 0 : index
    %c0_142 = arith.constant 0 : index
    %c0_143 = arith.constant 0 : index
    %c0_144 = arith.constant 0 : index
    %c0_145 = arith.constant 0 : index
    %c0_146 = arith.constant 0 : index
    %c0_147 = arith.constant 0 : index
    %97 = vector.load %arg7[%c0_141, %c0_142, %c0_143, %c0_144, %c0_145, %c0_146, %c0_147] : memref<1x1x2x8x2x8x8xf32, #tpu.memory_space<vmem>>, vector<1x1x1x8x1x8x8xf32>
    %98 = vector.shape_cast %97 : vector<1x1x1x8x1x8x8xf32> to vector<8x8x8xf32>
    %99 = vector.shape_cast %96 : vector<8x8x8xf32> to vector<1x1x1x8x1x8x8xf32>
    tpu.vector_store %arg7[%c0_141, %c0_142, %c0_143, %c0_144, %c0_145, %c0_146, %c0_147], %99 {strides = array<i32>} : memref<1x1x2x8x2x8x8xf32, #tpu.memory_space<vmem>>, vector<1x1x1x8x1x8x8xf32>,
    %100 = tpu.concatenate %12, %15, %21, %24, %39, %42, %48, %51 in 1 : vector<64x4xf32>, vector<64x4xf32>, vector<64x4xf32>, vector<64x4xf32>, vector<64x4xf32>, vector<64x4xf32>, vector<64x4xf32>, vector<64x4xf32> -> vector<64x32xf32>
    %c2_148 = arith.constant 2 : index
    %c0_149 = arith.constant 0 : index
    %c0_150 = arith.constant 0 : index
    %101 = vector.load %arg5[%c2_148, %c0_149, %c0_150] : memref<8x32x4xf32, #tpu.memory_space<vmem>>, vector<1x32x4xf32>
    %102 = vector.shape_cast %101 : vector<1x32x4xf32> to vector<32x4xf32>
    %cst_151 = arith.constant dense<0.000000e+00> : vector<64x4xf32>
    %103 = tpu.matmul %100, %102, %cst_151 {dimension_numbers = #tpu.dot_dimension_numbers<[1], [0], [0], [1], [0, 0, 1, 1], [], []>} : vector<64x32xf32>, vector<32x4xf32>, vector<64x4xf32> -> vector<64x4xf32>
    %104 = vector.broadcast %0 : vector<1x4xf32> to vector<64x4xf32>
    %105 = arith.addf %103, %104 : vector<64x4xf32>
    %106 = vector.shape_cast %105 : vector<64x4xf32> to vector<8x8x4xf32>
    %107 = tpu.concatenate %15, %18, %24, %27, %42, %45, %51, %54 in 1 : vector<64x4xf32>, vector<64x4xf32>, vector<64x4xf32>, vector<64x4xf32>, vector<64x4xf32>, vector<64x4xf32>, vector<64x4xf32>, vector<64x4xf32> -> vector<64x32xf32>
    %c3 = arith.constant 3 : index
    %c0_152 = arith.constant 0 : index
    %c0_153 = arith.constant 0 : index
    %108 = vector.load %arg5[%c3, %c0_152, %c0_153] : memref<8x32x4xf32, #tpu.memory_space<vmem>>, vector<1x32x4xf32>
    %109 = vector.shape_cast %108 : vector<1x32x4xf32> to vector<32x4xf32>
    %cst_154 = arith.constant dense<0.000000e+00> : vector<64x4xf32>
    %110 = tpu.matmul %107, %109, %cst_154 {dimension_numbers = #tpu.dot_dimension_numbers<[1], [0], [0], [1], [0, 0, 1, 1], [], []>} : vector<64x32xf32>, vector<32x4xf32>, vector<64x4xf32> -> vector<64x4xf32>
    %111 = vector.broadcast %0 : vector<1x4xf32> to vector<64x4xf32>
    %112 = arith.addf %110, %111 : vector<64x4xf32>
    %113 = vector.shape_cast %112 : vector<64x4xf32> to vector<8x8x4xf32>
    %114 = tpu.concatenate %106, %113 in 2 : vector<8x8x4xf32>, vector<8x8x4xf32> -> vector<8x8x8xf32>
    %c0_155 = arith.constant 0 : index
    %c0_156 = arith.constant 0 : index
    %c0_157 = arith.constant 0 : index
    %c0_158 = arith.constant 0 : index
    %c1_159 = arith.constant 1 : index
    %c0_160 = arith.constant 0 : index
    %c0_161 = arith.constant 0 : index
    %115 = vector.load %arg7[%c0_155, %c0_156, %c0_157, %c0_158, %c1_159, %c0_160, %c0_161] : memref<1x1x2x8x2x8x8xf32, #tpu.memory_space<vmem>>, vector<1x1x1x8x1x8x8xf32>
    %116 = vector.shape_cast %115 : vector<1x1x1x8x1x8x8xf32> to vector<8x8x8xf32>
    %117 = vector.shape_cast %114 : vector<8x8x8xf32> to vector<1x1x1x8x1x8x8xf32>
    tpu.vector_store %arg7[%c0_155, %c0_156, %c0_157, %c0_158, %c1_159, %c0_160, %c0_161], %117 {strides = array<i32>} : memref<1x1x2x8x2x8x8xf32, #tpu.memory_space<vmem>>, vector<1x1x1x8x1x8x8xf32>,
    %118 = tpu.concatenate %30, %33, %39, %42, %57, %60, %66, %69 in 1 : vector<64x4xf32>, vector<64x4xf32>, vector<64x4xf32>, vector<64x4xf32>, vector<64x4xf32>, vector<64x4xf32>, vector<64x4xf32>, vector<64x4xf32> -> vector<64x32xf32>
    %c4 = arith.constant 4 : index
    %c0_162 = arith.constant 0 : index
    %c0_163 = arith.constant 0 : index
    %119 = vector.load %arg5[%c4, %c0_162, %c0_163] : memref<8x32x4xf32, #tpu.memory_space<vmem>>, vector<1x32x4xf32>
    %120 = vector.shape_cast %119 : vector<1x32x4xf32> to vector<32x4xf32>
    %cst_164 = arith.constant dense<0.000000e+00> : vector<64x4xf32>
    %121 = tpu.matmul %118, %120, %cst_164 {dimension_numbers = #tpu.dot_dimension_numbers<[1], [0], [0], [1], [0, 0, 1, 1], [], []>} : vector<64x32xf32>, vector<32x4xf32>, vector<64x4xf32> -> vector<64x4xf32>
    %122 = vector.broadcast %0 : vector<1x4xf32> to vector<64x4xf32>
    %123 = arith.addf %121, %122 : vector<64x4xf32>
    %124 = vector.shape_cast %123 : vector<64x4xf32> to vector<8x8x4xf32>
    %125 = tpu.concatenate %33, %36, %42, %45, %60, %63, %69, %72 in 1 : vector<64x4xf32>, vector<64x4xf32>, vector<64x4xf32>, vector<64x4xf32>, vector<64x4xf32>, vector<64x4xf32>, vector<64x4xf32>, vector<64x4xf32> -> vector<64x32xf32>
    %c5 = arith.constant 5 : index
    %c0_165 = arith.constant 0 : index
    %c0_166 = arith.constant 0 : index
    %126 = vector.load %arg5[%c5, %c0_165, %c0_166] : memref<8x32x4xf32, #tpu.memory_space<vmem>>, vector<1x32x4xf32>
    %127 = vector.shape_cast %126 : vector<1x32x4xf32> to vector<32x4xf32>
    %cst_167 = arith.constant dense<0.000000e+00> : vector<64x4xf32>
    %128 = tpu.matmul %125, %127, %cst_167 {dimension_numbers = #tpu.dot_dimension_numbers<[1], [0], [0], [1], [0, 0, 1, 1], [], []>} : vector<64x32xf32>, vector<32x4xf32>, vector<64x4xf32> -> vector<64x4xf32>
    %129 = vector.broadcast %0 : vector<1x4xf32> to vector<64x4xf32>
    %130 = arith.addf %128, %129 : vector<64x4xf32>
    %131 = vector.shape_cast %130 : vector<64x4xf32> to vector<8x8x4xf32>
    %132 = tpu.concatenate %124, %131 in 2 : vector<8x8x4xf32>, vector<8x8x4xf32> -> vector<8x8x8xf32>
    %c0_168 = arith.constant 0 : index
    %c0_169 = arith.constant 0 : index
    %c1_170 = arith.constant 1 : index
    %c0_171 = arith.constant 0 : index
    %c0_172 = arith.constant 0 : index
    %c0_173 = arith.constant 0 : index
    %c0_174 = arith.constant 0 : index
    %133 = vector.load %arg7[%c0_168, %c0_169, %c1_170, %c0_171, %c0_172, %c0_173, %c0_174] : memref<1x1x2x8x2x8x8xf32, #tpu.memory_space<vmem>>, vector<1x1x1x8x1x8x8xf32>
    %134 = vector.shape_cast %133 : vector<1x1x1x8x1x8x8xf32> to vector<8x8x8xf32>
    %135 = vector.shape_cast %132 : vector<8x8x8xf32> to vector<1x1x1x8x1x8x8xf32>
    tpu.vector_store %arg7[%c0_168, %c0_169, %c1_170, %c0_171, %c0_172, %c0_173, %c0_174], %135 {strides = array<i32>} : memref<1x1x2x8x2x8x8xf32, #tpu.memory_space<vmem>>, vector<1x1x1x8x1x8x8xf32>,
    %136 = tpu.concatenate %39, %42, %48, %51, %66, %69, %75, %78 in 1 : vector<64x4xf32>, vector<64x4xf32>, vector<64x4xf32>, vector<64x4xf32>, vector<64x4xf32>, vector<64x4xf32>, vector<64x4xf32>, vector<64x4xf32> -> vector<64x32xf32>
    %c6 = arith.constant 6 : index
    %c0_175 = arith.constant 0 : index
    %c0_176 = arith.constant 0 : index
    %137 = vector.load %arg5[%c6, %c0_175, %c0_176] : memref<8x32x4xf32, #tpu.memory_space<vmem>>, vector<1x32x4xf32>
    %138 = vector.shape_cast %137 : vector<1x32x4xf32> to vector<32x4xf32>
    %cst_177 = arith.constant dense<0.000000e+00> : vector<64x4xf32>
    %139 = tpu.matmul %136, %138, %cst_177 {dimension_numbers = #tpu.dot_dimension_numbers<[1], [0], [0], [1], [0, 0, 1, 1], [], []>} : vector<64x32xf32>, vector<32x4xf32>, vector<64x4xf32> -> vector<64x4xf32>
    %140 = vector.broadcast %0 : vector<1x4xf32> to vector<64x4xf32>
    %141 = arith.addf %139, %140 : vector<64x4xf32>
    %142 = vector.shape_cast %141 : vector<64x4xf32> to vector<8x8x4xf32>
    %143 = tpu.concatenate %42, %45, %51, %54, %69, %72, %78, %81 in 1 : vector<64x4xf32>, vector<64x4xf32>, vector<64x4xf32>, vector<64x4xf32>, vector<64x4xf32>, vector<64x4xf32>, vector<64x4xf32>, vector<64x4xf32> -> vector<64x32xf32>
    %c7 = arith.constant 7 : index
    %c0_178 = arith.constant 0 : index
    %c0_179 = arith.constant 0 : index
    %144 = vector.load %arg5[%c7, %c0_178, %c0_179] : memref<8x32x4xf32, #tpu.memory_space<vmem>>, vector<1x32x4xf32>
    %145 = vector.shape_cast %144 : vector<1x32x4xf32> to vector<32x4xf32>
    %cst_180 = arith.constant dense<0.000000e+00> : vector<64x4xf32>
    %146 = tpu.matmul %143, %145, %cst_180 {dimension_numbers = #tpu.dot_dimension_numbers<[1], [0], [0], [1], [0, 0, 1, 1], [], []>} : vector<64x32xf32>, vector<32x4xf32>, vector<64x4xf32> -> vector<64x4xf32>
    %147 = vector.broadcast %0 : vector<1x4xf32> to vector<64x4xf32>
    %148 = arith.addf %146, %147 : vector<64x4xf32>
    %149 = vector.shape_cast %148 : vector<64x4xf32> to vector<8x8x4xf32>
    %150 = tpu.concatenate %142, %149 in 2 : vector<8x8x4xf32>, vector<8x8x4xf32> -> vector<8x8x8xf32>
    %c0_181 = arith.constant 0 : index
    %c0_182 = arith.constant 0 : index
    %c1_183 = arith.constant 1 : index
    %c0_184 = arith.constant 0 : index
    %c1_185 = arith.constant 1 : index
    %c0_186 = arith.constant 0 : index
    %c0_187 = arith.constant 0 : index
    %151 = vector.load %arg7[%c0_181, %c0_182, %c1_183, %c0_184, %c1_185, %c0_186, %c0_187] : memref<1x1x2x8x2x8x8xf32, #tpu.memory_space<vmem>>, vector<1x1x1x8x1x8x8xf32>
    %152 = vector.shape_cast %151 : vector<1x1x1x8x1x8x8xf32> to vector<8x8x8xf32>
    %153 = vector.shape_cast %150 : vector<8x8x8xf32> to vector<1x1x1x8x1x8x8xf32>
    tpu.vector_store %arg7[%c0_181, %c0_182, %c1_183, %c0_184, %c1_185, %c0_186, %c0_187], %153 {strides = array<i32>} : memref<1x1x2x8x2x8x8xf32, #tpu.memory_space<vmem>>, vector<1x1x1x8x1x8x8xf32>,
    return
  }
  func.func @transform_0(%arg0: i32, %arg1: i32) -> (i32, i32, i32, i32, i32) {
    %c0_i32 = arith.constant 0 : i32
    %c0_i32_0 = arith.constant 0 : i32
    %c0_i32_1 = arith.constant 0 : i32
    %c0_i32_2 = arith.constant 0 : i32
    return %arg0, %arg1, %c0_i32, %c0_i32_0, %c0_i32_1 : i32, i32, i32, i32, i32
  }
  func.func @transform_1(%arg0: i32, %arg1: i32) -> (i32, i32, i32, i32, i32) {
    %c1_i32 = arith.constant 1 : i32
    %0 = arith.addi %arg1, %c1_i32 : i32
    %c0_i32 = arith.constant 0 : i32
    %c0_i32_0 = arith.constant 0 : i32
    %c0_i32_1 = arith.constant 0 : i32
    %c0_i32_2 = arith.constant 0 : i32
    return %arg0, %0, %c0_i32, %c0_i32_0, %c0_i32_1 : i32, i32, i32, i32, i32
  }
  func.func @transform_2(%arg0: i32, %arg1: i32) -> (i32, i32, i32, i32, i32) {
    %c2_i32 = arith.constant 2 : i32
    %0 = arith.addi %arg1, %c2_i32 : i32
    %c0_i32 = arith.constant 0 : i32
    %c0_i32_0 = arith.constant 0 : i32
    %c0_i32_1 = arith.constant 0 : i32
    %c0_i32_2 = arith.constant 0 : i32
    return %arg0, %0, %c0_i32, %c0_i32_0, %c0_i32_1 : i32, i32, i32, i32, i32
  }
  func.func @transform_3(%arg0: i32, %arg1: i32) -> (i32, i32, i32) {
    %c0_i32 = arith.constant 0 : i32
    %c0_i32_0 = arith.constant 0 : i32
    %c0_i32_1 = arith.constant 0 : i32
    %c0_i32_2 = arith.constant 0 : i32
    return %c0_i32, %c0_i32_0, %c0_i32_1 : i32, i32, i32
  }
  func.func @transform_4(%arg0: i32, %arg1: i32) -> (i32, i32) {
    %c0_i32 = arith.constant 0 : i32
    %c0_i32_0 = arith.constant 0 : i32
    %c0_i32_1 = arith.constant 0 : i32
    return %c0_i32, %c0_i32_0 : i32, i32
  }
  func.func @transform_5(%arg0: i32, %arg1: i32) -> (i32, i32, i32, i32, i32, i32, i32) {
    %c0_i32 = arith.constant 0 : i32
    %c0_i32_0 = arith.constant 0 : i32
    %c0_i32_1 = arith.constant 0 : i32
    %c0_i32_2 = arith.constant 0 : i32
    %c0_i32_3 = arith.constant 0 : i32
    %c0_i32_4 = arith.constant 0 : i32
    return %arg0, %arg1, %c0_i32, %c0_i32_0, %c0_i32_1, %c0_i32_2, %c0_i32_3 : i32, i32, i32, i32, i32, i32, i32
  }
}

</mosaic_0001>

<llo_original>
// kernel: upsample3d_forward.1
$region0: #{upsample3d_forward.1}
  #allocation0 [shape = 'u32[]', space=smem, size = 0x4, offset = 0x4, fixed_abs, tag = 'smem constant byte address 0x4 - core index']
  #allocation1 [shape = 'u32[72,128]{1,0:T(1,128)}', space=vmem, size = 0x9000, scoped, tag = 'internal scratch']
  %s0 = inlined_call_operand.vmem [shape: f32[2,6,10,10,4], index: 0, kind: input, shape index: {}, may-alias: {0,1,2}]
  %s1 = inlined_call_operand.vmem [shape: f32[2,6,10,10,4], index: 1, kind: input, shape index: {}, may-alias: {0,1,2}]
  %s2 = inlined_call_operand.vmem [shape: f32[2,6,10,10,4], index: 2, kind: input, shape index: {}, may-alias: {0,1,2}]
  %s3 = inlined_call_operand.vmem [shape: f32[8,32,4], index: 3, kind: input, shape index: {}]
  %s4 = inlined_call_operand.vmem [shape: f32[1,4], index: 4, kind: input, shape index: {}]
  %s5 = inlined_call_operand.vmem [shape: f32[2,4,2,8,2,8,8], index: 5, kind: output, shape index: {}]
  %s6 = sld [smem:[#allocation0]]
  $region53: #{upsample3d_forward.1} parent=0
    _
  %s8 = ssub.s32 1, %s6
  %s9 = scalar_select 0, %s8, %s6
  loop: start=0, step=1, limit=10
  $region2: #{upsample3d_forward.1} parent=0 // loop_pre_header
    _
  $region3: #{upsample3d_forward.1} parent=0 // loop_header
    %s11 = sphi 0, %s15
    %p12 = scmp.ge.s32.totalorder %s11, 10
    %s18 = sphi 0, %s30
    %s19 = sphi 0, %s26
    %s20 = sphi 0, %s18
    %s21 = sphi 0, %s19
    %s22 = sphi 0, %s20
    %s23 = sphi 0, %s21
    %s35 = sphi 0, %s37
    %s38 = sphi 0, %s35
    %s39 = sphi 0, %s38
    %s55 = sphi 0, %s39
    %s65 = sphi 0, %s67
    %s68 = sphi 0, %s65
    %s69 = sphi 0, %s68
    %s85 = sphi 0, %s69
    %s95 = sphi 0, %s97
    %s98 = sphi 0, %s95
    %s99 = sphi 0, %s98
    %s115 = sphi 0, %s99
    %s119 = sphi 0, %s119
    %s121 = sphi 0, %s119
    %s122 = sphi 0, %s121
    %s136 = sphi 0, %s122
    %s140 = sphi 0, %s140
    %s142 = sphi 0, %s140
    %s143 = sphi 0, %s142
    %s157 = sphi 0, %s143
    %s165 = sphi 0, %s167
    %s168 = sphi 0, %s165
    %s169 = sphi 0, %s168
    %s185 = sphi 0, %s169
  $region4: #{upsample3d_forward.1} parent=0 // loop_header_branch
    %14 = sbr.rel (%p12) target = $region8
  $region5: #{upsample3d_forward.1} parent=0 // loop_body
    %s16 = ssub.s32 %s11, 1
    %s17 = ssub.s32 %s11, 2
    %s24 = sadd.s32 1, %s19
    %p25 = scmp.ge.s32.totalorder %s24, 4
    %s26 = scalar_select %p25, 0, %s24
    %s27 = sadd.s32 1, %s18
    %s28 = scalar_select %p25, %s27, %s18
    %p29 = scmp.ge.s32.totalorder %s28, 2
    %s30 = scalar_select %p29, 0, %s28
    %s31 = ssub.s32 %s18, %s30
    %s32 = ssub.s32 %s19, %s26
    %s33 = sor.u32 %s31, %s32
    %p34 = scmp.eq.s32.totalorder %s33, 0
    %s36 = sadd.s32 %s35, 1
    %s37 = scalar_select %p34, %s35, %s36
    %p40 = pneg %p34
    %p41 = scmp.eq.s32.totalorder %s11, 7
    %p42 = por %p40, %p41
    %p43 = scmp.ne.s32.totalorder %s35, %s38
    %p44 = scmp.eq.s32.totalorder %s11, 0
    %p45 = por %p43, %p44
    %p46 = scmp.ne.s32.totalorder %s35, %s38
    %p47 = scmp.eq.s32.totalorder %s16, 7
    %p48 = por %p46, %p47
    %p49 = scmp.ne.s32.totalorder %s38, %s39
    %p50 = scmp.eq.s32.totalorder %s16, 0
    %p51 = por %p49, %p50
    %p52 = scmp.ne.s32.totalorder %s38, %s39
    %p53 = scmp.eq.s32.totalorder %s17, 7
    %p54 = por %p52, %p53
    %p56 = scmp.ne.s32.totalorder %s39, %s55
    %p57 = scmp.eq.s32.totalorder %s17, 0
    %p58 = por %p56, %p57
    %s59 = sadd.s32 %s19, 1
    %s60 = sadd.s32 %s26, 1
    %s61 = ssub.s32 %s18, %s30
    %s62 = ssub.s32 %s59, %s60
    %s63 = sor.u32 %s61, %s62
    %p64 = scmp.eq.s32.totalorder %s63, 0
    %s66 = sadd.s32 %s65, 1
    %s67 = scalar_select %p64, %s65, %s66
    %p70 = pneg %p64
    %p71 = scmp.eq.s32.totalorder %s11, 7
    %p72 = por %p70, %p71
    %p73 = scmp.ne.s32.totalorder %s65, %s68
    %p74 = scmp.eq.s32.totalorder %s11, 0
    %p75 = por %p73, %p74
    %p76 = scmp.ne.s32.totalorder %s65, %s68
    %p77 = scmp.eq.s32.totalorder %s16, 7
    %p78 = por %p76, %p77
    %p79 = scmp.ne.s32.totalorder %s68, %s69
    %p80 = scmp.eq.s32.totalorder %s16, 0
    %p81 = por %p79, %p80
    %p82 = scmp.ne.s32.totalorder %s68, %s69
    %p83 = scmp.eq.s32.totalorder %s17, 7
    %p84 = por %p82, %p83
    %p86 = scmp.ne.s32.totalorder %s69, %s85
    %p87 = scmp.eq.s32.totalorder %s17, 0
    %p88 = por %p86, %p87
    %s89 = sadd.s32 %s19, 2
    %s90 = sadd.s32 %s26, 2
    %s91 = ssub.s32 %s18, %s30
    %s92 = ssub.s32 %s89, %s90
    %s93 = sor.u32 %s91, %s92
    %p94 = scmp.eq.s32.totalorder %s93, 0
    %s96 = sadd.s32 %s95, 1
    %s97 = scalar_select %p94, %s95, %s96
    %p100 = pneg %p94
    %p101 = scmp.eq.s32.totalorder %s11, 7
    %p102 = por %p100, %p101
    %p103 = scmp.ne.s32.totalorder %s95, %s98
    %p104 = scmp.eq.s32.totalorder %s11, 0
    %p105 = por %p103, %p104
    %p106 = scmp.ne.s32.totalorder %s95, %s98
    %p107 = scmp.eq.s32.totalorder %s16, 7
    %p108 = por %p106, %p107
    %p109 = scmp.ne.s32.totalorder %s98, %s99
    %p110 = scmp.eq.s32.totalorder %s16, 0
    %p111 = por %p109, %p110
    %p112 = scmp.ne.s32.totalorder %s98, %s99
    %p113 = scmp.eq.s32.totalorder %s17, 7
    %p114 = por %p112, %p113
    %p116 = scmp.ne.s32.totalorder %s99, %s115
    %p117 = scmp.eq.s32.totalorder %s17, 0
    %p118 = por %p116, %p117
    %s120 = sadd.s32 %s119, 1
    %p123 = scmp.eq.s32.totalorder %s11, 7
    %p124 = scmp.ne.s32.totalorder %s119, %s121
    %p125 = scmp.eq.s32.totalorder %s11, 0
    %p126 = por %p124, %p125
    %p127 = scmp.ne.s32.totalorder %s119, %s121
    %p128 = scmp.eq.s32.totalorder %s16, 7
    %p129 = por %p127, %p128
    %p130 = scmp.ne.s32.totalorder %s121, %s122
    %p131 = scmp.eq.s32.totalorder %s16, 0
    %p132 = por %p130, %p131
    %p133 = scmp.ne.s32.totalorder %s121, %s122
    %p134 = scmp.eq.s32.totalorder %s17, 7
    %p135 = por %p133, %p134
    %p137 = scmp.ne.s32.totalorder %s122, %s136
    %p138 = scmp.eq.s32.totalorder %s17, 0
    %p139 = por %p137, %p138
    %s141 = sadd.s32 %s140, 1
    %p144 = scmp.eq.s32.totalorder %s11, 7
    %p145 = scmp.ne.s32.totalorder %s140, %s142
    %p146 = scmp.eq.s32.totalorder %s11, 0
    %p147 = por %p145, %p146
    %p148 = scmp.ne.s32.totalorder %s140, %s142
    %p149 = scmp.eq.s32.totalorder %s16, 7
    %p150 = por %p148, %p149
    %p151 = scmp.ne.s32.totalorder %s142, %s143
    %p152 = scmp.eq.s32.totalorder %s16, 0
    %p153 = por %p151, %p152
    %p154 = scmp.ne.s32.totalorder %s142, %s143
    %p155 = scmp.eq.s32.totalorder %s17, 7
    %p156 = por %p154, %p155
    %p158 = scmp.ne.s32.totalorder %s143, %s157
    %p159 = scmp.eq.s32.totalorder %s17, 0
    %p160 = por %p158, %p159
    %s161 = ssub.s32 %s18, %s30
    %s162 = ssub.s32 %s19, %s26
    %s163 = sor.u32 %s161, %s162
    %p164 = scmp.eq.s32.totalorder %s163, 0
    %s166 = sadd.s32 %s165, 1
    %s167 = scalar_select %p164, %s165, %s166
    %p170 = pneg %p164
    %p171 = scmp.eq.s32.totalorder %s11, 7
    %p172 = por %p170, %p171
    %p173 = scmp.ne.s32.totalorder %s165, %s168
    %p174 = scmp.eq.s32.totalorder %s11, 0
    %p175 = por %p173, %p174
    %p176 = scmp.ne.s32.totalorder %s165, %s168
    %p177 = scmp.eq.s32.totalorder %s16, 7
    %p178 = por %p176, %p177
    %p179 = scmp.ne.s32.totalorder %s168, %s169
    %p180 = scmp.eq.s32.totalorder %s16, 0
    %p181 = por %p179, %p180
    %p182 = scmp.ne.s32.totalorder %s168, %s169
    %p183 = scmp.eq.s32.totalorder %s17, 7
    %p184 = por %p182, %p183
    %p186 = scmp.ne.s32.totalorder %s169, %s185
    %p187 = scmp.eq.s32.totalorder %s17, 0
    %p188 = por %p186, %p187
    %p189 = scmp.le.s32.totalorder 1, %s11
    %p190 = scmp.lt.s32.totalorder %s11, 9
    %p191 = pnand %p189, %p190
    %p192 = pneg %p191
    // Predicated region
    $region9: #{upsample3d_forward.1} parent=5 // pred_check
      _
    $region10: #{upsample3d_forward.1} parent=5 // pred_check_branch
      %194 = sbr.rel (%p191) target = $region12
    $region11: #{upsample3d_forward.1} parent=5 // pred_region
      %s195 = ssub.s32 %s11, 1
      // Predicated region
      $region13: #{upsample3d_forward.1} parent=11 // pred_check
        %p196 = pneg %p132
      $region14: #{upsample3d_forward.1} parent=11 // pred_check_branch
        %198 = sbr.rel (%p196) target = $region16
      $region15: #{upsample3d_forward.1} parent=11 // pred_region
        _
      $region16: #{upsample3d_forward.1} parent=11 // pred_fallthru
        _
      // Predicated region
      $region17: #{upsample3d_forward.1} parent=11 // pred_check
        %p199 = pneg %p153
      $region18: #{upsample3d_forward.1} parent=11 // pred_check_branch
        %201 = sbr.rel (%p199) target = $region20
      $region19: #{upsample3d_forward.1} parent=11 // pred_region
        _
      $region20: #{upsample3d_forward.1} parent=11 // pred_fallthru
        _
    $region12: #{upsample3d_forward.1} parent=5 // pred_fallthru
      _
    %p202 = scmp.lt.s32.totalorder %s11, 8
    // Predicated region
    $region21: #{upsample3d_forward.1} parent=5 // pred_check
      %p203 = pneg %p202
    $region22: #{upsample3d_forward.1} parent=5 // pred_check_branch
      %205 = sbr.rel (%p203) target = $region24
    $region23: #{upsample3d_forward.1} parent=5 // pred_region
      // Predicated region
      $region25: #{upsample3d_forward.1} parent=23 // pred_check
        %p206 = pneg %p45
      $region26: #{upsample3d_forward.1} parent=23 // pred_check_branch
        %208 = sbr.rel (%p206) target = $region28
      $region27: #{upsample3d_forward.1} parent=23 // pred_region
        %p209 = scmp.lt.s32.totalorder %s18, 1
        %s210 = scalar_select %p209, %s18, 1
        %p211 = scmp.lt.s32.totalorder %s19, 5
        %s212 = scalar_select %p211, %s19, 5
        %s213 = smul.addr %s212, 20
        %s214 = smul.addr %s210, 120
        %s215 = sadd.s32 %s213, %s214
        %s216 = smul.addr %s215, 8
        %s217 = scalar_lea.vmem %s0, %s216
      $region28: #{upsample3d_forward.1} parent=23 // pred_fallthru
        _
      // Predicated region
      $region29: #{upsample3d_forward.1} parent=23 // pred_check
        %p218 = pneg %p75
      $region30: #{upsample3d_forward.1} parent=23 // pred_check_branch
        %220 = sbr.rel (%p218) target = $region32
      $region31: #{upsample3d_forward.1} parent=23 // pred_region
        %s221 = sadd.s32 %s19, 1
        %p222 = scmp.lt.s32.totalorder %s18, 1
        %s223 = scalar_select %p222, %s18, 1
        %p224 = scmp.lt.s32.totalorder %s221, 5
        %s225 = scalar_select %p224, %s221, 5
        %s226 = smul.addr %s225, 20
        %s227 = smul.addr %s223, 120
        %s228 = sadd.s32 %s226, %s227
        %s229 = smul.addr %s228, 8
        %s230 = scalar_lea.vmem %s1, %s229
        %s231 = sadd.s32 %s19, 1
      $region32: #{upsample3d_forward.1} parent=23 // pred_fallthru
        _
      // Predicated region
      $region33: #{upsample3d_forward.1} parent=23 // pred_check
        %p232 = pneg %p105
      $region34: #{upsample3d_forward.1} parent=23 // pred_check_branch
        %234 = sbr.rel (%p232) target = $region36
      $region35: #{upsample3d_forward.1} parent=23 // pred_region
        %s235 = sadd.s32 %s19, 2
        %p236 = scmp.lt.s32.totalorder %s18, 1
        %s237 = scalar_select %p236, %s18, 1
        %p238 = scmp.lt.s32.totalorder %s235, 5
        %s239 = scalar_select %p238, %s235, 5
        %s240 = smul.addr %s239, 20
        %s241 = smul.addr %s237, 120
        %s242 = sadd.s32 %s240, %s241
        %s243 = smul.addr %s242, 8
        %s244 = scalar_lea.vmem %s2, %s243
        %s245 = sadd.s32 %s19, 2
      $region36: #{upsample3d_forward.1} parent=23 // pred_fallthru
        _
    $region24: #{upsample3d_forward.1} parent=5 // pred_fallthru
      _
    %p246 = scmp.le.s32.totalorder 1, %s11
    %p247 = scmp.lt.s32.totalorder %s11, 9
    %p248 = pnand %p246, %p247
    %p249 = pneg %p248
    // Predicated region
    $region37: #{upsample3d_forward.1} parent=5 // pred_check
      _
    $region38: #{upsample3d_forward.1} parent=5 // pred_check_branch
      %251 = sbr.rel (%p248) target = $region40
    $region39: #{upsample3d_forward.1} parent=5 // pred_region
      %s252 = ssub.s32 %s11, 1
      %p253 = scmp.lt.s32.totalorder %s20, 1
      %s254 = scalar_select %p253, %s20, 1
      %p255 = scmp.lt.s32.totalorder %s21, 5
      %s256 = scalar_select %p255, %s21, 5
      %s257 = smul.addr %s256, 20
      %s258 = smul.addr %s254, 120
      %s259 = sadd.s32 %s257, %s258
      %s260 = smul.addr %s259, 8
      %s261 = scalar_lea.vmem %s0, %s260
      %p262 = pneg %p51
      %p263 = pneg %p48
      %s264 = sadd.s32 %s21, 1
      %p265 = scmp.lt.s32.totalorder %s20, 1
      %s266 = scalar_select %p265, %s20, 1
      %p267 = scmp.lt.s32.totalorder %s264, 5
      %s268 = scalar_select %p267, %s264, 5
      %s269 = smul.addr %s268, 20
      %s270 = smul.addr %s266, 120
      %s271 = sadd.s32 %s269, %s270
      %s272 = smul.addr %s271, 8
      %s273 = scalar_lea.vmem %s1, %s272
      %p274 = pneg %p81
      %p275 = pneg %p78
      %s276 = sadd.s32 %s21, 2
      %p277 = scmp.lt.s32.totalorder %s20, 1
      %s278 = scalar_select %p277, %s20, 1
      %p279 = scmp.lt.s32.totalorder %s276, 5
      %s280 = scalar_select %p279, %s276, 5
      %s281 = smul.addr %s280, 20
      %s282 = smul.addr %s278, 120
      %s283 = sadd.s32 %s281, %s282
      %s284 = smul.addr %s283, 8
      %s285 = scalar_lea.vmem %s2, %s284
      %p286 = pneg %p111
      %p287 = pneg %p108
      %p288 = pneg %p132
      %p289 = pneg %p129
      %p290 = pneg %p153
      %p291 = pneg %p150
      %p292 = pneg %p181
      %p293 = pneg %p178
      %p294 = scmp.lt.s32.totalorder %s20, 1
      %s295 = scalar_select %p294, %s20, 1
      %p296 = scmp.lt.s32.totalorder %s21, 3
      %s297 = scalar_select %p296, %s21, 3
      %s298 = smul.addr %s297, 32
      %s299 = smul.addr %s295, 128
      %s300 = sadd.s32 %s298, %s299
      %s301 = smul.addr %s300, 8
      %s302 = scalar_lea.vmem %s5, %s301
      %p303 = scmp.lt.s32.totalorder %s20, 1
      %s304 = scalar_select %p303, %s20, 1
      %p305 = scmp.lt.s32.totalorder %s21, 5
      %s306 = scalar_select %p305, %s21, 5
      %s307 = smul.addr %s306, 20
      %s308 = smul.addr %s304, 120
      %s309 = sadd.s32 %s307, %s308
      %s310 = smul.addr %s309, 8
      %s311 = scalar_lea.vmem %s0, %s310
      %s312 = sadd.s32 %s21, 1
      %p313 = scmp.lt.s32.totalorder %s20, 1
      %s314 = scalar_select %p313, %s20, 1
      %p315 = scmp.lt.s32.totalorder %s312, 5
      %s316 = scalar_select %p315, %s312, 5
      %s317 = smul.addr %s316, 20
      %s318 = smul.addr %s314, 120
      %s319 = sadd.s32 %s317, %s318
      %s320 = smul.addr %s319, 8
      %s321 = scalar_lea.vmem %s1, %s320
      %s322 = sadd.s32 %s21, 1
      %s323 = sadd.s32 %s21, 2
      %p324 = scmp.lt.s32.totalorder %s20, 1
      %s325 = scalar_select %p324, %s20, 1
      %p326 = scmp.lt.s32.totalorder %s323, 5
      %s327 = scalar_select %p326, %s323, 5
      %s328 = smul.addr %s327, 20
      %s329 = smul.addr %s325, 120
      %s330 = sadd.s32 %s328, %s329
      %s331 = smul.addr %s330, 8
      %s332 = scalar_lea.vmem %s2, %s331
      %s333 = sadd.s32 %s21, 2
      %p334 = scmp.lt.s32.totalorder %s20, 1
      %s335 = scalar_select %p334, %s20, 1
      %p336 = scmp.lt.s32.totalorder %s21, 3
      %s337 = scalar_select %p336, %s21, 3
      %s338 = smul.addr %s337, 32
      %s339 = smul.addr %s335, 128
      %s340 = sadd.s32 %s338, %s339
      %s341 = smul.addr %s340, 8
      %s342 = scalar_lea.vmem %s5, %s341
      %v343 = vld [vmem:[%s4] sm:$0x1]
      %v344 = vld [vmem:[%s311] sm:$0xff]
      %v345 = vld [vmem:[%s311 + $0x10] sm:$0xff]
      %v346 = vld [vmem:[%s311 + $0x20] sm:$0xff]
      %v347 = vld [vmem:[%s311 + $0x30] sm:$0xff]
      %v348 = vld [vmem:[%s311 + $0x40] sm:$0xff]
      %v349 = vld [vmem:[%s311 + $0x50] sm:$0xff]
      %v350 = vld [vmem:[%s311 + $0x60] sm:$0xff]
      %v351 = vld [vmem:[%s311 + $0x70] sm:$0xff]
      %v352 = vld [vmem:[%s311 + $0x1] sm:$0xff]
      %v353 = vld [vmem:[%s311 + $0x11] sm:$0xff]
      %v354 = vld [vmem:[%s311 + $0x21] sm:$0xff]
      %v355 = vld [vmem:[%s311 + $0x31] sm:$0xff]
      %v356 = vld [vmem:[%s311 + $0x41] sm:$0xff]
      %v357 = vld [vmem:[%s311 + $0x51] sm:$0xff]
      %v358 = vld [vmem:[%s311 + $0x61] sm:$0xff]
      %v359 = vld [vmem:[%s311 + $0x71] sm:$0xff]
      %v360 = vld [vmem:[%s311 + $0x2] sm:$0xff]
      %v361 = vld [vmem:[%s311 + $0x12] sm:$0xff]
      %v362 = vld [vmem:[%s311 + $0x22] sm:$0xff]
      %v363 = vld [vmem:[%s311 + $0x32] sm:$0xff]
      %v364 = vld [vmem:[%s311 + $0x42] sm:$0xff]
      %v365 = vld [vmem:[%s311 + $0x52] sm:$0xff]
      %v366 = vld [vmem:[%s311 + $0x62] sm:$0xff]
      %v367 = vld [vmem:[%s311 + $0x72] sm:$0xff]
      %s368 = scalar_lea.vmem %s311, 16
      %v369 = vld [vmem:[%s368] sm:$0xff]
      %v370 = vld [vmem:[%s368 + $0x10] sm:$0xff]
      %v371 = vld [vmem:[%s368 + $0x20] sm:$0xff]
      %v372 = vld [vmem:[%s368 + $0x30] sm:$0xff]
      %v373 = vld [vmem:[%s368 + $0x40] sm:$0xff]
      %v374 = vld [vmem:[%s368 + $0x50] sm:$0xff]
      %v375 = vld [vmem:[%s368 + $0x60] sm:$0xff]
      %v376 = vld [vmem:[%s368 + $0x70] sm:$0xff]
      %v377 = vld [vmem:[%s368 + $0x1] sm:$0xff]
      %v378 = vld [vmem:[%s368 + $0x11] sm:$0xff]
      %v379 = vld [vmem:[%s368 + $0x21] sm:$0xff]
      %v380 = vld [vmem:[%s368 + $0x31] sm:$0xff]
      %v381 = vld [vmem:[%s368 + $0x41] sm:$0xff]
      %v382 = vld [vmem:[%s368 + $0x51] sm:$0xff]
      %v383 = vld [vmem:[%s368 + $0x61] sm:$0xff]
      %v384 = vld [vmem:[%s368 + $0x71] sm:$0xff]
      %v385 = vld [vmem:[%s368 + $0x2] sm:$0xff]
      %v386 = vld [vmem:[%s368 + $0x12] sm:$0xff]
      %v387 = vld [vmem:[%s368 + $0x22] sm:$0xff]
      %v388 = vld [vmem:[%s368 + $0x32] sm:$0xff]
      %v389 = vld [vmem:[%s368 + $0x42] sm:$0xff]
      %v390 = vld [vmem:[%s368 + $0x52] sm:$0xff]
      %v391 = vld [vmem:[%s368 + $0x62] sm:$0xff]
      %v392 = vld [vmem:[%s368 + $0x72] sm:$0xff]
      %s393 = scalar_lea.vmem %s311, 32
      %v394 = vld [vmem:[%s393] sm:$0xff]
      %v395 = vld [vmem:[%s393 + $0x10] sm:$0xff]
      %v396 = vld [vmem:[%s393 + $0x20] sm:$0xff]
      %v397 = vld [vmem:[%s393 + $0x30] sm:$0xff]
      %v398 = vld [vmem:[%s393 + $0x40] sm:$0xff]
      %v399 = vld [vmem:[%s393 + $0x50] sm:$0xff]
      %v400 = vld [vmem:[%s393 + $0x60] sm:$0xff]
      %v401 = vld [vmem:[%s393 + $0x70] sm:$0xff]
      %v402 = vld [vmem:[%s393 + $0x1] sm:$0xff]
      %v403 = vld [vmem:[%s393 + $0x11] sm:$0xff]
      %v404 = vld [vmem:[%s393 + $0x21] sm:$0xff]
      %v405 = vld [vmem:[%s393 + $0x31] sm:$0xff]
      %v406 = vld [vmem:[%s393 + $0x41] sm:$0xff]
      %v407 = vld [vmem:[%s393 + $0x51] sm:$0xff]
      %v408 = vld [vmem:[%s393 + $0x61] sm:$0xff]
      %v409 = vld [vmem:[%s393 + $0x71] sm:$0xff]
      %v410 = vld [vmem:[%s393 + $0x2] sm:$0xff]
      %v411 = vld [vmem:[%s393 + $0x12] sm:$0xff]
      %v412 = vld [vmem:[%s393 + $0x22] sm:$0xff]
      %v413 = vld [vmem:[%s393 + $0x32] sm:$0xff]
      %v414 = vld [vmem:[%s393 + $0x42] sm:$0xff]
      %v415 = vld [vmem:[%s393 + $0x52] sm:$0xff]
      %v416 = vld [vmem:[%s393 + $0x62] sm:$0xff]
      %v417 = vld [vmem:[%s393 + $0x72] sm:$0xff]
      %v418 = vld [vmem:[%s321] sm:$0xff]
      %v419 = vld [vmem:[%s321 + $0x10] sm:$0xff]
      %v420 = vld [vmem:[%s321 + $0x20] sm:$0xff]
      %v421 = vld [vmem:[%s321 + $0x30] sm:$0xff]
      %v422 = vld [vmem:[%s321 + $0x40] sm:$0xff]
      %v423 = vld [vmem:[%s321 + $0x50] sm:$0xff]
      %v424 = vld [vmem:[%s321 + $0x60] sm:$0xff]
      %v425 = vld [vmem:[%s321 + $0x70] sm:$0xff]
      %v426 = vld [vmem:[%s321 + $0x1] sm:$0xff]
      %v427 = vld [vmem:[%s321 + $0x11] sm:$0xff]
      %v428 = vld [vmem:[%s321 + $0x21] sm:$0xff]
      %v429 = vld [vmem:[%s321 + $0x31] sm:$0xff]
      %v430 = vld [vmem:[%s321 + $0x41] sm:$0xff]
      %v431 = vld [vmem:[%s321 + $0x51] sm:$0xff]
      %v432 = vld [vmem:[%s321 + $0x61] sm:$0xff]
      %v433 = vld [vmem:[%s321 + $0x71] sm:$0xff]
      %v434 = vld [vmem:[%s321 + $0x2] sm:$0xff]
      %v435 = vld [vmem:[%s321 + $0x12] sm:$0xff]
      %v436 = vld [vmem:[%s321 + $0x22] sm:$0xff]
      %v437 = vld [vmem:[%s321 + $0x32] sm:$0xff]
      %v438 = vld [vmem:[%s321 + $0x42] sm:$0xff]
      %v439 = vld [vmem:[%s321 + $0x52] sm:$0xff]
      %v440 = vld [vmem:[%s321 + $0x62] sm:$0xff]
      %v441 = vld [vmem:[%s321 + $0x72] sm:$0xff]
      %s442 = scalar_lea.vmem %s321, 16
      %v443 = vld [vmem:[%s442] sm:$0xff]
      %v444 = vld [vmem:[%s442 + $0x10] sm:$0xff]
      %v445 = vld [vmem:[%s442 + $0x20] sm:$0xff]
      %v446 = vld [vmem:[%s442 + $0x30] sm:$0xff]
      %v447 = vld [vmem:[%s442 + $0x40] sm:$0xff]
      %v448 = vld [vmem:[%s442 + $0x50] sm:$0xff]
      %v449 = vld [vmem:[%s442 + $0x60] sm:$0xff]
      %v450 = vld [vmem:[%s442 + $0x70] sm:$0xff]
      %v451 = vld [vmem:[%s442 + $0x1] sm:$0xff]
      %v452 = vld [vmem:[%s442 + $0x11] sm:$0xff]
      %v453 = vld [vmem:[%s442 + $0x21] sm:$0xff]
      %v454 = vld [vmem:[%s442 + $0x31] sm:$0xff]
      %v455 = vld [vmem:[%s442 + $0x41] sm:$0xff]
      %v456 = vld [vmem:[%s442 + $0x51] sm:$0xff]
      %v457 = vld [vmem:[%s442 + $0x61] sm:$0xff]
      %v458 = vld [vmem:[%s442 + $0x71] sm:$0xff]
      %v459 = vld [vmem:[%s442 + $0x2] sm:$0xff]
      %v460 = vld [vmem:[%s442 + $0x12] sm:$0xff]
      %v461 = vld [vmem:[%s442 + $0x22] sm:$0xff]
      %v462 = vld [vmem:[%s442 + $0x32] sm:$0xff]
      %v463 = vld [vmem:[%s442 + $0x42] sm:$0xff]
      %v464 = vld [vmem:[%s442 + $0x52] sm:$0xff]
      %v465 = vld [vmem:[%s442 + $0x62] sm:$0xff]
      %v466 = vld [vmem:[%s442 + $0x72] sm:$0xff]
      %s467 = scalar_lea.vmem %s321, 32
      %v468 = vld [vmem:[%s467] sm:$0xff]
      %v469 = vld [vmem:[%s467 + $0x10] sm:$0xff]
      %v470 = vld [vmem:[%s467 + $0x20] sm:$0xff]
      %v471 = vld [vmem:[%s467 + $0x30] sm:$0xff]
      %v472 = vld [vmem:[%s467 + $0x40] sm:$0xff]
      %v473 = vld [vmem:[%s467 + $0x50] sm:$0xff]
      %v474 = vld [vmem:[%s467 + $0x60] sm:$0xff]
      %v475 = vld [vmem:[%s467 + $0x70] sm:$0xff]
      %v476 = vld [vmem:[%s467 + $0x1] sm:$0xff]
      %v477 = vld [vmem:[%s467 + $0x11] sm:$0xff]
      %v478 = vld [vmem:[%s467 + $0x21] sm:$0xff]
      %v479 = vld [vmem:[%s467 + $0x31] sm:$0xff]
      %v480 = vld [vmem:[%s467 + $0x41] sm:$0xff]
      %v481 = vld [vmem:[%s467 + $0x51] sm:$0xff]
      %v482 = vld [vmem:[%s467 + $0x61] sm:$0xff]
      %v483 = vld [vmem:[%s467 + $0x71] sm:$0xff]
      %v484 = vld [vmem:[%s467 + $0x2] sm:$0xff]
      %v485 = vld [vmem:[%s467 + $0x12] sm:$0xff]
      %v486 = vld [vmem:[%s467 + $0x22] sm:$0xff]
      %v487 = vld [vmem:[%s467 + $0x32] sm:$0xff]
      %v488 = vld [vmem:[%s467 + $0x42] sm:$0xff]
      %v489 = vld [vmem:[%s467 + $0x52] sm:$0xff]
      %v490 = vld [vmem:[%s467 + $0x62] sm:$0xff]
      %v491 = vld [vmem:[%s467 + $0x72] sm:$0xff]
      %v492 = vld [vmem:[%s332] sm:$0xff]
      %v493 = vld [vmem:[%s332 + $0x10] sm:$0xff]
      %v494 = vld [vmem:[%s332 + $0x20] sm:$0xff]
      %v495 = vld [vmem:[%s332 + $0x30] sm:$0xff]
      %v496 = vld [vmem:[%s332 + $0x40] sm:$0xff]
      %v497 = vld [vmem:[%s332 + $0x50] sm:$0xff]
      %v498 = vld [vmem:[%s332 + $0x60] sm:$0xff]
      %v499 = vld [vmem:[%s332 + $0x70] sm:$0xff]
      %v500 = vld [vmem:[%s332 + $0x1] sm:$0xff]
      %v501 = vld [vmem:[%s332 + $0x11] sm:$0xff]
      %v502 = vld [vmem:[%s332 + $0x21] sm:$0xff]
      %v503 = vld [vmem:[%s332 + $0x31] sm:$0xff]
      %v504 = vld [vmem:[%s332 + $0x41] sm:$0xff]
      %v505 = vld [vmem:[%s332 + $0x51] sm:$0xff]
      %v506 = vld [vmem:[%s332 + $0x61] sm:$0xff]
      %v507 = vld [vmem:[%s332 + $0x71] sm:$0xff]
      %v508 = vld [vmem:[%s332 + $0x2] sm:$0xff]
      %v509 = vld [vmem:[%s332 + $0x12] sm:$0xff]
      %v510 = vld [vmem:[%s332 + $0x22] sm:$0xff]
      %v511 = vld [vmem:[%s332 + $0x32] sm:$0xff]
      %v512 = vld [vmem:[%s332 + $0x42] sm:$0xff]
      %v513 = vld [vmem:[%s332 + $0x52] sm:$0xff]
      %v514 = vld [vmem:[%s332 + $0x62] sm:$0xff]
      %v515 = vld [vmem:[%s332 + $0x72] sm:$0xff]
      %s516 = scalar_lea.vmem %s332, 16
      %v517 = vld [vmem:[%s516] sm:$0xff]
      %v518 = vld [vmem:[%s516 + $0x10] sm:$0xff]
      %v519 = vld [vmem:[%s516 + $0x20] sm:$0xff]
      %v520 = vld [vmem:[%s516 + $0x30] sm:$0xff]
      %v521 = vld [vmem:[%s516 + $0x40] sm:$0xff]
      %v522 = vld [vmem:[%s516 + $0x50] sm:$0xff]
      %v523 = vld [vmem:[%s516 + $0x60] sm:$0xff]
      %v524 = vld [vmem:[%s516 + $0x70] sm:$0xff]
      %v525 = vld [vmem:[%s516 + $0x1] sm:$0xff]
      %v526 = vld [vmem:[%s516 + $0x11] sm:$0xff]
      %v527 = vld [vmem:[%s516 + $0x21] sm:$0xff]
      %v528 = vld [vmem:[%s516 + $0x31] sm:$0xff]
      %v529 = vld [vmem:[%s516 + $0x41] sm:$0xff]
      %v530 = vld [vmem:[%s516 + $0x51] sm:$0xff]
      %v531 = vld [vmem:[%s516 + $0x61] sm:$0xff]
      %v532 = vld [vmem:[%s516 + $0x71] sm:$0xff]
      %v533 = vld [vmem:[%s516 + $0x2] sm:$0xff]
      %v534 = vld [vmem:[%s516 + $0x12] sm:$0xff]
      %v535 = vld [vmem:[%s516 + $0x22] sm:$0xff]
      %v536 = vld [vmem:[%s516 + $0x32] sm:$0xff]
      %v537 = vld [vmem:[%s516 + $0x42] sm:$0xff]
      %v538 = vld [vmem:[%s516 + $0x52] sm:$0xff]
      %v539 = vld [vmem:[%s516 + $0x62] sm:$0xff]
      %v540 = vld [vmem:[%s516 + $0x72] sm:$0xff]
      %s541 = scalar_lea.vmem %s332, 32
      %v542 = vld [vmem:[%s541] sm:$0xff]
      %v543 = vld [vmem:[%s541 + $0x10] sm:$0xff]
      %v544 = vld [vmem:[%s541 + $0x20] sm:$0xff]
      %v545 = vld [vmem:[%s541 + $0x30] sm:$0xff]
      %v546 = vld [vmem:[%s541 + $0x40] sm:$0xff]
      %v547 = vld [vmem:[%s541 + $0x50] sm:$0xff]
      %v548 = vld [vmem:[%s541 + $0x60] sm:$0xff]
      %v549 = vld [vmem:[%s541 + $0x70] sm:$0xff]
      %v550 = vld [vmem:[%s541 + $0x1] sm:$0xff]
      %v551 = vld [vmem:[%s541 + $0x11] sm:$0xff]
      %v552 = vld [vmem:[%s541 + $0x21] sm:$0xff]
      %v553 = vld [vmem:[%s541 + $0x31] sm:$0xff]
      %v554 = vld [vmem:[%s541 + $0x41] sm:$0xff]
      %v555 = vld [vmem:[%s541 + $0x51] sm:$0xff]
      %v556 = vld [vmem:[%s541 + $0x61] sm:$0xff]
      %v557 = vld [vmem:[%s541 + $0x71] sm:$0xff]
      %v558 = vld [vmem:[%s541 + $0x2] sm:$0xff]
      %v559 = vld [vmem:[%s541 + $0x12] sm:$0xff]
      %v560 = vld [vmem:[%s541 + $0x22] sm:$0xff]
      %v561 = vld [vmem:[%s541 + $0x32] sm:$0xff]
      %v562 = vld [vmem:[%s541 + $0x42] sm:$0xff]
      %v563 = vld [vmem:[%s541 + $0x52] sm:$0xff]
      %v564 = vld [vmem:[%s541 + $0x62] sm:$0xff]
      %v565 = vld [vmem:[%s541 + $0x72] sm:$0xff]
      %574 = vrot.lane.b32.xlu0 %v352, 4
      %v575 = vpop.permute.xlu0 %574
      %576 = vrot.lane.b32.xlu0 %v353, 4
      %v577 = vpop.permute.xlu0 %576
      %578 = vrot.lane.b32.xlu0 %v354, 4
      %v579 = vpop.permute.xlu0 %578
      %580 = vrot.lane.b32.xlu0 %v355, 4
      %v581 = vpop.permute.xlu0 %580
      %582 = vrot.lane.b32.xlu0 %v356, 4
      %v583 = vpop.permute.xlu0 %582
      %584 = vrot.lane.b32.xlu0 %v357, 4
      %v585 = vpop.permute.xlu0 %584
      %586 = vrot.lane.b32.xlu0 %v358, 4
      %v587 = vpop.permute.xlu0 %586
      %588 = vrot.lane.b32.xlu0 %v359, 4
      %v589 = vpop.permute.xlu0 %588
      %606 = vrot.lane.b32.xlu0 %v369, 8
      %v607 = vpop.permute.xlu0 %606
      %608 = vrot.lane.b32.xlu0 %v370, 8
      %v609 = vpop.permute.xlu0 %608
      %610 = vrot.lane.b32.xlu0 %v371, 8
      %v611 = vpop.permute.xlu0 %610
      %612 = vrot.lane.b32.xlu0 %v372, 8
      %v613 = vpop.permute.xlu0 %612
      %614 = vrot.lane.b32.xlu0 %v373, 8
      %v615 = vpop.permute.xlu0 %614
      %616 = vrot.lane.b32.xlu0 %v374, 8
      %v617 = vpop.permute.xlu0 %616
      %618 = vrot.lane.b32.xlu0 %v375, 8
      %v619 = vpop.permute.xlu0 %618
      %620 = vrot.lane.b32.xlu0 %v376, 8
      %v621 = vpop.permute.xlu0 %620
      %638 = vrot.lane.b32.xlu0 %v377, 12
      %v639 = vpop.permute.xlu0 %638
      %640 = vrot.lane.b32.xlu0 %v378, 12
      %v641 = vpop.permute.xlu0 %640
      %642 = vrot.lane.b32.xlu0 %v379, 12
      %v643 = vpop.permute.xlu0 %642
      %644 = vrot.lane.b32.xlu0 %v380, 12
      %v645 = vpop.permute.xlu0 %644
      %646 = vrot.lane.b32.xlu0 %v381, 12
      %v647 = vpop.permute.xlu0 %646
      %648 = vrot.lane.b32.xlu0 %v382, 12
      %v649 = vpop.permute.xlu0 %648
      %650 = vrot.lane.b32.xlu0 %v383, 12
      %v651 = vpop.permute.xlu0 %650
      %652 = vrot.lane.b32.xlu0 %v384, 12
      %v653 = vpop.permute.xlu0 %652
      %670 = vrot.lane.b32.xlu0 %v418, 16
      %v671 = vpop.permute.xlu0 %670
      %672 = vrot.lane.b32.xlu0 %v419, 16
      %v673 = vpop.permute.xlu0 %672
      %674 = vrot.lane.b32.xlu0 %v420, 16
      %v675 = vpop.permute.xlu0 %674
      %676 = vrot.lane.b32.xlu0 %v421, 16
      %v677 = vpop.permute.xlu0 %676
      %678 = vrot.lane.b32.xlu0 %v422, 16
      %v679 = vpop.permute.xlu0 %678
      %680 = vrot.lane.b32.xlu0 %v423, 16
      %v681 = vpop.permute.xlu0 %680
      %682 = vrot.lane.b32.xlu0 %v424, 16
      %v683 = vpop.permute.xlu0 %682
      %684 = vrot.lane.b32.xlu0 %v425, 16
      %v685 = vpop.permute.xlu0 %684
      %702 = vrot.lane.b32.xlu0 %v426, 20
      %v703 = vpop.permute.xlu0 %702
      %704 = vrot.lane.b32.xlu0 %v427, 20
      %v705 = vpop.permute.xlu0 %704
      %706 = vrot.lane.b32.xlu0 %v428, 20
      %v707 = vpop.permute.xlu0 %706
      %708 = vrot.lane.b32.xlu0 %v429, 20
      %v709 = vpop.permute.xlu0 %708
      %710 = vrot.lane.b32.xlu0 %v430, 20
      %v711 = vpop.permute.xlu0 %710
      %712 = vrot.lane.b32.xlu0 %v431, 20
      %v713 = vpop.permute.xlu0 %712
      %714 = vrot.lane.b32.xlu0 %v432, 20
      %v715 = vpop.permute.xlu0 %714
      %716 = vrot.lane.b32.xlu0 %v433, 20
      %v717 = vpop.permute.xlu0 %716
      %734 = vrot.lane.b32.xlu0 %v443, 24
      %v735 = vpop.permute.xlu0 %734
      %736 = vrot.lane.b32.xlu0 %v444, 24
      %v737 = vpop.permute.xlu0 %736
      %738 = vrot.lane.b32.xlu0 %v445, 24
      %v739 = vpop.permute.xlu0 %738
      %740 = vrot.lane.b32.xlu0 %v446, 24
      %v741 = vpop.permute.xlu0 %740
      %742 = vrot.lane.b32.xlu0 %v447, 24
      %v743 = vpop.permute.xlu0 %742
      %744 = vrot.lane.b32.xlu0 %v448, 24
      %v745 = vpop.permute.xlu0 %744
      %746 = vrot.lane.b32.xlu0 %v449, 24
      %v747 = vpop.permute.xlu0 %746
      %748 = vrot.lane.b32.xlu0 %v450, 24
      %v749 = vpop.permute.xlu0 %748
      %766 = vrot.lane.b32.xlu0 %v451, 28
      %v767 = vpop.permute.xlu0 %766
      %768 = vrot.lane.b32.xlu0 %v452, 28
      %v769 = vpop.permute.xlu0 %768
      %770 = vrot.lane.b32.xlu0 %v453, 28
      %v771 = vpop.permute.xlu0 %770
      %772 = vrot.lane.b32.xlu0 %v454, 28
      %v773 = vpop.permute.xlu0 %772
      %774 = vrot.lane.b32.xlu0 %v455, 28
      %v775 = vpop.permute.xlu0 %774
      %776 = vrot.lane.b32.xlu0 %v456, 28
      %v777 = vpop.permute.xlu0 %776
      %778 = vrot.lane.b32.xlu0 %v457, 28
      %v779 = vpop.permute.xlu0 %778
      %780 = vrot.lane.b32.xlu0 %v458, 28
      %v781 = vpop.permute.xlu0 %780
      %vm790 = vcmask 31744
      %v791 = vsel %vm790, %v344, %v575
      %v792 = vsel %vm790, %v345, %v577
      %v793 = vsel %vm790, %v346, %v579
      %v794 = vsel %vm790, %v347, %v581
      %v795 = vsel %vm790, %v348, %v583
      %v796 = vsel %vm790, %v349, %v585
      %v797 = vsel %vm790, %v350, %v587
      %v798 = vsel %vm790, %v351, %v589
      %vm799 = vcmask 64512
      %v800 = vsel %vm799, %v791, %v607
      %v801 = vsel %vm799, %v792, %v609
      %v802 = vsel %vm799, %v793, %v611
      %v803 = vsel %vm799, %v794, %v613
      %v804 = vsel %vm799, %v795, %v615
      %v805 = vsel %vm799, %v796, %v617
      %v806 = vsel %vm799, %v797, %v619
      %v807 = vsel %vm799, %v798, %v621
      %vm808 = vcmask 97280
      %v809 = vsel %vm808, %v800, %v639
      %v810 = vsel %vm808, %v801, %v641
      %v811 = vsel %vm808, %v802, %v643
      %v812 = vsel %vm808, %v803, %v645
      %v813 = vsel %vm808, %v804, %v647
      %v814 = vsel %vm808, %v805, %v649
      %v815 = vsel %vm808, %v806, %v651
      %v816 = vsel %vm808, %v807, %v653
      %vm817 = vcmask 130048
      %v818 = vsel %vm817, %v809, %v671
      %v819 = vsel %vm817, %v810, %v673
      %v820 = vsel %vm817, %v811, %v675
      %v821 = vsel %vm817, %v812, %v677
      %v822 = vsel %vm817, %v813, %v679
      %v823 = vsel %vm817, %v814, %v681
      %v824 = vsel %vm817, %v815, %v683
      %v825 = vsel %vm817, %v816, %v685
      %vm826 = vcmask 162816
      %v827 = vsel %vm826, %v818, %v703
      %v828 = vsel %vm826, %v819, %v705
      %v829 = vsel %vm826, %v820, %v707
      %v830 = vsel %vm826, %v821, %v709
      %v831 = vsel %vm826, %v822, %v711
      %v832 = vsel %vm826, %v823, %v713
      %v833 = vsel %vm826, %v824, %v715
      %v834 = vsel %vm826, %v825, %v717
      %vm835 = vcmask 195584
      %v836 = vsel %vm835, %v827, %v735
      %v837 = vsel %vm835, %v828, %v737
      %v838 = vsel %vm835, %v829, %v739
      %v839 = vsel %vm835, %v830, %v741
      %v840 = vsel %vm835, %v831, %v743
      %v841 = vsel %vm835, %v832, %v745
      %v842 = vsel %vm835, %v833, %v747
      %v843 = vsel %vm835, %v834, %v749
      %vm844 = vcmask 228352
      %v845 = vsel %vm844, %v836, %v767
      %v846 = vsel %vm844, %v837, %v769
      %v847 = vsel %vm844, %v838, %v771
      %v848 = vsel %vm844, %v839, %v773
      %v849 = vsel %vm844, %v840, %v775
      %v850 = vsel %vm844, %v841, %v777
      %v851 = vsel %vm844, %v842, %v779
      %v852 = vsel %vm844, %v843, %v781
      %v853 = vld [vmem:[%s3] sm:$0xff]
      %v854 = vld [vmem:[%s3 + $0x8] sm:$0xff]
      %v855 = vld [vmem:[%s3 + $0x10] sm:$0xff]
      %v856 = vld [vmem:[%s3 + $0x18] sm:$0xff]
      %v858 = vperm.slane %v343, 0
      %vm860 = vcmask 261120
      %v862 = vsel %vm860, %v845, 0
      %v865 = vsel %vm860, %v846, 0
      %v868 = vsel %vm860, %v847, 0
      %v871 = vsel %vm860, %v848, 0
      %v874 = vsel %vm860, %v849, 0
      %v877 = vsel %vm860, %v850, 0
      %v880 = vsel %vm860, %v851, 0
      %v883 = vsel %vm860, %v852, 0
      %885 = vmatpush.msra.mxu0 0.0
      %886 = vmatpush.msra.mxu0 0.0
      %887 = vmatpush.msra.mxu0 0.0
      %888 = vmatpush.msra.mxu0 0.0
      %889 = vmatpush.msra.mxu0 0.0
      %890 = vmatpush.msra.mxu0 0.0
      %891 = vmatpush.msra.mxu0 0.0
      %892 = vmatpush.msra.mxu0 0.0
      %893 = vmatpush.msra.mxu0 0.0
      %894 = vmatpush.msra.mxu0 0.0
      %895 = vmatpush.msra.mxu0 0.0
      %896 = vmatpush.msra.mxu0 0.0
      %897 = vmatpush.msra.mxu0 %v856
      %898 = vmatpush.msra.mxu0 %v855
      %899 = vmatpush.msra.mxu0 %v854
      %900 = vmatpush.msra.mxu0 %v853
      %901 = vmatmul.f32.gmra.mxu0 %v862
      %v902 = vpop.f32.mrf.mxu0
      %v903 = vadd.f32 %v858, %v902
      %904 = vmatmul.f32.gmra.mxu0 %v865
      %v905 = vpop.f32.mrf.mxu0
      %v906 = vadd.f32 %v858, %v905
      %907 = vmatmul.f32.gmra.mxu0 %v868
      %v908 = vpop.f32.mrf.mxu0
      %v909 = vadd.f32 %v858, %v908
      %910 = vmatmul.f32.gmra.mxu0 %v871
      %v911 = vpop.f32.mrf.mxu0
      %v912 = vadd.f32 %v858, %v911
      %913 = vmatmul.f32.gmra.mxu0 %v874
      %v914 = vpop.f32.mrf.mxu0
      %v915 = vadd.f32 %v858, %v914
      %916 = vmatmul.f32.gmra.mxu0 %v877
      %v917 = vpop.f32.mrf.mxu0
      %v918 = vadd.f32 %v858, %v917
      %919 = vmatmul.f32.gmra.mxu0 %v880
      %v920 = vpop.f32.mrf.mxu0
      %v921 = vadd.f32 %v858, %v920
      %922 = vmatmul.f32.gmra.mxu0 %v883
      %v923 = vpop.f32.mrf.mxu0
      %v924 = vadd.f32 %v858, %v923
      %925 = vdwg.mxu0
      %934 = vrot.lane.b32.xlu0 %v360, 4
      %v935 = vpop.permute.xlu0 %934
      %936 = vrot.lane.b32.xlu0 %v361, 4
      %v937 = vpop.permute.xlu0 %936
      %938 = vrot.lane.b32.xlu0 %v362, 4
      %v939 = vpop.permute.xlu0 %938
      %940 = vrot.lane.b32.xlu0 %v363, 4
      %v941 = vpop.permute.xlu0 %940
      %942 = vrot.lane.b32.xlu0 %v364, 4
      %v943 = vpop.permute.xlu0 %942
      %944 = vrot.lane.b32.xlu0 %v365, 4
      %v945 = vpop.permute.xlu0 %944
      %946 = vrot.lane.b32.xlu0 %v366, 4
      %v947 = vpop.permute.xlu0 %946
      %948 = vrot.lane.b32.xlu0 %v367, 4
      %v949 = vpop.permute.xlu0 %948
      %958 = vrot.lane.b32.xlu0 %v377, 8
      %v959 = vpop.permute.xlu0 %958
      %960 = vrot.lane.b32.xlu0 %v378, 8
      %v961 = vpop.permute.xlu0 %960
      %962 = vrot.lane.b32.xlu0 %v379, 8
      %v963 = vpop.permute.xlu0 %962
      %964 = vrot.lane.b32.xlu0 %v380, 8
      %v965 = vpop.permute.xlu0 %964
      %966 = vrot.lane.b32.xlu0 %v381, 8
      %v967 = vpop.permute.xlu0 %966
      %968 = vrot.lane.b32.xlu0 %v382, 8
      %v969 = vpop.permute.xlu0 %968
      %970 = vrot.lane.b32.xlu0 %v383, 8
      %v971 = vpop.permute.xlu0 %970
      %972 = vrot.lane.b32.xlu0 %v384, 8
      %v973 = vpop.permute.xlu0 %972
      %990 = vrot.lane.b32.xlu0 %v385, 12
      %v991 = vpop.permute.xlu0 %990
      %992 = vrot.lane.b32.xlu0 %v386, 12
      %v993 = vpop.permute.xlu0 %992
      %994 = vrot.lane.b32.xlu0 %v387, 12
      %v995 = vpop.permute.xlu0 %994
      %996 = vrot.lane.b32.xlu0 %v388, 12
      %v997 = vpop.permute.xlu0 %996
      %998 = vrot.lane.b32.xlu0 %v389, 12
      %v999 = vpop.permute.xlu0 %998
      %1000 = vrot.lane.b32.xlu0 %v390, 12
      %v1001 = vpop.permute.xlu0 %1000
      %1002 = vrot.lane.b32.xlu0 %v391, 12
      %v1003 = vpop.permute.xlu0 %1002
      %1004 = vrot.lane.b32.xlu0 %v392, 12
      %v1005 = vpop.permute.xlu0 %1004
      %1014 = vrot.lane.b32.xlu0 %v426, 16
      %v1015 = vpop.permute.xlu0 %1014
      %1016 = vrot.lane.b32.xlu0 %v427, 16
      %v1017 = vpop.permute.xlu0 %1016
      %1018 = vrot.lane.b32.xlu0 %v428, 16
      %v1019 = vpop.permute.xlu0 %1018
      %1020 = vrot.lane.b32.xlu0 %v429, 16
      %v1021 = vpop.permute.xlu0 %1020
      %1022 = vrot.lane.b32.xlu0 %v430, 16
      %v1023 = vpop.permute.xlu0 %1022
      %1024 = vrot.lane.b32.xlu0 %v431, 16
      %v1025 = vpop.permute.xlu0 %1024
      %1026 = vrot.lane.b32.xlu0 %v432, 16
      %v1027 = vpop.permute.xlu0 %1026
      %1028 = vrot.lane.b32.xlu0 %v433, 16
      %v1029 = vpop.permute.xlu0 %1028
      %1046 = vrot.lane.b32.xlu0 %v434, 20
      %v1047 = vpop.permute.xlu0 %1046
      %1048 = vrot.lane.b32.xlu0 %v435, 20
      %v1049 = vpop.permute.xlu0 %1048
      %1050 = vrot.lane.b32.xlu0 %v436, 20
      %v1051 = vpop.permute.xlu0 %1050
      %1052 = vrot.lane.b32.xlu0 %v437, 20
      %v1053 = vpop.permute.xlu0 %1052
      %1054 = vrot.lane.b32.xlu0 %v438, 20
      %v1055 = vpop.permute.xlu0 %1054
      %1056 = vrot.lane.b32.xlu0 %v439, 20
      %v1057 = vpop.permute.xlu0 %1056
      %1058 = vrot.lane.b32.xlu0 %v440, 20
      %v1059 = vpop.permute.xlu0 %1058
      %1060 = vrot.lane.b32.xlu0 %v441, 20
      %v1061 = vpop.permute.xlu0 %1060
      %1070 = vrot.lane.b32.xlu0 %v451, 24
      %v1071 = vpop.permute.xlu0 %1070
      %1072 = vrot.lane.b32.xlu0 %v452, 24
      %v1073 = vpop.permute.xlu0 %1072
      %1074 = vrot.lane.b32.xlu0 %v453, 24
      %v1075 = vpop.permute.xlu0 %1074
      %1076 = vrot.lane.b32.xlu0 %v454, 24
      %v1077 = vpop.permute.xlu0 %1076
      %1078 = vrot.lane.b32.xlu0 %v455, 24
      %v1079 = vpop.permute.xlu0 %1078
      %1080 = vrot.lane.b32.xlu0 %v456, 24
      %v1081 = vpop.permute.xlu0 %1080
      %1082 = vrot.lane.b32.xlu0 %v457, 24
      %v1083 = vpop.permute.xlu0 %1082
      %1084 = vrot.lane.b32.xlu0 %v458, 24
      %v1085 = vpop.permute.xlu0 %1084
      %1102 = vrot.lane.b32.xlu0 %v459, 28
      %v1103 = vpop.permute.xlu0 %1102
      %1104 = vrot.lane.b32.xlu0 %v460, 28
      %v1105 = vpop.permute.xlu0 %1104
      %1106 = vrot.lane.b32.xlu0 %v461, 28
      %v1107 = vpop.permute.xlu0 %1106
      %1108 = vrot.lane.b32.xlu0 %v462, 28
      %v1109 = vpop.permute.xlu0 %1108
      %1110 = vrot.lane.b32.xlu0 %v463, 28
      %v1111 = vpop.permute.xlu0 %1110
      %1112 = vrot.lane.b32.xlu0 %v464, 28
      %v1113 = vpop.permute.xlu0 %1112
      %1114 = vrot.lane.b32.xlu0 %v465, 28
      %v1115 = vpop.permute.xlu0 %1114
      %1116 = vrot.lane.b32.xlu0 %v466, 28
      %v1117 = vpop.permute.xlu0 %1116
      %v1126 = vsel %vm790, %v352, %v935
      %v1127 = vsel %vm790, %v353, %v937
      %v1128 = vsel %vm790, %v354, %v939
      %v1129 = vsel %vm790, %v355, %v941
      %v1130 = vsel %vm790, %v356, %v943
      %v1131 = vsel %vm790, %v357, %v945
      %v1132 = vsel %vm790, %v358, %v947
      %v1133 = vsel %vm790, %v359, %v949
      %v1134 = vsel %vm799, %v1126, %v959
      %v1135 = vsel %vm799, %v1127, %v961
      %v1136 = vsel %vm799, %v1128, %v963
      %v1137 = vsel %vm799, %v1129, %v965
      %v1138 = vsel %vm799, %v1130, %v967
      %v1139 = vsel %vm799, %v1131, %v969
      %v1140 = vsel %vm799, %v1132, %v971
      %v1141 = vsel %vm799, %v1133, %v973
      %v1142 = vsel %vm808, %v1134, %v991
      %v1143 = vsel %vm808, %v1135, %v993
      %v1144 = vsel %vm808, %v1136, %v995
      %v1145 = vsel %vm808, %v1137, %v997
      %v1146 = vsel %vm808, %v1138, %v999
      %v1147 = vsel %vm808, %v1139, %v1001
      %v1148 = vsel %vm808, %v1140, %v1003
      %v1149 = vsel %vm808, %v1141, %v1005
      %v1150 = vsel %vm817, %v1142, %v1015
      %v1151 = vsel %vm817, %v1143, %v1017
      %v1152 = vsel %vm817, %v1144, %v1019
      %v1153 = vsel %vm817, %v1145, %v1021
      %v1154 = vsel %vm817, %v1146, %v1023
      %v1155 = vsel %vm817, %v1147, %v1025
      %v1156 = vsel %vm817, %v1148, %v1027
      %v1157 = vsel %vm817, %v1149, %v1029
      %v1158 = vsel %vm826, %v1150, %v1047
      %v1159 = vsel %vm826, %v1151, %v1049
      %v1160 = vsel %vm826, %v1152, %v1051
      %v1161 = vsel %vm826, %v1153, %v1053
      %v1162 = vsel %vm826, %v1154, %v1055
      %v1163 = vsel %vm826, %v1155, %v1057
      %v1164 = vsel %vm826, %v1156, %v1059
      %v1165 = vsel %vm826, %v1157, %v1061
      %v1166 = vsel %vm835, %v1158, %v1071
      %v1167 = vsel %vm835, %v1159, %v1073
      %v1168 = vsel %vm835, %v1160, %v1075
      %v1169 = vsel %vm835, %v1161, %v1077
      %v1170 = vsel %vm835, %v1162, %v1079
      %v1171 = vsel %vm835, %v1163, %v1081
      %v1172 = vsel %vm835, %v1164, %v1083
      %v1173 = vsel %vm835, %v1165, %v1085
      %v1174 = vsel %vm844, %v1166, %v1103
      %v1175 = vsel %vm844, %v1167, %v1105
      %v1176 = vsel %vm844, %v1168, %v1107
      %v1177 = vsel %vm844, %v1169, %v1109
      %v1178 = vsel %vm844, %v1170, %v1111
      %v1179 = vsel %vm844, %v1171, %v1113
      %v1180 = vsel %vm844, %v1172, %v1115
      %v1181 = vsel %vm844, %v1173, %v1117
      %s1182 = scalar_lea.vmem %s3, 32
      %v1183 = vld [vmem:[%s1182] sm:$0xff]
      %v1184 = vld [vmem:[%s1182 + $0x8] sm:$0xff]
      %v1185 = vld [vmem:[%s1182 + $0x10] sm:$0xff]
      %v1186 = vld [vmem:[%s1182 + $0x18] sm:$0xff]
      %v1188 = vsel %vm860, %v1174, 0
      %v1191 = vsel %vm860, %v1175, 0
      %v1194 = vsel %vm860, %v1176, 0
      %v1197 = vsel %vm860, %v1177, 0
      %v1200 = vsel %vm860, %v1178, 0
      %v1203 = vsel %vm860, %v1179, 0
      %v1206 = vsel %vm860, %v1180, 0
      %v1209 = vsel %vm860, %v1181, 0
      %1211 = vmatpush.msra.mxu0 0.0
      %1212 = vmatpush.msra.mxu0 0.0
      %1213 = vmatpush.msra.mxu0 0.0
      %1214 = vmatpush.msra.mxu0 0.0
      %1215 = vmatpush.msra.mxu0 0.0
      %1216 = vmatpush.msra.mxu0 0.0
      %1217 = vmatpush.msra.mxu0 0.0
      %1218 = vmatpush.msra.mxu0 0.0
      %1219 = vmatpush.msra.mxu0 0.0
      %1220 = vmatpush.msra.mxu0 0.0
      %1221 = vmatpush.msra.mxu0 0.0
      %1222 = vmatpush.msra.mxu0 0.0
      %1223 = vmatpush.msra.mxu0 %v1186
      %1224 = vmatpush.msra.mxu0 %v1185
      %1225 = vmatpush.msra.mxu0 %v1184
      %1226 = vmatpush.msra.mxu0 %v1183
      %1227 = vmatmul.f32.gmra.mxu0 %v1188
      %v1228 = vpop.f32.mrf.mxu0
      %v1229 = vadd.f32 %v858, %v1228
      %1230 = vmatmul.f32.gmra.mxu0 %v1191
      %v1231 = vpop.f32.mrf.mxu0
      %v1232 = vadd.f32 %v858, %v1231
      %1233 = vmatmul.f32.gmra.mxu0 %v1194
      %v1234 = vpop.f32.mrf.mxu0
      %v1235 = vadd.f32 %v858, %v1234
      %1236 = vmatmul.f32.gmra.mxu0 %v1197
      %v1237 = vpop.f32.mrf.mxu0
      %v1238 = vadd.f32 %v858, %v1237
      %1239 = vmatmul.f32.gmra.mxu0 %v1200
      %v1240 = vpop.f32.mrf.mxu0
      %v1241 = vadd.f32 %v858, %v1240
      %1242 = vmatmul.f32.gmra.mxu0 %v1203
      %v1243 = vpop.f32.mrf.mxu0
      %v1244 = vadd.f32 %v858, %v1243
      %1245 = vmatmul.f32.gmra.mxu0 %v1206
      %v1246 = vpop.f32.mrf.mxu0
      %v1247 = vadd.f32 %v858, %v1246
      %1248 = vmatmul.f32.gmra.mxu0 %v1209
      %v1249 = vpop.f32.mrf.mxu0
      %v1250 = vadd.f32 %v858, %v1249
      %1251 = vdwg.mxu0
      %1260 = vrot.lane.b32.xlu0 %v1229, 4
      %v1261 = vpop.permute.xlu0 %1260
      %1262 = vrot.lane.b32.xlu0 %v1232, 4
      %v1263 = vpop.permute.xlu0 %1262
      %1264 = vrot.lane.b32.xlu0 %v1235, 4
      %v1265 = vpop.permute.xlu0 %1264
      %1266 = vrot.lane.b32.xlu0 %v1238, 4
      %v1267 = vpop.permute.xlu0 %1266
      %1268 = vrot.lane.b32.xlu0 %v1241, 4
      %v1269 = vpop.permute.xlu0 %1268
      %1270 = vrot.lane.b32.xlu0 %v1244, 4
      %v1271 = vpop.permute.xlu0 %1270
      %1272 = vrot.lane.b32.xlu0 %v1247, 4
      %v1273 = vpop.permute.xlu0 %1272
      %1274 = vrot.lane.b32.xlu0 %v1250, 4
      %v1275 = vpop.permute.xlu0 %1274
      %v1284 = vsel %vm790, %v903, %v1261
      %v1285 = vsel %vm790, %v906, %v1263
      %v1286 = vsel %vm790, %v909, %v1265
      %v1287 = vsel %vm790, %v912, %v1267
      %v1288 = vsel %vm790, %v915, %v1269
      %v1289 = vsel %vm790, %v918, %v1271
      %v1290 = vsel %vm790, %v921, %v1273
      %v1291 = vsel %vm790, %v924, %v1275
      %1292 = vst.msk [vmem:[%s342] sm:$0xff] %vm799, %v1284
      %1293 = vst.msk [vmem:[%s342 + $0x10] sm:$0xff] %vm799, %v1285
      %1294 = vst.msk [vmem:[%s342 + $0x20] sm:$0xff] %vm799, %v1286
      %1295 = vst.msk [vmem:[%s342 + $0x30] sm:$0xff] %vm799, %v1287
      %1296 = vst.msk [vmem:[%s342 + $0x40] sm:$0xff] %vm799, %v1288
      %1297 = vst.msk [vmem:[%s342 + $0x50] sm:$0xff] %vm799, %v1289
      %1298 = vst.msk [vmem:[%s342 + $0x60] sm:$0xff] %vm799, %v1290
      %1299 = vst.msk [vmem:[%s342 + $0x70] sm:$0xff] %vm799, %v1291
      %1300 = vrot.lane.b32.xlu0 %v377, 4
      %v1301 = vpop.permute.xlu0 %1300
      %1302 = vrot.lane.b32.xlu0 %v378, 4
      %v1303 = vpop.permute.xlu0 %1302
      %1304 = vrot.lane.b32.xlu0 %v379, 4
      %v1305 = vpop.permute.xlu0 %1304
      %1306 = vrot.lane.b32.xlu0 %v380, 4
      %v1307 = vpop.permute.xlu0 %1306
      %1308 = vrot.lane.b32.xlu0 %v381, 4
      %v1309 = vpop.permute.xlu0 %1308
      %1310 = vrot.lane.b32.xlu0 %v382, 4
      %v1311 = vpop.permute.xlu0 %1310
      %1312 = vrot.lane.b32.xlu0 %v383, 4
      %v1313 = vpop.permute.xlu0 %1312
      %1314 = vrot.lane.b32.xlu0 %v384, 4
      %v1315 = vpop.permute.xlu0 %1314
      %1332 = vrot.lane.b32.xlu0 %v394, 8
      %v1333 = vpop.permute.xlu0 %1332
      %1334 = vrot.lane.b32.xlu0 %v395, 8
      %v1335 = vpop.permute.xlu0 %1334
      %1336 = vrot.lane.b32.xlu0 %v396, 8
      %v1337 = vpop.permute.xlu0 %1336
      %1338 = vrot.lane.b32.xlu0 %v397, 8
      %v1339 = vpop.permute.xlu0 %1338
      %1340 = vrot.lane.b32.xlu0 %v398, 8
      %v1341 = vpop.permute.xlu0 %1340
      %1342 = vrot.lane.b32.xlu0 %v399, 8
      %v1343 = vpop.permute.xlu0 %1342
      %1344 = vrot.lane.b32.xlu0 %v400, 8
      %v1345 = vpop.permute.xlu0 %1344
      %1346 = vrot.lane.b32.xlu0 %v401, 8
      %v1347 = vpop.permute.xlu0 %1346
      %1364 = vrot.lane.b32.xlu0 %v402, 12
      %v1365 = vpop.permute.xlu0 %1364
      %1366 = vrot.lane.b32.xlu0 %v403, 12
      %v1367 = vpop.permute.xlu0 %1366
      %1368 = vrot.lane.b32.xlu0 %v404, 12
      %v1369 = vpop.permute.xlu0 %1368
      %1370 = vrot.lane.b32.xlu0 %v405, 12
      %v1371 = vpop.permute.xlu0 %1370
      %1372 = vrot.lane.b32.xlu0 %v406, 12
      %v1373 = vpop.permute.xlu0 %1372
      %1374 = vrot.lane.b32.xlu0 %v407, 12
      %v1375 = vpop.permute.xlu0 %1374
      %1376 = vrot.lane.b32.xlu0 %v408, 12
      %v1377 = vpop.permute.xlu0 %1376
      %1378 = vrot.lane.b32.xlu0 %v409, 12
      %v1379 = vpop.permute.xlu0 %1378
      %1388 = vrot.lane.b32.xlu0 %v443, 16
      %v1389 = vpop.permute.xlu0 %1388
      %1390 = vrot.lane.b32.xlu0 %v444, 16
      %v1391 = vpop.permute.xlu0 %1390
      %1392 = vrot.lane.b32.xlu0 %v445, 16
      %v1393 = vpop.permute.xlu0 %1392
      %1394 = vrot.lane.b32.xlu0 %v446, 16
      %v1395 = vpop.permute.xlu0 %1394
      %1396 = vrot.lane.b32.xlu0 %v447, 16
      %v1397 = vpop.permute.xlu0 %1396
      %1398 = vrot.lane.b32.xlu0 %v448, 16
      %v1399 = vpop.permute.xlu0 %1398
      %1400 = vrot.lane.b32.xlu0 %v449, 16
      %v1401 = vpop.permute.xlu0 %1400
      %1402 = vrot.lane.b32.xlu0 %v450, 16
      %v1403 = vpop.permute.xlu0 %1402
      %1412 = vrot.lane.b32.xlu0 %v451, 20
      %v1413 = vpop.permute.xlu0 %1412
      %1414 = vrot.lane.b32.xlu0 %v452, 20
      %v1415 = vpop.permute.xlu0 %1414
      %1416 = vrot.lane.b32.xlu0 %v453, 20
      %v1417 = vpop.permute.xlu0 %1416
      %1418 = vrot.lane.b32.xlu0 %v454, 20
      %v1419 = vpop.permute.xlu0 %1418
      %1420 = vrot.lane.b32.xlu0 %v455, 20
      %v1421 = vpop.permute.xlu0 %1420
      %1422 = vrot.lane.b32.xlu0 %v456, 20
      %v1423 = vpop.permute.xlu0 %1422
      %1424 = vrot.lane.b32.xlu0 %v457, 20
      %v1425 = vpop.permute.xlu0 %1424
      %1426 = vrot.lane.b32.xlu0 %v458, 20
      %v1427 = vpop.permute.xlu0 %1426
      %1444 = vrot.lane.b32.xlu0 %v468, 24
      %v1445 = vpop.permute.xlu0 %1444
      %1446 = vrot.lane.b32.xlu0 %v469, 24
      %v1447 = vpop.permute.xlu0 %1446
      %1448 = vrot.lane.b32.xlu0 %v470, 24
      %v1449 = vpop.permute.xlu0 %1448
      %1450 = vrot.lane.b32.xlu0 %v471, 24
      %v1451 = vpop.permute.xlu0 %1450
      %1452 = vrot.lane.b32.xlu0 %v472, 24
      %v1453 = vpop.permute.xlu0 %1452
      %1454 = vrot.lane.b32.xlu0 %v473, 24
      %v1455 = vpop.permute.xlu0 %1454
      %1456 = vrot.lane.b32.xlu0 %v474, 24
      %v1457 = vpop.permute.xlu0 %1456
      %1458 = vrot.lane.b32.xlu0 %v475, 24
      %v1459 = vpop.permute.xlu0 %1458
      %1476 = vrot.lane.b32.xlu0 %v476, 28
      %v1477 = vpop.permute.xlu0 %1476
      %1478 = vrot.lane.b32.xlu0 %v477, 28
      %v1479 = vpop.permute.xlu0 %1478
      %1480 = vrot.lane.b32.xlu0 %v478, 28
      %v1481 = vpop.permute.xlu0 %1480
      %1482 = vrot.lane.b32.xlu0 %v479, 28
      %v1483 = vpop.permute.xlu0 %1482
      %1484 = vrot.lane.b32.xlu0 %v480, 28
      %v1485 = vpop.permute.xlu0 %1484
      %1486 = vrot.lane.b32.xlu0 %v481, 28
      %v1487 = vpop.permute.xlu0 %1486
      %1488 = vrot.lane.b32.xlu0 %v482, 28
      %v1489 = vpop.permute.xlu0 %1488
      %1490 = vrot.lane.b32.xlu0 %v483, 28
      %v1491 = vpop.permute.xlu0 %1490
      %v1500 = vsel %vm790, %v369, %v1301
      %v1501 = vsel %vm790, %v370, %v1303
      %v1502 = vsel %vm790, %v371, %v1305
      %v1503 = vsel %vm790, %v372, %v1307
      %v1504 = vsel %vm790, %v373, %v1309
      %v1505 = vsel %vm790, %v374, %v1311
      %v1506 = vsel %vm790, %v375, %v1313
      %v1507 = vsel %vm790, %v376, %v1315
      %v1508 = vsel %vm799, %v1500, %v1333
      %v1509 = vsel %vm799, %v1501, %v1335
      %v1510 = vsel %vm799, %v1502, %v1337
      %v1511 = vsel %vm799, %v1503, %v1339
      %v1512 = vsel %vm799, %v1504, %v1341
      %v1513 = vsel %vm799, %v1505, %v1343
      %v1514 = vsel %vm799, %v1506, %v1345
      %v1515 = vsel %vm799, %v1507, %v1347
      %v1516 = vsel %vm808, %v1508, %v1365
      %v1517 = vsel %vm808, %v1509, %v1367
      %v1518 = vsel %vm808, %v1510, %v1369
      %v1519 = vsel %vm808, %v1511, %v1371
      %v1520 = vsel %vm808, %v1512, %v1373
      %v1521 = vsel %vm808, %v1513, %v1375
      %v1522 = vsel %vm808, %v1514, %v1377
      %v1523 = vsel %vm808, %v1515, %v1379
      %v1524 = vsel %vm817, %v1516, %v1389
      %v1525 = vsel %vm817, %v1517, %v1391
      %v1526 = vsel %vm817, %v1518, %v1393
      %v1527 = vsel %vm817, %v1519, %v1395
      %v1528 = vsel %vm817, %v1520, %v1397
      %v1529 = vsel %vm817, %v1521, %v1399
      %v1530 = vsel %vm817, %v1522, %v1401
      %v1531 = vsel %vm817, %v1523, %v1403
      %v1532 = vsel %vm826, %v1524, %v1413
      %v1533 = vsel %vm826, %v1525, %v1415
      %v1534 = vsel %vm826, %v1526, %v1417
      %v1535 = vsel %vm826, %v1527, %v1419
      %v1536 = vsel %vm826, %v1528, %v1421
      %v1537 = vsel %vm826, %v1529, %v1423
      %v1538 = vsel %vm826, %v1530, %v1425
      %v1539 = vsel %vm826, %v1531, %v1427
      %v1540 = vsel %vm835, %v1532, %v1445
      %v1541 = vsel %vm835, %v1533, %v1447
      %v1542 = vsel %vm835, %v1534, %v1449
      %v1543 = vsel %vm835, %v1535, %v1451
      %v1544 = vsel %vm835, %v1536, %v1453
      %v1545 = vsel %vm835, %v1537, %v1455
      %v1546 = vsel %vm835, %v1538, %v1457
      %v1547 = vsel %vm835, %v1539, %v1459
      %v1548 = vsel %vm844, %v1540, %v1477
      %v1549 = vsel %vm844, %v1541, %v1479
      %v1550 = vsel %vm844, %v1542, %v1481
      %v1551 = vsel %vm844, %v1543, %v1483
      %v1552 = vsel %vm844, %v1544, %v1485
      %v1553 = vsel %vm844, %v1545, %v1487
      %v1554 = vsel %vm844, %v1546, %v1489
      %v1555 = vsel %vm844, %v1547, %v1491
      %s1556 = scalar_lea.vmem %s3, 64
      %v1557 = vld [vmem:[%s1556] sm:$0xff]
      %v1558 = vld [vmem:[%s1556 + $0x8] sm:$0xff]
      %v1559 = vld [vmem:[%s1556 + $0x10] sm:$0xff]
      %v1560 = vld [vmem:[%s1556 + $0x18] sm:$0xff]
      %v1562 = vsel %vm860, %v1548, 0
      %v1565 = vsel %vm860, %v1549, 0
      %v1568 = vsel %vm860, %v1550, 0
      %v1571 = vsel %vm860, %v1551, 0
      %v1574 = vsel %vm860, %v1552, 0
      %v1577 = vsel %vm860, %v1553, 0
      %v1580 = vsel %vm860, %v1554, 0
      %v1583 = vsel %vm860, %v1555, 0
      %1585 = vmatpush.msra.mxu0 0.0
      %1586 = vmatpush.msra.mxu0 0.0
      %1587 = vmatpush.msra.mxu0 0.0
      %1588 = vmatpush.msra.mxu0 0.0
      %1589 = vmatpush.msra.mxu0 0.0
      %1590 = vmatpush.msra.mxu0 0.0
      %1591 = vmatpush.msra.mxu0 0.0
      %1592 = vmatpush.msra.mxu0 0.0
      %1593 = vmatpush.msra.mxu0 0.0
      %1594 = vmatpush.msra.mxu0 0.0
      %1595 = vmatpush.msra.mxu0 0.0
      %1596 = vmatpush.msra.mxu0 0.0
      %1597 = vmatpush.msra.mxu0 %v1560
      %1598 = vmatpush.msra.mxu0 %v1559
      %1599 = vmatpush.msra.mxu0 %v1558
      %1600 = vmatpush.msra.mxu0 %v1557
      %1601 = vmatmul.f32.gmra.mxu0 %v1562
      %v1602 = vpop.f32.mrf.mxu0
      %v1603 = vadd.f32 %v858, %v1602
      %1604 = vmatmul.f32.gmra.mxu0 %v1565
      %v1605 = vpop.f32.mrf.mxu0
      %v1606 = vadd.f32 %v858, %v1605
      %1607 = vmatmul.f32.gmra.mxu0 %v1568
      %v1608 = vpop.f32.mrf.mxu0
      %v1609 = vadd.f32 %v858, %v1608
      %1610 = vmatmul.f32.gmra.mxu0 %v1571
      %v1611 = vpop.f32.mrf.mxu0
      %v1612 = vadd.f32 %v858, %v1611
      %1613 = vmatmul.f32.gmra.mxu0 %v1574
      %v1614 = vpop.f32.mrf.mxu0
      %v1615 = vadd.f32 %v858, %v1614
      %1616 = vmatmul.f32.gmra.mxu0 %v1577
      %v1617 = vpop.f32.mrf.mxu0
      %v1618 = vadd.f32 %v858, %v1617
      %1619 = vmatmul.f32.gmra.mxu0 %v1580
      %v1620 = vpop.f32.mrf.mxu0
      %v1621 = vadd.f32 %v858, %v1620
      %1622 = vmatmul.f32.gmra.mxu0 %v1583
      %v1623 = vpop.f32.mrf.mxu0
      %v1624 = vadd.f32 %v858, %v1623
      %1625 = vdwg.mxu0
      %1626 = vrot.lane.b32.xlu0 %v385, 4
      %v1627 = vpop.permute.xlu0 %1626
      %1628 = vrot.lane.b32.xlu0 %v386, 4
      %v1629 = vpop.permute.xlu0 %1628
      %1630 = vrot.lane.b32.xlu0 %v387, 4
      %v1631 = vpop.permute.xlu0 %1630
      %1632 = vrot.lane.b32.xlu0 %v388, 4
      %v1633 = vpop.permute.xlu0 %1632
      %1634 = vrot.lane.b32.xlu0 %v389, 4
      %v1635 = vpop.permute.xlu0 %1634
      %1636 = vrot.lane.b32.xlu0 %v390, 4
      %v1637 = vpop.permute.xlu0 %1636
      %1638 = vrot.lane.b32.xlu0 %v391, 4
      %v1639 = vpop.permute.xlu0 %1638
      %1640 = vrot.lane.b32.xlu0 %v392, 4
      %v1641 = vpop.permute.xlu0 %1640
      %1650 = vrot.lane.b32.xlu0 %v402, 8
      %v1651 = vpop.permute.xlu0 %1650
      %1652 = vrot.lane.b32.xlu0 %v403, 8
      %v1653 = vpop.permute.xlu0 %1652
      %1654 = vrot.lane.b32.xlu0 %v404, 8
      %v1655 = vpop.permute.xlu0 %1654
      %1656 = vrot.lane.b32.xlu0 %v405, 8
      %v1657 = vpop.permute.xlu0 %1656
      %1658 = vrot.lane.b32.xlu0 %v406, 8
      %v1659 = vpop.permute.xlu0 %1658
      %1660 = vrot.lane.b32.xlu0 %v407, 8
      %v1661 = vpop.permute.xlu0 %1660
      %1662 = vrot.lane.b32.xlu0 %v408, 8
      %v1663 = vpop.permute.xlu0 %1662
      %1664 = vrot.lane.b32.xlu0 %v409, 8
      %v1665 = vpop.permute.xlu0 %1664
      %1682 = vrot.lane.b32.xlu0 %v410, 12
      %v1683 = vpop.permute.xlu0 %1682
      %1684 = vrot.lane.b32.xlu0 %v411, 12
      %v1685 = vpop.permute.xlu0 %1684
      %1686 = vrot.lane.b32.xlu0 %v412, 12
      %v1687 = vpop.permute.xlu0 %1686
      %1688 = vrot.lane.b32.xlu0 %v413, 12
      %v1689 = vpop.permute.xlu0 %1688
      %1690 = vrot.lane.b32.xlu0 %v414, 12
      %v1691 = vpop.permute.xlu0 %1690
      %1692 = vrot.lane.b32.xlu0 %v415, 12
      %v1693 = vpop.permute.xlu0 %1692
      %1694 = vrot.lane.b32.xlu0 %v416, 12
      %v1695 = vpop.permute.xlu0 %1694
      %1696 = vrot.lane.b32.xlu0 %v417, 12
      %v1697 = vpop.permute.xlu0 %1696
      %1706 = vrot.lane.b32.xlu0 %v451, 16
      %v1707 = vpop.permute.xlu0 %1706
      %1708 = vrot.lane.b32.xlu0 %v452, 16
      %v1709 = vpop.permute.xlu0 %1708
      %1710 = vrot.lane.b32.xlu0 %v453, 16
      %v1711 = vpop.permute.xlu0 %1710
      %1712 = vrot.lane.b32.xlu0 %v454, 16
      %v1713 = vpop.permute.xlu0 %1712
      %1714 = vrot.lane.b32.xlu0 %v455, 16
      %v1715 = vpop.permute.xlu0 %1714
      %1716 = vrot.lane.b32.xlu0 %v456, 16
      %v1717 = vpop.permute.xlu0 %1716
      %1718 = vrot.lane.b32.xlu0 %v457, 16
      %v1719 = vpop.permute.xlu0 %1718
      %1720 = vrot.lane.b32.xlu0 %v458, 16
      %v1721 = vpop.permute.xlu0 %1720
      %1730 = vrot.lane.b32.xlu0 %v459, 20
      %v1731 = vpop.permute.xlu0 %1730
      %1732 = vrot.lane.b32.xlu0 %v460, 20
      %v1733 = vpop.permute.xlu0 %1732
      %1734 = vrot.lane.b32.xlu0 %v461, 20
      %v1735 = vpop.permute.xlu0 %1734
      %1736 = vrot.lane.b32.xlu0 %v462, 20
      %v1737 = vpop.permute.xlu0 %1736
      %1738 = vrot.lane.b32.xlu0 %v463, 20
      %v1739 = vpop.permute.xlu0 %1738
      %1740 = vrot.lane.b32.xlu0 %v464, 20
      %v1741 = vpop.permute.xlu0 %1740
      %1742 = vrot.lane.b32.xlu0 %v465, 20
      %v1743 = vpop.permute.xlu0 %1742
      %1744 = vrot.lane.b32.xlu0 %v466, 20
      %v1745 = vpop.permute.xlu0 %1744
      %1754 = vrot.lane.b32.xlu0 %v476, 24
      %v1755 = vpop.permute.xlu0 %1754
      %1756 = vrot.lane.b32.xlu0 %v477, 24
      %v1757 = vpop.permute.xlu0 %1756
      %1758 = vrot.lane.b32.xlu0 %v478, 24
      %v1759 = vpop.permute.xlu0 %1758
      %1760 = vrot.lane.b32.xlu0 %v479, 24
      %v1761 = vpop.permute.xlu0 %1760
      %1762 = vrot.lane.b32.xlu0 %v480, 24
      %v1763 = vpop.permute.xlu0 %1762
      %1764 = vrot.lane.b32.xlu0 %v481, 24
      %v1765 = vpop.permute.xlu0 %1764
      %1766 = vrot.lane.b32.xlu0 %v482, 24
      %v1767 = vpop.permute.xlu0 %1766
      %1768 = vrot.lane.b32.xlu0 %v483, 24
      %v1769 = vpop.permute.xlu0 %1768
      %1786 = vrot.lane.b32.xlu0 %v484, 28
      %v1787 = vpop.permute.xlu0 %1786
      %1788 = vrot.lane.b32.xlu0 %v485, 28
      %v1789 = vpop.permute.xlu0 %1788
      %1790 = vrot.lane.b32.xlu0 %v486, 28
      %v1791 = vpop.permute.xlu0 %1790
      %1792 = vrot.lane.b32.xlu0 %v487, 28
      %v1793 = vpop.permute.xlu0 %1792
      %1794 = vrot.lane.b32.xlu0 %v488, 28
      %v1795 = vpop.permute.xlu0 %1794
      %1796 = vrot.lane.b32.xlu0 %v489, 28
      %v1797 = vpop.permute.xlu0 %1796
      %1798 = vrot.lane.b32.xlu0 %v490, 28
      %v1799 = vpop.permute.xlu0 %1798
      %1800 = vrot.lane.b32.xlu0 %v491, 28
      %v1801 = vpop.permute.xlu0 %1800
      %v1810 = vsel %vm790, %v377, %v1627
      %v1811 = vsel %vm790, %v378, %v1629
      %v1812 = vsel %vm790, %v379, %v1631
      %v1813 = vsel %vm790, %v380, %v1633
      %v1814 = vsel %vm790, %v381, %v1635
      %v1815 = vsel %vm790, %v382, %v1637
      %v1816 = vsel %vm790, %v383, %v1639
      %v1817 = vsel %vm790, %v384, %v1641
      %v1818 = vsel %vm799, %v1810, %v1651
      %v1819 = vsel %vm799, %v1811, %v1653
      %v1820 = vsel %vm799, %v1812, %v1655
      %v1821 = vsel %vm799, %v1813, %v1657
      %v1822 = vsel %vm799, %v1814, %v1659
      %v1823 = vsel %vm799, %v1815, %v1661
      %v1824 = vsel %vm799, %v1816, %v1663
      %v1825 = vsel %vm799, %v1817, %v1665
      %v1826 = vsel %vm808, %v1818, %v1683
      %v1827 = vsel %vm808, %v1819, %v1685
      %v1828 = vsel %vm808, %v1820, %v1687
      %v1829 = vsel %vm808, %v1821, %v1689
      %v1830 = vsel %vm808, %v1822, %v1691
      %v1831 = vsel %vm808, %v1823, %v1693
      %v1832 = vsel %vm808, %v1824, %v1695
      %v1833 = vsel %vm808, %v1825, %v1697
      %v1834 = vsel %vm817, %v1826, %v1707
      %v1835 = vsel %vm817, %v1827, %v1709
      %v1836 = vsel %vm817, %v1828, %v1711
      %v1837 = vsel %vm817, %v1829, %v1713
      %v1838 = vsel %vm817, %v1830, %v1715
      %v1839 = vsel %vm817, %v1831, %v1717
      %v1840 = vsel %vm817, %v1832, %v1719
      %v1841 = vsel %vm817, %v1833, %v1721
      %v1842 = vsel %vm826, %v1834, %v1731
      %v1843 = vsel %vm826, %v1835, %v1733
      %v1844 = vsel %vm826, %v1836, %v1735
      %v1845 = vsel %vm826, %v1837, %v1737
      %v1846 = vsel %vm826, %v1838, %v1739
      %v1847 = vsel %vm826, %v1839, %v1741
      %v1848 = vsel %vm826, %v1840, %v1743
      %v1849 = vsel %vm826, %v1841, %v1745
      %v1850 = vsel %vm835, %v1842, %v1755
      %v1851 = vsel %vm835, %v1843, %v1757
      %v1852 = vsel %vm835, %v1844, %v1759
      %v1853 = vsel %vm835, %v1845, %v1761
      %v1854 = vsel %vm835, %v1846, %v1763
      %v1855 = vsel %vm835, %v1847, %v1765
      %v1856 = vsel %vm835, %v1848, %v1767
      %v1857 = vsel %vm835, %v1849, %v1769
      %v1858 = vsel %vm844, %v1850, %v1787
      %v1859 = vsel %vm844, %v1851, %v1789
      %v1860 = vsel %vm844, %v1852, %v1791
      %v1861 = vsel %vm844, %v1853, %v1793
      %v1862 = vsel %vm844, %v1854, %v1795
      %v1863 = vsel %vm844, %v1855, %v1797
      %v1864 = vsel %vm844, %v1856, %v1799
      %v1865 = vsel %vm844, %v1857, %v1801
      %s1866 = scalar_lea.vmem %s3, 96
      %v1867 = vld [vmem:[%s1866] sm:$0xff]
      %v1868 = vld [vmem:[%s1866 + $0x8] sm:$0xff]
      %v1869 = vld [vmem:[%s1866 + $0x10] sm:$0xff]
      %v1870 = vld [vmem:[%s1866 + $0x18] sm:$0xff]
      %v1872 = vsel %vm860, %v1858, 0
      %v1875 = vsel %vm860, %v1859, 0
      %v1878 = vsel %vm860, %v1860, 0
      %v1881 = vsel %vm860, %v1861, 0
      %v1884 = vsel %vm860, %v1862, 0
      %v1887 = vsel %vm860, %v1863, 0
      %v1890 = vsel %vm860, %v1864, 0
      %v1893 = vsel %vm860, %v1865, 0
      %1895 = vmatpush.msra.mxu0 0.0
      %1896 = vmatpush.msra.mxu0 0.0
      %1897 = vmatpush.msra.mxu0 0.0
      %1898 = vmatpush.msra.mxu0 0.0
      %1899 = vmatpush.msra.mxu0 0.0
      %1900 = vmatpush.msra.mxu0 0.0
      %1901 = vmatpush.msra.mxu0 0.0
      %1902 = vmatpush.msra.mxu0 0.0
      %1903 = vmatpush.msra.mxu0 0.0
      %1904 = vmatpush.msra.mxu0 0.0
      %1905 = vmatpush.msra.mxu0 0.0
      %1906 = vmatpush.msra.mxu0 0.0
      %1907 = vmatpush.msra.mxu0 %v1870
      %1908 = vmatpush.msra.mxu0 %v1869
      %1909 = vmatpush.msra.mxu0 %v1868
      %1910 = vmatpush.msra.mxu0 %v1867
      %1911 = vmatmul.f32.gmra.mxu0 %v1872
      %v1912 = vpop.f32.mrf.mxu0
      %v1913 = vadd.f32 %v858, %v1912
      %1914 = vmatmul.f32.gmra.mxu0 %v1875
      %v1915 = vpop.f32.mrf.mxu0
      %v1916 = vadd.f32 %v858, %v1915
      %1917 = vmatmul.f32.gmra.mxu0 %v1878
      %v1918 = vpop.f32.mrf.mxu0
      %v1919 = vadd.f32 %v858, %v1918
      %1920 = vmatmul.f32.gmra.mxu0 %v1881
      %v1921 = vpop.f32.mrf.mxu0
      %v1922 = vadd.f32 %v858, %v1921
      %1923 = vmatmul.f32.gmra.mxu0 %v1884
      %v1924 = vpop.f32.mrf.mxu0
      %v1925 = vadd.f32 %v858, %v1924
      %1926 = vmatmul.f32.gmra.mxu0 %v1887
      %v1927 = vpop.f32.mrf.mxu0
      %v1928 = vadd.f32 %v858, %v1927
      %1929 = vmatmul.f32.gmra.mxu0 %v1890
      %v1930 = vpop.f32.mrf.mxu0
      %v1931 = vadd.f32 %v858, %v1930
      %1932 = vmatmul.f32.gmra.mxu0 %v1893
      %v1933 = vpop.f32.mrf.mxu0
      %v1934 = vadd.f32 %v858, %v1933
      %1935 = vdwg.mxu0
      %1944 = vrot.lane.b32.xlu0 %v1913, 4
      %v1945 = vpop.permute.xlu0 %1944
      %1946 = vrot.lane.b32.xlu0 %v1916, 4
      %v1947 = vpop.permute.xlu0 %1946
      %1948 = vrot.lane.b32.xlu0 %v1919, 4
      %v1949 = vpop.permute.xlu0 %1948
      %1950 = vrot.lane.b32.xlu0 %v1922, 4
      %v1951 = vpop.permute.xlu0 %1950
      %1952 = vrot.lane.b32.xlu0 %v1925, 4
      %v1953 = vpop.permute.xlu0 %1952
      %1954 = vrot.lane.b32.xlu0 %v1928, 4
      %v1955 = vpop.permute.xlu0 %1954
      %1956 = vrot.lane.b32.xlu0 %v1931, 4
      %v1957 = vpop.permute.xlu0 %1956
      %1958 = vrot.lane.b32.xlu0 %v1934, 4
      %v1959 = vpop.permute.xlu0 %1958
      %v1968 = vsel %vm790, %v1603, %v1945
      %v1969 = vsel %vm790, %v1606, %v1947
      %v1970 = vsel %vm790, %v1609, %v1949
      %v1971 = vsel %vm790, %v1612, %v1951
      %v1972 = vsel %vm790, %v1615, %v1953
      %v1973 = vsel %vm790, %v1618, %v1955
      %v1974 = vsel %vm790, %v1621, %v1957
      %v1975 = vsel %vm790, %v1624, %v1959
      %s1976 = scalar_lea.vmem %s342, 8
      %1977 = vst.msk [vmem:[%s1976] sm:$0xff] %vm799, %v1968
      %1978 = vst.msk [vmem:[%s1976 + $0x10] sm:$0xff] %vm799, %v1969
      %1979 = vst.msk [vmem:[%s1976 + $0x20] sm:$0xff] %vm799, %v1970
      %1980 = vst.msk [vmem:[%s1976 + $0x30] sm:$0xff] %vm799, %v1971
      %1981 = vst.msk [vmem:[%s1976 + $0x40] sm:$0xff] %vm799, %v1972
      %1982 = vst.msk [vmem:[%s1976 + $0x50] sm:$0xff] %vm799, %v1973
      %1983 = vst.msk [vmem:[%s1976 + $0x60] sm:$0xff] %vm799, %v1974
      %1984 = vst.msk [vmem:[%s1976 + $0x70] sm:$0xff] %vm799, %v1975
      %1985 = vrot.lane.b32.xlu0 %v426, 4
      %v1986 = vpop.permute.xlu0 %1985
      %1987 = vrot.lane.b32.xlu0 %v427, 4
      %v1988 = vpop.permute.xlu0 %1987
      %1989 = vrot.lane.b32.xlu0 %v428, 4
      %v1990 = vpop.permute.xlu0 %1989
      %1991 = vrot.lane.b32.xlu0 %v429, 4
      %v1992 = vpop.permute.xlu0 %1991
      %1993 = vrot.lane.b32.xlu0 %v430, 4
      %v1994 = vpop.permute.xlu0 %1993
      %1995 = vrot.lane.b32.xlu0 %v431, 4
      %v1996 = vpop.permute.xlu0 %1995
      %1997 = vrot.lane.b32.xlu0 %v432, 4
      %v1998 = vpop.permute.xlu0 %1997
      %1999 = vrot.lane.b32.xlu0 %v433, 4
      %v2000 = vpop.permute.xlu0 %1999
      %2009 = vrot.lane.b32.xlu0 %v443, 8
      %v2010 = vpop.permute.xlu0 %2009
      %2011 = vrot.lane.b32.xlu0 %v444, 8
      %v2012 = vpop.permute.xlu0 %2011
      %2013 = vrot.lane.b32.xlu0 %v445, 8
      %v2014 = vpop.permute.xlu0 %2013
      %2015 = vrot.lane.b32.xlu0 %v446, 8
      %v2016 = vpop.permute.xlu0 %2015
      %2017 = vrot.lane.b32.xlu0 %v447, 8
      %v2018 = vpop.permute.xlu0 %2017
      %2019 = vrot.lane.b32.xlu0 %v448, 8
      %v2020 = vpop.permute.xlu0 %2019
      %2021 = vrot.lane.b32.xlu0 %v449, 8
      %v2022 = vpop.permute.xlu0 %2021
      %2023 = vrot.lane.b32.xlu0 %v450, 8
      %v2024 = vpop.permute.xlu0 %2023
      %2033 = vrot.lane.b32.xlu0 %v451, 12
      %v2034 = vpop.permute.xlu0 %2033
      %2035 = vrot.lane.b32.xlu0 %v452, 12
      %v2036 = vpop.permute.xlu0 %2035
      %2037 = vrot.lane.b32.xlu0 %v453, 12
      %v2038 = vpop.permute.xlu0 %2037
      %2039 = vrot.lane.b32.xlu0 %v454, 12
      %v2040 = vpop.permute.xlu0 %2039
      %2041 = vrot.lane.b32.xlu0 %v455, 12
      %v2042 = vpop.permute.xlu0 %2041
      %2043 = vrot.lane.b32.xlu0 %v456, 12
      %v2044 = vpop.permute.xlu0 %2043
      %2045 = vrot.lane.b32.xlu0 %v457, 12
      %v2046 = vpop.permute.xlu0 %2045
      %2047 = vrot.lane.b32.xlu0 %v458, 12
      %v2048 = vpop.permute.xlu0 %2047
      %2065 = vrot.lane.b32.xlu0 %v492, 16
      %v2066 = vpop.permute.xlu0 %2065
      %2067 = vrot.lane.b32.xlu0 %v493, 16
      %v2068 = vpop.permute.xlu0 %2067
      %2069 = vrot.lane.b32.xlu0 %v494, 16
      %v2070 = vpop.permute.xlu0 %2069
      %2071 = vrot.lane.b32.xlu0 %v495, 16
      %v2072 = vpop.permute.xlu0 %2071
      %2073 = vrot.lane.b32.xlu0 %v496, 16
      %v2074 = vpop.permute.xlu0 %2073
      %2075 = vrot.lane.b32.xlu0 %v497, 16
      %v2076 = vpop.permute.xlu0 %2075
      %2077 = vrot.lane.b32.xlu0 %v498, 16
      %v2078 = vpop.permute.xlu0 %2077
      %2079 = vrot.lane.b32.xlu0 %v499, 16
      %v2080 = vpop.permute.xlu0 %2079
      %2097 = vrot.lane.b32.xlu0 %v500, 20
      %v2098 = vpop.permute.xlu0 %2097
      %2099 = vrot.lane.b32.xlu0 %v501, 20
      %v2100 = vpop.permute.xlu0 %2099
      %2101 = vrot.lane.b32.xlu0 %v502, 20
      %v2102 = vpop.permute.xlu0 %2101
      %2103 = vrot.lane.b32.xlu0 %v503, 20
      %v2104 = vpop.permute.xlu0 %2103
      %2105 = vrot.lane.b32.xlu0 %v504, 20
      %v2106 = vpop.permute.xlu0 %2105
      %2107 = vrot.lane.b32.xlu0 %v505, 20
      %v2108 = vpop.permute.xlu0 %2107
      %2109 = vrot.lane.b32.xlu0 %v506, 20
      %v2110 = vpop.permute.xlu0 %2109
      %2111 = vrot.lane.b32.xlu0 %v507, 20
      %v2112 = vpop.permute.xlu0 %2111
      %2129 = vrot.lane.b32.xlu0 %v517, 24
      %v2130 = vpop.permute.xlu0 %2129
      %2131 = vrot.lane.b32.xlu0 %v518, 24
      %v2132 = vpop.permute.xlu0 %2131
      %2133 = vrot.lane.b32.xlu0 %v519, 24
      %v2134 = vpop.permute.xlu0 %2133
      %2135 = vrot.lane.b32.xlu0 %v520, 24
      %v2136 = vpop.permute.xlu0 %2135
      %2137 = vrot.lane.b32.xlu0 %v521, 24
      %v2138 = vpop.permute.xlu0 %2137
      %2139 = vrot.lane.b32.xlu0 %v522, 24
      %v2140 = vpop.permute.xlu0 %2139
      %2141 = vrot.lane.b32.xlu0 %v523, 24
      %v2142 = vpop.permute.xlu0 %2141
      %2143 = vrot.lane.b32.xlu0 %v524, 24
      %v2144 = vpop.permute.xlu0 %2143
      %2161 = vrot.lane.b32.xlu0 %v525, 28
      %v2162 = vpop.permute.xlu0 %2161
      %2163 = vrot.lane.b32.xlu0 %v526, 28
      %v2164 = vpop.permute.xlu0 %2163
      %2165 = vrot.lane.b32.xlu0 %v527, 28
      %v2166 = vpop.permute.xlu0 %2165
      %2167 = vrot.lane.b32.xlu0 %v528, 28
      %v2168 = vpop.permute.xlu0 %2167
      %2169 = vrot.lane.b32.xlu0 %v529, 28
      %v2170 = vpop.permute.xlu0 %2169
      %2171 = vrot.lane.b32.xlu0 %v530, 28
      %v2172 = vpop.permute.xlu0 %2171
      %2173 = vrot.lane.b32.xlu0 %v531, 28
      %v2174 = vpop.permute.xlu0 %2173
      %2175 = vrot.lane.b32.xlu0 %v532, 28
      %v2176 = vpop.permute.xlu0 %2175
      %v2185 = vsel %vm790, %v418, %v1986
      %v2186 = vsel %vm790, %v419, %v1988
      %v2187 = vsel %vm790, %v420, %v1990
      %v2188 = vsel %vm790, %v421, %v1992
      %v2189 = vsel %vm790, %v422, %v1994
      %v2190 = vsel %vm790, %v423, %v1996
      %v2191 = vsel %vm790, %v424, %v1998
      %v2192 = vsel %vm790, %v425, %v2000
      %v2193 = vsel %vm799, %v2185, %v2010
      %v2194 = vsel %vm799, %v2186, %v2012
      %v2195 = vsel %vm799, %v2187, %v2014
      %v2196 = vsel %vm799, %v2188, %v2016
      %v2197 = vsel %vm799, %v2189, %v2018
      %v2198 = vsel %vm799, %v2190, %v2020
      %v2199 = vsel %vm799, %v2191, %v2022
      %v2200 = vsel %vm799, %v2192, %v2024
      %v2201 = vsel %vm808, %v2193, %v2034
      %v2202 = vsel %vm808, %v2194, %v2036
      %v2203 = vsel %vm808, %v2195, %v2038
      %v2204 = vsel %vm808, %v2196, %v2040
      %v2205 = vsel %vm808, %v2197, %v2042
      %v2206 = vsel %vm808, %v2198, %v2044
      %v2207 = vsel %vm808, %v2199, %v2046
      %v2208 = vsel %vm808, %v2200, %v2048
      %v2209 = vsel %vm817, %v2201, %v2066
      %v2210 = vsel %vm817, %v2202, %v2068
      %v2211 = vsel %vm817, %v2203, %v2070
      %v2212 = vsel %vm817, %v2204, %v2072
      %v2213 = vsel %vm817, %v2205, %v2074
      %v2214 = vsel %vm817, %v2206, %v2076
      %v2215 = vsel %vm817, %v2207, %v2078
      %v2216 = vsel %vm817, %v2208, %v2080
      %v2217 = vsel %vm826, %v2209, %v2098
      %v2218 = vsel %vm826, %v2210, %v2100
      %v2219 = vsel %vm826, %v2211, %v2102
      %v2220 = vsel %vm826, %v2212, %v2104
      %v2221 = vsel %vm826, %v2213, %v2106
      %v2222 = vsel %vm826, %v2214, %v2108
      %v2223 = vsel %vm826, %v2215, %v2110
      %v2224 = vsel %vm826, %v2216, %v2112
      %v2225 = vsel %vm835, %v2217, %v2130
      %v2226 = vsel %vm835, %v2218, %v2132
      %v2227 = vsel %vm835, %v2219, %v2134
      %v2228 = vsel %vm835, %v2220, %v2136
      %v2229 = vsel %vm835, %v2221, %v2138
      %v2230 = vsel %vm835, %v2222, %v2140
      %v2231 = vsel %vm835, %v2223, %v2142
      %v2232 = vsel %vm835, %v2224, %v2144
      %v2233 = vsel %vm844, %v2225, %v2162
      %v2234 = vsel %vm844, %v2226, %v2164
      %v2235 = vsel %vm844, %v2227, %v2166
      %v2236 = vsel %vm844, %v2228, %v2168
      %v2237 = vsel %vm844, %v2229, %v2170
      %v2238 = vsel %vm844, %v2230, %v2172
      %v2239 = vsel %vm844, %v2231, %v2174
      %v2240 = vsel %vm844, %v2232, %v2176
      %s2241 = scalar_lea.vmem %s3, 128
      %v2242 = vld [vmem:[%s2241] sm:$0xff]
      %v2243 = vld [vmem:[%s2241 + $0x8] sm:$0xff]
      %v2244 = vld [vmem:[%s2241 + $0x10] sm:$0xff]
      %v2245 = vld [vmem:[%s2241 + $0x18] sm:$0xff]
      %v2247 = vsel %vm860, %v2233, 0
      %v2250 = vsel %vm860, %v2234, 0
      %v2253 = vsel %vm860, %v2235, 0
      %v2256 = vsel %vm860, %v2236, 0
      %v2259 = vsel %vm860, %v2237, 0
      %v2262 = vsel %vm860, %v2238, 0
      %v2265 = vsel %vm860, %v2239, 0
      %v2268 = vsel %vm860, %v2240, 0
      %2270 = vmatpush.msra.mxu0 0.0
      %2271 = vmatpush.msra.mxu0 0.0
      %2272 = vmatpush.msra.mxu0 0.0
      %2273 = vmatpush.msra.mxu0 0.0
      %2274 = vmatpush.msra.mxu0 0.0
      %2275 = vmatpush.msra.mxu0 0.0
      %2276 = vmatpush.msra.mxu0 0.0
      %2277 = vmatpush.msra.mxu0 0.0
      %2278 = vmatpush.msra.mxu0 0.0
      %2279 = vmatpush.msra.mxu0 0.0
      %2280 = vmatpush.msra.mxu0 0.0
      %2281 = vmatpush.msra.mxu0 0.0
      %2282 = vmatpush.msra.mxu0 %v2245
      %2283 = vmatpush.msra.mxu0 %v2244
      %2284 = vmatpush.msra.mxu0 %v2243
      %2285 = vmatpush.msra.mxu0 %v2242
      %2286 = vmatmul.f32.gmra.mxu0 %v2247
      %v2287 = vpop.f32.mrf.mxu0
      %v2288 = vadd.f32 %v858, %v2287
      %2289 = vmatmul.f32.gmra.mxu0 %v2250
      %v2290 = vpop.f32.mrf.mxu0
      %v2291 = vadd.f32 %v858, %v2290
      %2292 = vmatmul.f32.gmra.mxu0 %v2253
      %v2293 = vpop.f32.mrf.mxu0
      %v2294 = vadd.f32 %v858, %v2293
      %2295 = vmatmul.f32.gmra.mxu0 %v2256
      %v2296 = vpop.f32.mrf.mxu0
      %v2297 = vadd.f32 %v858, %v2296
      %2298 = vmatmul.f32.gmra.mxu0 %v2259
      %v2299 = vpop.f32.mrf.mxu0
      %v2300 = vadd.f32 %v858, %v2299
      %2301 = vmatmul.f32.gmra.mxu0 %v2262
      %v2302 = vpop.f32.mrf.mxu0
      %v2303 = vadd.f32 %v858, %v2302
      %2304 = vmatmul.f32.gmra.mxu0 %v2265
      %v2305 = vpop.f32.mrf.mxu0
      %v2306 = vadd.f32 %v858, %v2305
      %2307 = vmatmul.f32.gmra.mxu0 %v2268
      %v2308 = vpop.f32.mrf.mxu0
      %v2309 = vadd.f32 %v858, %v2308
      %2310 = vdwg.mxu0
      %2311 = vrot.lane.b32.xlu0 %v434, 4
      %v2312 = vpop.permute.xlu0 %2311
      %2313 = vrot.lane.b32.xlu0 %v435, 4
      %v2314 = vpop.permute.xlu0 %2313
      %2315 = vrot.lane.b32.xlu0 %v436, 4
      %v2316 = vpop.permute.xlu0 %2315
      %2317 = vrot.lane.b32.xlu0 %v437, 4
      %v2318 = vpop.permute.xlu0 %2317
      %2319 = vrot.lane.b32.xlu0 %v438, 4
      %v2320 = vpop.permute.xlu0 %2319
      %2321 = vrot.lane.b32.xlu0 %v439, 4
      %v2322 = vpop.permute.xlu0 %2321
      %2323 = vrot.lane.b32.xlu0 %v440, 4
      %v2324 = vpop.permute.xlu0 %2323
      %2325 = vrot.lane.b32.xlu0 %v441, 4
      %v2326 = vpop.permute.xlu0 %2325
      %2335 = vrot.lane.b32.xlu0 %v451, 8
      %v2336 = vpop.permute.xlu0 %2335
      %2337 = vrot.lane.b32.xlu0 %v452, 8
      %v2338 = vpop.permute.xlu0 %2337
      %2339 = vrot.lane.b32.xlu0 %v453, 8
      %v2340 = vpop.permute.xlu0 %2339
      %2341 = vrot.lane.b32.xlu0 %v454, 8
      %v2342 = vpop.permute.xlu0 %2341
      %2343 = vrot.lane.b32.xlu0 %v455, 8
      %v2344 = vpop.permute.xlu0 %2343
      %2345 = vrot.lane.b32.xlu0 %v456, 8
      %v2346 = vpop.permute.xlu0 %2345
      %2347 = vrot.lane.b32.xlu0 %v457, 8
      %v2348 = vpop.permute.xlu0 %2347
      %2349 = vrot.lane.b32.xlu0 %v458, 8
      %v2350 = vpop.permute.xlu0 %2349
      %2359 = vrot.lane.b32.xlu0 %v459, 12
      %v2360 = vpop.permute.xlu0 %2359
      %2361 = vrot.lane.b32.xlu0 %v460, 12
      %v2362 = vpop.permute.xlu0 %2361
      %2363 = vrot.lane.b32.xlu0 %v461, 12
      %v2364 = vpop.permute.xlu0 %2363
      %2365 = vrot.lane.b32.xlu0 %v462, 12
      %v2366 = vpop.permute.xlu0 %2365
      %2367 = vrot.lane.b32.xlu0 %v463, 12
      %v2368 = vpop.permute.xlu0 %2367
      %2369 = vrot.lane.b32.xlu0 %v464, 12
      %v2370 = vpop.permute.xlu0 %2369
      %2371 = vrot.lane.b32.xlu0 %v465, 12
      %v2372 = vpop.permute.xlu0 %2371
      %2373 = vrot.lane.b32.xlu0 %v466, 12
      %v2374 = vpop.permute.xlu0 %2373
      %2383 = vrot.lane.b32.xlu0 %v500, 16
      %v2384 = vpop.permute.xlu0 %2383
      %2385 = vrot.lane.b32.xlu0 %v501, 16
      %v2386 = vpop.permute.xlu0 %2385
      %2387 = vrot.lane.b32.xlu0 %v502, 16
      %v2388 = vpop.permute.xlu0 %2387
      %2389 = vrot.lane.b32.xlu0 %v503, 16
      %v2390 = vpop.permute.xlu0 %2389
      %2391 = vrot.lane.b32.xlu0 %v504, 16
      %v2392 = vpop.permute.xlu0 %2391
      %2393 = vrot.lane.b32.xlu0 %v505, 16
      %v2394 = vpop.permute.xlu0 %2393
      %2395 = vrot.lane.b32.xlu0 %v506, 16
      %v2396 = vpop.permute.xlu0 %2395
      %2397 = vrot.lane.b32.xlu0 %v507, 16
      %v2398 = vpop.permute.xlu0 %2397
      %2415 = vrot.lane.b32.xlu0 %v508, 20
      %v2416 = vpop.permute.xlu0 %2415
      %2417 = vrot.lane.b32.xlu0 %v509, 20
      %v2418 = vpop.permute.xlu0 %2417
      %2419 = vrot.lane.b32.xlu0 %v510, 20
      %v2420 = vpop.permute.xlu0 %2419
      %2421 = vrot.lane.b32.xlu0 %v511, 20
      %v2422 = vpop.permute.xlu0 %2421
      %2423 = vrot.lane.b32.xlu0 %v512, 20
      %v2424 = vpop.permute.xlu0 %2423
      %2425 = vrot.lane.b32.xlu0 %v513, 20
      %v2426 = vpop.permute.xlu0 %2425
      %2427 = vrot.lane.b32.xlu0 %v514, 20
      %v2428 = vpop.permute.xlu0 %2427
      %2429 = vrot.lane.b32.xlu0 %v515, 20
      %v2430 = vpop.permute.xlu0 %2429
      %2439 = vrot.lane.b32.xlu0 %v525, 24
      %v2440 = vpop.permute.xlu0 %2439
      %2441 = vrot.lane.b32.xlu0 %v526, 24
      %v2442 = vpop.permute.xlu0 %2441
      %2443 = vrot.lane.b32.xlu0 %v527, 24
      %v2444 = vpop.permute.xlu0 %2443
      %2445 = vrot.lane.b32.xlu0 %v528, 24
      %v2446 = vpop.permute.xlu0 %2445
      %2447 = vrot.lane.b32.xlu0 %v529, 24
      %v2448 = vpop.permute.xlu0 %2447
      %2449 = vrot.lane.b32.xlu0 %v530, 24
      %v2450 = vpop.permute.xlu0 %2449
      %2451 = vrot.lane.b32.xlu0 %v531, 24
      %v2452 = vpop.permute.xlu0 %2451
      %2453 = vrot.lane.b32.xlu0 %v532, 24
      %v2454 = vpop.permute.xlu0 %2453
      %2471 = vrot.lane.b32.xlu0 %v533, 28
      %v2472 = vpop.permute.xlu0 %2471
      %2473 = vrot.lane.b32.xlu0 %v534, 28
      %v2474 = vpop.permute.xlu0 %2473
      %2475 = vrot.lane.b32.xlu0 %v535, 28
      %v2476 = vpop.permute.xlu0 %2475
      %2477 = vrot.lane.b32.xlu0 %v536, 28
      %v2478 = vpop.permute.xlu0 %2477
      %2479 = vrot.lane.b32.xlu0 %v537, 28
      %v2480 = vpop.permute.xlu0 %2479
      %2481 = vrot.lane.b32.xlu0 %v538, 28
      %v2482 = vpop.permute.xlu0 %2481
      %2483 = vrot.lane.b32.xlu0 %v539, 28
      %v2484 = vpop.permute.xlu0 %2483
      %2485 = vrot.lane.b32.xlu0 %v540, 28
      %v2486 = vpop.permute.xlu0 %2485
      %v2495 = vsel %vm790, %v426, %v2312
      %v2496 = vsel %vm790, %v427, %v2314
      %v2497 = vsel %vm790, %v428, %v2316
      %v2498 = vsel %vm790, %v429, %v2318
      %v2499 = vsel %vm790, %v430, %v2320
      %v2500 = vsel %vm790, %v431, %v2322
      %v2501 = vsel %vm790, %v432, %v2324
      %v2502 = vsel %vm790, %v433, %v2326
      %v2503 = vsel %vm799, %v2495, %v2336
      %v2504 = vsel %vm799, %v2496, %v2338
      %v2505 = vsel %vm799, %v2497, %v2340
      %v2506 = vsel %vm799, %v2498, %v2342
      %v2507 = vsel %vm799, %v2499, %v2344
      %v2508 = vsel %vm799, %v2500, %v2346
      %v2509 = vsel %vm799, %v2501, %v2348
      %v2510 = vsel %vm799, %v2502, %v2350
      %v2511 = vsel %vm808, %v2503, %v2360
      %v2512 = vsel %vm808, %v2504, %v2362
      %v2513 = vsel %vm808, %v2505, %v2364
      %v2514 = vsel %vm808, %v2506, %v2366
      %v2515 = vsel %vm808, %v2507, %v2368
      %v2516 = vsel %vm808, %v2508, %v2370
      %v2517 = vsel %vm808, %v2509, %v2372
      %v2518 = vsel %vm808, %v2510, %v2374
      %v2519 = vsel %vm817, %v2511, %v2384
      %v2520 = vsel %vm817, %v2512, %v2386
      %v2521 = vsel %vm817, %v2513, %v2388
      %v2522 = vsel %vm817, %v2514, %v2390
      %v2523 = vsel %vm817, %v2515, %v2392
      %v2524 = vsel %vm817, %v2516, %v2394
      %v2525 = vsel %vm817, %v2517, %v2396
      %v2526 = vsel %vm817, %v2518, %v2398
      %v2527 = vsel %vm826, %v2519, %v2416
      %v2528 = vsel %vm826, %v2520, %v2418
      %v2529 = vsel %vm826, %v2521, %v2420
      %v2530 = vsel %vm826, %v2522, %v2422
      %v2531 = vsel %vm826, %v2523, %v2424
      %v2532 = vsel %vm826, %v2524, %v2426
      %v2533 = vsel %vm826, %v2525, %v2428
      %v2534 = vsel %vm826, %v2526, %v2430
      %v2535 = vsel %vm835, %v2527, %v2440
      %v2536 = vsel %vm835, %v2528, %v2442
      %v2537 = vsel %vm835, %v2529, %v2444
      %v2538 = vsel %vm835, %v2530, %v2446
      %v2539 = vsel %vm835, %v2531, %v2448
      %v2540 = vsel %vm835, %v2532, %v2450
      %v2541 = vsel %vm835, %v2533, %v2452
      %v2542 = vsel %vm835, %v2534, %v2454
      %v2543 = vsel %vm844, %v2535, %v2472
      %v2544 = vsel %vm844, %v2536, %v2474
      %v2545 = vsel %vm844, %v2537, %v2476
      %v2546 = vsel %vm844, %v2538, %v2478
      %v2547 = vsel %vm844, %v2539, %v2480
      %v2548 = vsel %vm844, %v2540, %v2482
      %v2549 = vsel %vm844, %v2541, %v2484
      %v2550 = vsel %vm844, %v2542, %v2486
      %s2551 = scalar_lea.vmem %s3, 160
      %v2552 = vld [vmem:[%s2551] sm:$0xff]
      %v2553 = vld [vmem:[%s2551 + $0x8] sm:$0xff]
      %v2554 = vld [vmem:[%s2551 + $0x10] sm:$0xff]
      %v2555 = vld [vmem:[%s2551 + $0x18] sm:$0xff]
      %v2557 = vsel %vm860, %v2543, 0
      %v2560 = vsel %vm860, %v2544, 0
      %v2563 = vsel %vm860, %v2545, 0
      %v2566 = vsel %vm860, %v2546, 0
      %v2569 = vsel %vm860, %v2547, 0
      %v2572 = vsel %vm860, %v2548, 0
      %v2575 = vsel %vm860, %v2549, 0
      %v2578 = vsel %vm860, %v2550, 0
      %2580 = vmatpush.msra.mxu0 0.0
      %2581 = vmatpush.msra.mxu0 0.0
      %2582 = vmatpush.msra.mxu0 0.0
      %2583 = vmatpush.msra.mxu0 0.0
      %2584 = vmatpush.msra.mxu0 0.0
      %2585 = vmatpush.msra.mxu0 0.0
      %2586 = vmatpush.msra.mxu0 0.0
      %2587 = vmatpush.msra.mxu0 0.0
      %2588 = vmatpush.msra.mxu0 0.0
      %2589 = vmatpush.msra.mxu0 0.0
      %2590 = vmatpush.msra.mxu0 0.0
      %2591 = vmatpush.msra.mxu0 0.0
      %2592 = vmatpush.msra.mxu0 %v2555
      %2593 = vmatpush.msra.mxu0 %v2554
      %2594 = vmatpush.msra.mxu0 %v2553
      %2595 = vmatpush.msra.mxu0 %v2552
      %2596 = vmatmul.f32.gmra.mxu0 %v2557
      %v2597 = vpop.f32.mrf.mxu0
      %v2598 = vadd.f32 %v858, %v2597
      %2599 = vmatmul.f32.gmra.mxu0 %v2560
      %v2600 = vpop.f32.mrf.mxu0
      %v2601 = vadd.f32 %v858, %v2600
      %2602 = vmatmul.f32.gmra.mxu0 %v2563
      %v2603 = vpop.f32.mrf.mxu0
      %v2604 = vadd.f32 %v858, %v2603
      %2605 = vmatmul.f32.gmra.mxu0 %v2566
      %v2606 = vpop.f32.mrf.mxu0
      %v2607 = vadd.f32 %v858, %v2606
      %2608 = vmatmul.f32.gmra.mxu0 %v2569
      %v2609 = vpop.f32.mrf.mxu0
      %v2610 = vadd.f32 %v858, %v2609
      %2611 = vmatmul.f32.gmra.mxu0 %v2572
      %v2612 = vpop.f32.mrf.mxu0
      %v2613 = vadd.f32 %v858, %v2612
      %2614 = vmatmul.f32.gmra.mxu0 %v2575
      %v2615 = vpop.f32.mrf.mxu0
      %v2616 = vadd.f32 %v858, %v2615
      %2617 = vmatmul.f32.gmra.mxu0 %v2578
      %v2618 = vpop.f32.mrf.mxu0
      %v2619 = vadd.f32 %v858, %v2618
      %2620 = vdwg.mxu0
      %2629 = vrot.lane.b32.xlu0 %v2598, 4
      %v2630 = vpop.permute.xlu0 %2629
      %2631 = vrot.lane.b32.xlu0 %v2601, 4
      %v2632 = vpop.permute.xlu0 %2631
      %2633 = vrot.lane.b32.xlu0 %v2604, 4
      %v2634 = vpop.permute.xlu0 %2633
      %2635 = vrot.lane.b32.xlu0 %v2607, 4
      %v2636 = vpop.permute.xlu0 %2635
      %2637 = vrot.lane.b32.xlu0 %v2610, 4
      %v2638 = vpop.permute.xlu0 %2637
      %2639 = vrot.lane.b32.xlu0 %v2613, 4
      %v2640 = vpop.permute.xlu0 %2639
      %2641 = vrot.lane.b32.xlu0 %v2616, 4
      %v2642 = vpop.permute.xlu0 %2641
      %2643 = vrot.lane.b32.xlu0 %v2619, 4
      %v2644 = vpop.permute.xlu0 %2643
      %v2653 = vsel %vm790, %v2288, %v2630
      %v2654 = vsel %vm790, %v2291, %v2632
      %v2655 = vsel %vm790, %v2294, %v2634
      %v2656 = vsel %vm790, %v2297, %v2636
      %v2657 = vsel %vm790, %v2300, %v2638
      %v2658 = vsel %vm790, %v2303, %v2640
      %v2659 = vsel %vm790, %v2306, %v2642
      %v2660 = vsel %vm790, %v2309, %v2644
      %s2661 = scalar_lea.vmem %s342, 128
      %2662 = vst.msk [vmem:[%s2661] sm:$0xff] %vm799, %v2653
      %2663 = vst.msk [vmem:[%s2661 + $0x10] sm:$0xff] %vm799, %v2654
      %2664 = vst.msk [vmem:[%s2661 + $0x20] sm:$0xff] %vm799, %v2655
      %2665 = vst.msk [vmem:[%s2661 + $0x30] sm:$0xff] %vm799, %v2656
      %2666 = vst.msk [vmem:[%s2661 + $0x40] sm:$0xff] %vm799, %v2657
      %2667 = vst.msk [vmem:[%s2661 + $0x50] sm:$0xff] %vm799, %v2658
      %2668 = vst.msk [vmem:[%s2661 + $0x60] sm:$0xff] %vm799, %v2659
      %2669 = vst.msk [vmem:[%s2661 + $0x70] sm:$0xff] %vm799, %v2660
      %2670 = vrot.lane.b32.xlu0 %v451, 4
      %v2671 = vpop.permute.xlu0 %2670
      %2672 = vrot.lane.b32.xlu0 %v452, 4
      %v2673 = vpop.permute.xlu0 %2672
      %2674 = vrot.lane.b32.xlu0 %v453, 4
      %v2675 = vpop.permute.xlu0 %2674
      %2676 = vrot.lane.b32.xlu0 %v454, 4
      %v2677 = vpop.permute.xlu0 %2676
      %2678 = vrot.lane.b32.xlu0 %v455, 4
      %v2679 = vpop.permute.xlu0 %2678
      %2680 = vrot.lane.b32.xlu0 %v456, 4
      %v2681 = vpop.permute.xlu0 %2680
      %2682 = vrot.lane.b32.xlu0 %v457, 4
      %v2683 = vpop.permute.xlu0 %2682
      %2684 = vrot.lane.b32.xlu0 %v458, 4
      %v2685 = vpop.permute.xlu0 %2684
      %2694 = vrot.lane.b32.xlu0 %v468, 8
      %v2695 = vpop.permute.xlu0 %2694
      %2696 = vrot.lane.b32.xlu0 %v469, 8
      %v2697 = vpop.permute.xlu0 %2696
      %2698 = vrot.lane.b32.xlu0 %v470, 8
      %v2699 = vpop.permute.xlu0 %2698
      %2700 = vrot.lane.b32.xlu0 %v471, 8
      %v2701 = vpop.permute.xlu0 %2700
      %2702 = vrot.lane.b32.xlu0 %v472, 8
      %v2703 = vpop.permute.xlu0 %2702
      %2704 = vrot.lane.b32.xlu0 %v473, 8
      %v2705 = vpop.permute.xlu0 %2704
      %2706 = vrot.lane.b32.xlu0 %v474, 8
      %v2707 = vpop.permute.xlu0 %2706
      %2708 = vrot.lane.b32.xlu0 %v475, 8
      %v2709 = vpop.permute.xlu0 %2708
      %2718 = vrot.lane.b32.xlu0 %v476, 12
      %v2719 = vpop.permute.xlu0 %2718
      %2720 = vrot.lane.b32.xlu0 %v477, 12
      %v2721 = vpop.permute.xlu0 %2720
      %2722 = vrot.lane.b32.xlu0 %v478, 12
      %v2723 = vpop.permute.xlu0 %2722
      %2724 = vrot.lane.b32.xlu0 %v479, 12
      %v2725 = vpop.permute.xlu0 %2724
      %2726 = vrot.lane.b32.xlu0 %v480, 12
      %v2727 = vpop.permute.xlu0 %2726
      %2728 = vrot.lane.b32.xlu0 %v481, 12
      %v2729 = vpop.permute.xlu0 %2728
      %2730 = vrot.lane.b32.xlu0 %v482, 12
      %v2731 = vpop.permute.xlu0 %2730
      %2732 = vrot.lane.b32.xlu0 %v483, 12
      %v2733 = vpop.permute.xlu0 %2732
      %2742 = vrot.lane.b32.xlu0 %v517, 16
      %v2743 = vpop.permute.xlu0 %2742
      %2744 = vrot.lane.b32.xlu0 %v518, 16
      %v2745 = vpop.permute.xlu0 %2744
      %2746 = vrot.lane.b32.xlu0 %v519, 16
      %v2747 = vpop.permute.xlu0 %2746
      %2748 = vrot.lane.b32.xlu0 %v520, 16
      %v2749 = vpop.permute.xlu0 %2748
      %2750 = vrot.lane.b32.xlu0 %v521, 16
      %v2751 = vpop.permute.xlu0 %2750
      %2752 = vrot.lane.b32.xlu0 %v522, 16
      %v2753 = vpop.permute.xlu0 %2752
      %2754 = vrot.lane.b32.xlu0 %v523, 16
      %v2755 = vpop.permute.xlu0 %2754
      %2756 = vrot.lane.b32.xlu0 %v524, 16
      %v2757 = vpop.permute.xlu0 %2756
      %2766 = vrot.lane.b32.xlu0 %v525, 20
      %v2767 = vpop.permute.xlu0 %2766
      %2768 = vrot.lane.b32.xlu0 %v526, 20
      %v2769 = vpop.permute.xlu0 %2768
      %2770 = vrot.lane.b32.xlu0 %v527, 20
      %v2771 = vpop.permute.xlu0 %2770
      %2772 = vrot.lane.b32.xlu0 %v528, 20
      %v2773 = vpop.permute.xlu0 %2772
      %2774 = vrot.lane.b32.xlu0 %v529, 20
      %v2775 = vpop.permute.xlu0 %2774
      %2776 = vrot.lane.b32.xlu0 %v530, 20
      %v2777 = vpop.permute.xlu0 %2776
      %2778 = vrot.lane.b32.xlu0 %v531, 20
      %v2779 = vpop.permute.xlu0 %2778
      %2780 = vrot.lane.b32.xlu0 %v532, 20
      %v2781 = vpop.permute.xlu0 %2780
      %2798 = vrot.lane.b32.xlu0 %v542, 24
      %v2799 = vpop.permute.xlu0 %2798
      %2800 = vrot.lane.b32.xlu0 %v543, 24
      %v2801 = vpop.permute.xlu0 %2800
      %2802 = vrot.lane.b32.xlu0 %v544, 24
      %v2803 = vpop.permute.xlu0 %2802
      %2804 = vrot.lane.b32.xlu0 %v545, 24
      %v2805 = vpop.permute.xlu0 %2804
      %2806 = vrot.lane.b32.xlu0 %v546, 24
      %v2807 = vpop.permute.xlu0 %2806
      %2808 = vrot.lane.b32.xlu0 %v547, 24
      %v2809 = vpop.permute.xlu0 %2808
      %2810 = vrot.lane.b32.xlu0 %v548, 24
      %v2811 = vpop.permute.xlu0 %2810
      %2812 = vrot.lane.b32.xlu0 %v549, 24
      %v2813 = vpop.permute.xlu0 %2812
      %2830 = vrot.lane.b32.xlu0 %v550, 28
      %v2831 = vpop.permute.xlu0 %2830
      %2832 = vrot.lane.b32.xlu0 %v551, 28
      %v2833 = vpop.permute.xlu0 %2832
      %2834 = vrot.lane.b32.xlu0 %v552, 28
      %v2835 = vpop.permute.xlu0 %2834
      %2836 = vrot.lane.b32.xlu0 %v553, 28
      %v2837 = vpop.permute.xlu0 %2836
      %2838 = vrot.lane.b32.xlu0 %v554, 28
      %v2839 = vpop.permute.xlu0 %2838
      %2840 = vrot.lane.b32.xlu0 %v555, 28
      %v2841 = vpop.permute.xlu0 %2840
      %2842 = vrot.lane.b32.xlu0 %v556, 28
      %v2843 = vpop.permute.xlu0 %2842
      %2844 = vrot.lane.b32.xlu0 %v557, 28
      %v2845 = vpop.permute.xlu0 %2844
      %v2854 = vsel %vm790, %v443, %v2671
      %v2855 = vsel %vm790, %v444, %v2673
      %v2856 = vsel %vm790, %v445, %v2675
      %v2857 = vsel %vm790, %v446, %v2677
      %v2858 = vsel %vm790, %v447, %v2679
      %v2859 = vsel %vm790, %v448, %v2681
      %v2860 = vsel %vm790, %v449, %v2683
      %v2861 = vsel %vm790, %v450, %v2685
      %v2862 = vsel %vm799, %v2854, %v2695
      %v2863 = vsel %vm799, %v2855, %v2697
      %v2864 = vsel %vm799, %v2856, %v2699
      %v2865 = vsel %vm799, %v2857, %v2701
      %v2866 = vsel %vm799, %v2858, %v2703
      %v2867 = vsel %vm799, %v2859, %v2705
      %v2868 = vsel %vm799, %v2860, %v2707
      %v2869 = vsel %vm799, %v2861, %v2709
      %v2870 = vsel %vm808, %v2862, %v2719
      %v2871 = vsel %vm808, %v2863, %v2721
      %v2872 = vsel %vm808, %v2864, %v2723
      %v2873 = vsel %vm808, %v2865, %v2725
      %v2874 = vsel %vm808, %v2866, %v2727
      %v2875 = vsel %vm808, %v2867, %v2729
      %v2876 = vsel %vm808, %v2868, %v2731
      %v2877 = vsel %vm808, %v2869, %v2733
      %v2878 = vsel %vm817, %v2870, %v2743
      %v2879 = vsel %vm817, %v2871, %v2745
      %v2880 = vsel %vm817, %v2872, %v2747
      %v2881 = vsel %vm817, %v2873, %v2749
      %v2882 = vsel %vm817, %v2874, %v2751
      %v2883 = vsel %vm817, %v2875, %v2753
      %v2884 = vsel %vm817, %v2876, %v2755
      %v2885 = vsel %vm817, %v2877, %v2757
      %v2886 = vsel %vm826, %v2878, %v2767
      %v2887 = vsel %vm826, %v2879, %v2769
      %v2888 = vsel %vm826, %v2880, %v2771
      %v2889 = vsel %vm826, %v2881, %v2773
      %v2890 = vsel %vm826, %v2882, %v2775
      %v2891 = vsel %vm826, %v2883, %v2777
      %v2892 = vsel %vm826, %v2884, %v2779
      %v2893 = vsel %vm826, %v2885, %v2781
      %v2894 = vsel %vm835, %v2886, %v2799
      %v2895 = vsel %vm835, %v2887, %v2801
      %v2896 = vsel %vm835, %v2888, %v2803
      %v2897 = vsel %vm835, %v2889, %v2805
      %v2898 = vsel %vm835, %v2890, %v2807
      %v2899 = vsel %vm835, %v2891, %v2809
      %v2900 = vsel %vm835, %v2892, %v2811
      %v2901 = vsel %vm835, %v2893, %v2813
      %v2902 = vsel %vm844, %v2894, %v2831
      %v2903 = vsel %vm844, %v2895, %v2833
      %v2904 = vsel %vm844, %v2896, %v2835
      %v2905 = vsel %vm844, %v2897, %v2837
      %v2906 = vsel %vm844, %v2898, %v2839
      %v2907 = vsel %vm844, %v2899, %v2841
      %v2908 = vsel %vm844, %v2900, %v2843
      %v2909 = vsel %vm844, %v2901, %v2845
      %s2910 = scalar_lea.vmem %s3, 192
      %v2911 = vld [vmem:[%s2910] sm:$0xff]
      %v2912 = vld [vmem:[%s2910 + $0x8] sm:$0xff]
      %v2913 = vld [vmem:[%s2910 + $0x10] sm:$0xff]
      %v2914 = vld [vmem:[%s2910 + $0x18] sm:$0xff]
      %v2916 = vsel %vm860, %v2902, 0
      %v2919 = vsel %vm860, %v2903, 0
      %v2922 = vsel %vm860, %v2904, 0
      %v2925 = vsel %vm860, %v2905, 0
      %v2928 = vsel %vm860, %v2906, 0
      %v2931 = vsel %vm860, %v2907, 0
      %v2934 = vsel %vm860, %v2908, 0
      %v2937 = vsel %vm860, %v2909, 0
      %2939 = vmatpush.msra.mxu0 0.0
      %2940 = vmatpush.msra.mxu0 0.0
      %2941 = vmatpush.msra.mxu0 0.0
      %2942 = vmatpush.msra.mxu0 0.0
      %2943 = vmatpush.msra.mxu0 0.0
      %2944 = vmatpush.msra.mxu0 0.0
      %2945 = vmatpush.msra.mxu0 0.0
      %2946 = vmatpush.msra.mxu0 0.0
      %2947 = vmatpush.msra.mxu0 0.0
      %2948 = vmatpush.msra.mxu0 0.0
      %2949 = vmatpush.msra.mxu0 0.0
      %2950 = vmatpush.msra.mxu0 0.0
      %2951 = vmatpush.msra.mxu0 %v2914
      %2952 = vmatpush.msra.mxu0 %v2913
      %2953 = vmatpush.msra.mxu0 %v2912
      %2954 = vmatpush.msra.mxu0 %v2911
      %2955 = vmatmul.f32.gmra.mxu0 %v2916
      %v2956 = vpop.f32.mrf.mxu0
      %v2957 = vadd.f32 %v858, %v2956
      %2958 = vmatmul.f32.gmra.mxu0 %v2919
      %v2959 = vpop.f32.mrf.mxu0
      %v2960 = vadd.f32 %v858, %v2959
      %2961 = vmatmul.f32.gmra.mxu0 %v2922
      %v2962 = vpop.f32.mrf.mxu0
      %v2963 = vadd.f32 %v858, %v2962
      %2964 = vmatmul.f32.gmra.mxu0 %v2925
      %v2965 = vpop.f32.mrf.mxu0
      %v2966 = vadd.f32 %v858, %v2965
      %2967 = vmatmul.f32.gmra.mxu0 %v2928
      %v2968 = vpop.f32.mrf.mxu0
      %v2969 = vadd.f32 %v858, %v2968
      %2970 = vmatmul.f32.gmra.mxu0 %v2931
      %v2971 = vpop.f32.mrf.mxu0
      %v2972 = vadd.f32 %v858, %v2971
      %2973 = vmatmul.f32.gmra.mxu0 %v2934
      %v2974 = vpop.f32.mrf.mxu0
      %v2975 = vadd.f32 %v858, %v2974
      %2976 = vmatmul.f32.gmra.mxu0 %v2937
      %v2977 = vpop.f32.mrf.mxu0
      %v2978 = vadd.f32 %v858, %v2977
      %2979 = vdwg.mxu0
      %2980 = vrot.lane.b32.xlu0 %v459, 4
      %v2981 = vpop.permute.xlu0 %2980
      %2982 = vrot.lane.b32.xlu0 %v460, 4
      %v2983 = vpop.permute.xlu0 %2982
      %2984 = vrot.lane.b32.xlu0 %v461, 4
      %v2985 = vpop.permute.xlu0 %2984
      %2986 = vrot.lane.b32.xlu0 %v462, 4
      %v2987 = vpop.permute.xlu0 %2986
      %2988 = vrot.lane.b32.xlu0 %v463, 4
      %v2989 = vpop.permute.xlu0 %2988
      %2990 = vrot.lane.b32.xlu0 %v464, 4
      %v2991 = vpop.permute.xlu0 %2990
      %2992 = vrot.lane.b32.xlu0 %v465, 4
      %v2993 = vpop.permute.xlu0 %2992
      %2994 = vrot.lane.b32.xlu0 %v466, 4
      %v2995 = vpop.permute.xlu0 %2994
      %3004 = vrot.lane.b32.xlu0 %v476, 8
      %v3005 = vpop.permute.xlu0 %3004
      %3006 = vrot.lane.b32.xlu0 %v477, 8
      %v3007 = vpop.permute.xlu0 %3006
      %3008 = vrot.lane.b32.xlu0 %v478, 8
      %v3009 = vpop.permute.xlu0 %3008
      %3010 = vrot.lane.b32.xlu0 %v479, 8
      %v3011 = vpop.permute.xlu0 %3010
      %3012 = vrot.lane.b32.xlu0 %v480, 8
      %v3013 = vpop.permute.xlu0 %3012
      %3014 = vrot.lane.b32.xlu0 %v481, 8
      %v3015 = vpop.permute.xlu0 %3014
      %3016 = vrot.lane.b32.xlu0 %v482, 8
      %v3017 = vpop.permute.xlu0 %3016
      %3018 = vrot.lane.b32.xlu0 %v483, 8
      %v3019 = vpop.permute.xlu0 %3018
      %3028 = vrot.lane.b32.xlu0 %v484, 12
      %v3029 = vpop.permute.xlu0 %3028
      %3030 = vrot.lane.b32.xlu0 %v485, 12
      %v3031 = vpop.permute.xlu0 %3030
      %3032 = vrot.lane.b32.xlu0 %v486, 12
      %v3033 = vpop.permute.xlu0 %3032
      %3034 = vrot.lane.b32.xlu0 %v487, 12
      %v3035 = vpop.permute.xlu0 %3034
      %3036 = vrot.lane.b32.xlu0 %v488, 12
      %v3037 = vpop.permute.xlu0 %3036
      %3038 = vrot.lane.b32.xlu0 %v489, 12
      %v3039 = vpop.permute.xlu0 %3038
      %3040 = vrot.lane.b32.xlu0 %v490, 12
      %v3041 = vpop.permute.xlu0 %3040
      %3042 = vrot.lane.b32.xlu0 %v491, 12
      %v3043 = vpop.permute.xlu0 %3042
      %3052 = vrot.lane.b32.xlu0 %v525, 16
      %v3053 = vpop.permute.xlu0 %3052
      %3054 = vrot.lane.b32.xlu0 %v526, 16
      %v3055 = vpop.permute.xlu0 %3054
      %3056 = vrot.lane.b32.xlu0 %v527, 16
      %v3057 = vpop.permute.xlu0 %3056
      %3058 = vrot.lane.b32.xlu0 %v528, 16
      %v3059 = vpop.permute.xlu0 %3058
      %3060 = vrot.lane.b32.xlu0 %v529, 16
      %v3061 = vpop.permute.xlu0 %3060
      %3062 = vrot.lane.b32.xlu0 %v530, 16
      %v3063 = vpop.permute.xlu0 %3062
      %3064 = vrot.lane.b32.xlu0 %v531, 16
      %v3065 = vpop.permute.xlu0 %3064
      %3066 = vrot.lane.b32.xlu0 %v532, 16
      %v3067 = vpop.permute.xlu0 %3066
      %3076 = vrot.lane.b32.xlu0 %v533, 20
      %v3077 = vpop.permute.xlu0 %3076
      %3078 = vrot.lane.b32.xlu0 %v534, 20
      %v3079 = vpop.permute.xlu0 %3078
      %3080 = vrot.lane.b32.xlu0 %v535, 20
      %v3081 = vpop.permute.xlu0 %3080
      %3082 = vrot.lane.b32.xlu0 %v536, 20
      %v3083 = vpop.permute.xlu0 %3082
      %3084 = vrot.lane.b32.xlu0 %v537, 20
      %v3085 = vpop.permute.xlu0 %3084
      %3086 = vrot.lane.b32.xlu0 %v538, 20
      %v3087 = vpop.permute.xlu0 %3086
      %3088 = vrot.lane.b32.xlu0 %v539, 20
      %v3089 = vpop.permute.xlu0 %3088
      %3090 = vrot.lane.b32.xlu0 %v540, 20
      %v3091 = vpop.permute.xlu0 %3090
      %3100 = vrot.lane.b32.xlu0 %v550, 24
      %v3101 = vpop.permute.xlu0 %3100
      %3102 = vrot.lane.b32.xlu0 %v551, 24
      %v3103 = vpop.permute.xlu0 %3102
      %3104 = vrot.lane.b32.xlu0 %v552, 24
      %v3105 = vpop.permute.xlu0 %3104
      %3106 = vrot.lane.b32.xlu0 %v553, 24
      %v3107 = vpop.permute.xlu0 %3106
      %3108 = vrot.lane.b32.xlu0 %v554, 24
      %v3109 = vpop.permute.xlu0 %3108
      %3110 = vrot.lane.b32.xlu0 %v555, 24
      %v3111 = vpop.permute.xlu0 %3110
      %3112 = vrot.lane.b32.xlu0 %v556, 24
      %v3113 = vpop.permute.xlu0 %3112
      %3114 = vrot.lane.b32.xlu0 %v557, 24
      %v3115 = vpop.permute.xlu0 %3114
      %3132 = vrot.lane.b32.xlu0 %v558, 28
      %v3133 = vpop.permute.xlu0 %3132
      %3134 = vrot.lane.b32.xlu0 %v559, 28
      %v3135 = vpop.permute.xlu0 %3134
      %3136 = vrot.lane.b32.xlu0 %v560, 28
      %v3137 = vpop.permute.xlu0 %3136
      %3138 = vrot.lane.b32.xlu0 %v561, 28
      %v3139 = vpop.permute.xlu0 %3138
      %3140 = vrot.lane.b32.xlu0 %v562, 28
      %v3141 = vpop.permute.xlu0 %3140
      %3142 = vrot.lane.b32.xlu0 %v563, 28
      %v3143 = vpop.permute.xlu0 %3142
      %3144 = vrot.lane.b32.xlu0 %v564, 28
      %v3145 = vpop.permute.xlu0 %3144
      %3146 = vrot.lane.b32.xlu0 %v565, 28
      %v3147 = vpop.permute.xlu0 %3146
      %v3156 = vsel %vm790, %v451, %v2981
      %v3157 = vsel %vm790, %v452, %v2983
      %v3158 = vsel %vm790, %v453, %v2985
      %v3159 = vsel %vm790, %v454, %v2987
      %v3160 = vsel %vm790, %v455, %v2989
      %v3161 = vsel %vm790, %v456, %v2991
      %v3162 = vsel %vm790, %v457, %v2993
      %v3163 = vsel %vm790, %v458, %v2995
      %v3164 = vsel %vm799, %v3156, %v3005
      %v3165 = vsel %vm799, %v3157, %v3007
      %v3166 = vsel %vm799, %v3158, %v3009
      %v3167 = vsel %vm799, %v3159, %v3011
      %v3168 = vsel %vm799, %v3160, %v3013
      %v3169 = vsel %vm799, %v3161, %v3015
      %v3170 = vsel %vm799, %v3162, %v3017
      %v3171 = vsel %vm799, %v3163, %v3019
      %v3172 = vsel %vm808, %v3164, %v3029
      %v3173 = vsel %vm808, %v3165, %v3031
      %v3174 = vsel %vm808, %v3166, %v3033
      %v3175 = vsel %vm808, %v3167, %v3035
      %v3176 = vsel %vm808, %v3168, %v3037
      %v3177 = vsel %vm808, %v3169, %v3039
      %v3178 = vsel %vm808, %v3170, %v3041
      %v3179 = vsel %vm808, %v3171, %v3043
      %v3180 = vsel %vm817, %v3172, %v3053
      %v3181 = vsel %vm817, %v3173, %v3055
      %v3182 = vsel %vm817, %v3174, %v3057
      %v3183 = vsel %vm817, %v3175, %v3059
      %v3184 = vsel %vm817, %v3176, %v3061
      %v3185 = vsel %vm817, %v3177, %v3063
      %v3186 = vsel %vm817, %v3178, %v3065
      %v3187 = vsel %vm817, %v3179, %v3067
      %v3188 = vsel %vm826, %v3180, %v3077
      %v3189 = vsel %vm826, %v3181, %v3079
      %v3190 = vsel %vm826, %v3182, %v3081
      %v3191 = vsel %vm826, %v3183, %v3083
      %v3192 = vsel %vm826, %v3184, %v3085
      %v3193 = vsel %vm826, %v3185, %v3087
      %v3194 = vsel %vm826, %v3186, %v3089
      %v3195 = vsel %vm826, %v3187, %v3091
      %v3196 = vsel %vm835, %v3188, %v3101
      %v3197 = vsel %vm835, %v3189, %v3103
      %v3198 = vsel %vm835, %v3190, %v3105
      %v3199 = vsel %vm835, %v3191, %v3107
      %v3200 = vsel %vm835, %v3192, %v3109
      %v3201 = vsel %vm835, %v3193, %v3111
      %v3202 = vsel %vm835, %v3194, %v3113
      %v3203 = vsel %vm835, %v3195, %v3115
      %v3204 = vsel %vm844, %v3196, %v3133
      %v3205 = vsel %vm844, %v3197, %v3135
      %v3206 = vsel %vm844, %v3198, %v3137
      %v3207 = vsel %vm844, %v3199, %v3139
      %v3208 = vsel %vm844, %v3200, %v3141
      %v3209 = vsel %vm844, %v3201, %v3143
      %v3210 = vsel %vm844, %v3202, %v3145
      %v3211 = vsel %vm844, %v3203, %v3147
      %s3212 = scalar_lea.vmem %s3, 224
      %v3213 = vld [vmem:[%s3212] sm:$0xff]
      %v3214 = vld [vmem:[%s3212 + $0x8] sm:$0xff]
      %v3215 = vld [vmem:[%s3212 + $0x10] sm:$0xff]
      %v3216 = vld [vmem:[%s3212 + $0x18] sm:$0xff]
      %v3218 = vsel %vm860, %v3204, 0
      %v3221 = vsel %vm860, %v3205, 0
      %v3224 = vsel %vm860, %v3206, 0
      %v3227 = vsel %vm860, %v3207, 0
      %v3230 = vsel %vm860, %v3208, 0
      %v3233 = vsel %vm860, %v3209, 0
      %v3236 = vsel %vm860, %v3210, 0
      %v3239 = vsel %vm860, %v3211, 0
      %3241 = vmatpush.msra.mxu0 0.0
      %3242 = vmatpush.msra.mxu0 0.0
      %3243 = vmatpush.msra.mxu0 0.0
      %3244 = vmatpush.msra.mxu0 0.0
      %3245 = vmatpush.msra.mxu0 0.0
      %3246 = vmatpush.msra.mxu0 0.0
      %3247 = vmatpush.msra.mxu0 0.0
      %3248 = vmatpush.msra.mxu0 0.0
      %3249 = vmatpush.msra.mxu0 0.0
      %3250 = vmatpush.msra.mxu0 0.0
      %3251 = vmatpush.msra.mxu0 0.0
      %3252 = vmatpush.msra.mxu0 0.0
      %3253 = vmatpush.msra.mxu0 %v3216
      %3254 = vmatpush.msra.mxu0 %v3215
      %3255 = vmatpush.msra.mxu0 %v3214
      %3256 = vmatpush.msra.mxu0 %v3213
      %3257 = vmatmul.f32.gmra.mxu0 %v3218
      %v3258 = vpop.f32.mrf.mxu0
      %v3259 = vadd.f32 %v858, %v3258
      %3260 = vmatmul.f32.gmra.mxu0 %v3221
      %v3261 = vpop.f32.mrf.mxu0
      %v3262 = vadd.f32 %v858, %v3261
      %3263 = vmatmul.f32.gmra.mxu0 %v3224
      %v3264 = vpop.f32.mrf.mxu0
      %v3265 = vadd.f32 %v858, %v3264
      %3266 = vmatmul.f32.gmra.mxu0 %v3227
      %v3267 = vpop.f32.mrf.mxu0
      %v3268 = vadd.f32 %v858, %v3267
      %3269 = vmatmul.f32.gmra.mxu0 %v3230
      %v3270 = vpop.f32.mrf.mxu0
      %v3271 = vadd.f32 %v858, %v3270
      %3272 = vmatmul.f32.gmra.mxu0 %v3233
      %v3273 = vpop.f32.mrf.mxu0
      %v3274 = vadd.f32 %v858, %v3273
      %3275 = vmatmul.f32.gmra.mxu0 %v3236
      %v3276 = vpop.f32.mrf.mxu0
      %v3277 = vadd.f32 %v858, %v3276
      %3278 = vmatmul.f32.gmra.mxu0 %v3239
      %v3279 = vpop.f32.mrf.mxu0
      %v3280 = vadd.f32 %v858, %v3279
      %3281 = vdwg.mxu0
      %3290 = vrot.lane.b32.xlu0 %v3259, 4
      %v3291 = vpop.permute.xlu0 %3290
      %3292 = vrot.lane.b32.xlu0 %v3262, 4
      %v3293 = vpop.permute.xlu0 %3292
      %3294 = vrot.lane.b32.xlu0 %v3265, 4
      %v3295 = vpop.permute.xlu0 %3294
      %3296 = vrot.lane.b32.xlu0 %v3268, 4
      %v3297 = vpop.permute.xlu0 %3296
      %3298 = vrot.lane.b32.xlu0 %v3271, 4
      %v3299 = vpop.permute.xlu0 %3298
      %3300 = vrot.lane.b32.xlu0 %v3274, 4
      %v3301 = vpop.permute.xlu0 %3300
      %3302 = vrot.lane.b32.xlu0 %v3277, 4
      %v3303 = vpop.permute.xlu0 %3302
      %3304 = vrot.lane.b32.xlu0 %v3280, 4
      %v3305 = vpop.permute.xlu0 %3304
      %v3314 = vsel %vm790, %v2957, %v3291
      %v3315 = vsel %vm790, %v2960, %v3293
      %v3316 = vsel %vm790, %v2963, %v3295
      %v3317 = vsel %vm790, %v2966, %v3297
      %v3318 = vsel %vm790, %v2969, %v3299
      %v3319 = vsel %vm790, %v2972, %v3301
      %v3320 = vsel %vm790, %v2975, %v3303
      %v3321 = vsel %vm790, %v2978, %v3305
      %s3322 = scalar_lea.vmem %s342, 136
      %3323 = vst.msk [vmem:[%s3322] sm:$0xff] %vm799, %v3314
      %3324 = vst.msk [vmem:[%s3322 + $0x10] sm:$0xff] %vm799, %v3315
      %3325 = vst.msk [vmem:[%s3322 + $0x20] sm:$0xff] %vm799, %v3316
      %3326 = vst.msk [vmem:[%s3322 + $0x30] sm:$0xff] %vm799, %v3317
      %3327 = vst.msk [vmem:[%s3322 + $0x40] sm:$0xff] %vm799, %v3318
      %3328 = vst.msk [vmem:[%s3322 + $0x50] sm:$0xff] %vm799, %v3319
      %3329 = vst.msk [vmem:[%s3322 + $0x60] sm:$0xff] %vm799, %v3320
      %3330 = vst.msk [vmem:[%s3322 + $0x70] sm:$0xff] %vm799, %v3321
      %p3331 = scmp.lt.s32.totalorder %s20, 1
      %s3332 = scalar_select %p3331, %s20, 1
      %p3333 = scmp.lt.s32.totalorder %s21, 3
      %s3334 = scalar_select %p3333, %s21, 3
      %s3335 = smul.addr %s3334, 32
      %s3336 = smul.addr %s3332, 128
      %s3337 = sadd.s32 %s3335, %s3336
      %s3338 = smul.addr %s3337, 8
      %s3339 = scalar_lea.vmem %s5, %s3338
      // Predicated region
      $region41: #{upsample3d_forward.1} parent=39 // pred_check
        %p3340 = pneg %p178
      $region42: #{upsample3d_forward.1} parent=39 // pred_check_branch
        %3342 = sbr.rel (%p3340) target = $region44
      $region43: #{upsample3d_forward.1} parent=39 // pred_region
        _
      $region44: #{upsample3d_forward.1} parent=39 // pred_fallthru
        _
    $region40: #{upsample3d_forward.1} parent=5 // pred_fallthru
      _
    %p3343 = scmp.le.s32.totalorder 2, %s11
    // Predicated region
    $region45: #{upsample3d_forward.1} parent=5 // pred_check
      %p3344 = pneg %p3343
    $region46: #{upsample3d_forward.1} parent=5 // pred_check_branch
      %3346 = sbr.rel (%p3344) target = $region48
    $region47: #{upsample3d_forward.1} parent=5 // pred_region
      %s3347 = ssub.s32 %s11, 2
      // Predicated region
      $region49: #{upsample3d_forward.1} parent=47 // pred_check
        %p3348 = pneg %p184
      $region50: #{upsample3d_forward.1} parent=47 // pred_check_branch
        %3350 = sbr.rel (%p3348) target = $region52
      $region51: #{upsample3d_forward.1} parent=47 // pred_region
        %p3351 = scmp.lt.s32.totalorder %s22, 1
        %s3352 = scalar_select %p3351, %s22, 1
        %p3353 = scmp.lt.s32.totalorder %s23, 3
        %s3354 = scalar_select %p3353, %s23, 3
        %s3355 = smul.addr %s3354, 32
        %s3356 = smul.addr %s3352, 128
        %s3357 = sadd.s32 %s3355, %s3356
        %s3358 = smul.addr %s3357, 8
        %s3359 = scalar_lea.vmem %s5, %s3358
      $region52: #{upsample3d_forward.1} parent=47 // pred_fallthru
        _
    $region48: #{upsample3d_forward.1} parent=5 // pred_fallthru
      _
  $region6: #{upsample3d_forward.1} parent=0 // loop_footer
    %s15 = sadd.s32 1, %s11
  $region7: #{upsample3d_forward.1} parent=0 // loop_footer_branch
    %10 = sbr.rel target = $region3
  $region8: #{upsample3d_forward.1} parent=0 // loop_exit
    _

</llo_original>
